<compile_context>
chip_gen: v6e
topology: v6e:2x2x1
jax: 0.10.0
libtpu: 0.0.40
codegen_flags: <defaults>
</compile_context>

<pallas_src>
import jax
import jax.numpy as jnp
import numpy as np
from jax import lax
from jax.experimental import pallas as pl
from jax.experimental.pallas import tpu as pltpu

_LANE = 128
_CONV_VMEM = 36 * 1024 * 1024
_POOL_VMEM = 20 * 1024 * 1024
_POOL_BLOCK_BYTES = 2 * 1024 * 1024


def _round_up(x, m):
    return (x + m - 1) // m * m


def _params(semantics, vmem_bytes):
    return pltpu.CompilerParams(dimension_semantics=semantics,
                                vmem_limit_bytes=vmem_bytes)


def _pick_tile_rows(h, target, multiple=1):
    """Largest divisor of h that is <= target and a multiple of `multiple`."""
    best = None
    for t in range(1, h + 1):
        if h % t == 0 and t % multiple == 0 and t <= target:
            best = t
    if best is None:
        if h % multiple == 0:
            best = h
        else:
            raise ValueError(f"no valid row tile for H={h}, multiple={multiple}")
    return best


def _pick_pool_tile(total, unit_bytes, budget, align):
    """Largest divisor of `total` (multiple of `align`, or == total) whose
    block fits `budget`; falls back to the smallest legal divisor."""
    cands = [t for t in range(1, total + 1)
             if total % t == 0 and (t % align == 0 or t == total)]
    fits = [t for t in cands if t * unit_bytes <= budget]
    return max(fits) if fits else min(cands)


# ---------------------------------------------------------------------------
# Kernel 1: direct k*k conv (accumulated matmuls) + partial BN statistics.
# Optional fused input stage: relu(a*scale_a + b*scale_b + shift)  (conv2).
# ---------------------------------------------------------------------------
def _make_conv_kernel(k, pad, th, width, cin, cpad, fuse_two, xbuf_dtype):
    tm = th * width
    halo_rows = pad * width                 # flat rows per halo side
    body = (th + 2 * pad) * width           # flat rows of the H-padded tile

    def kernel(*refs):
        if fuse_two:
            (x_c, x_t, x_b, y_c, y_t, y_b, aff_ref, w_ref,
             out_ref, stats_ref, xbuf) = refs
            centers, tops, bots = (x_c, y_c), (x_t, y_t), (x_b, y_b)
        else:
            (x_c, x_t, x_b, w_ref, out_ref, stats_ref, xbuf) = refs
            aff_ref = None
            centers, tops, bots = (x_c,), (x_t,), (x_b,)

        ti = pl.program_id(1)
        last = pl.num_programs(1) - 1

        def prep(refs_tuple, rows):
            vals = [r[0].reshape(rows, cin) for r in refs_tuple]
            if fuse_two:
                v = (vals[0].astype(jnp.float32) * aff_ref[0:1, :]
                     + vals[1].astype(jnp.float32) * aff_ref[1:2, :]
                     + aff_ref[2:3, :])
                return jnp.maximum(v, 0.0).astype(xbuf_dtype)
            return vals[0].astype(xbuf_dtype)

        zeros_halo = jnp.zeros((halo_rows, cin), xbuf_dtype)

        # column-wrap slop at both ends (zeroed; also masked below)
        xbuf[0:pad, :] = jnp.zeros((pad, cin), xbuf_dtype)
        xbuf[pad + body:pad + body + pad, :] = jnp.zeros((pad, cin), xbuf_dtype)

        # center rows: one wide store of the reshaped tile
        xbuf[pad + halo_rows:pad + halo_rows + tm, :] = prep(centers, tm)

        # top halo (previous tile's last `pad` rows, or zeros at the image edge)
        @pl.when(ti == 0)
        def _():
            xbuf[pad:pad + halo_rows, :] = zeros_halo

        @pl.when(ti > 0)
        def _():
            xbuf[pad:pad + halo_rows, :] = prep(tops, halo_rows)

        # bottom halo (next tile's first `pad` rows, or zeros at the image edge)
        @pl.when(ti == last)
        def _():
            xbuf[pad + halo_rows + tm:pad + body, :] = zeros_halo

        @pl.when(ti < last)
        def _():
            xbuf[pad + halo_rows + tm:pad + body, :] = prep(bots, halo_rows)

        # k*k accumulated matmuls; W-boundary mask applied once per dx.
        col = lax.broadcasted_iota(jnp.int32, (tm, 1), 0) % width
        acc = jnp.zeros((tm, cpad), jnp.float32)
        for dx in range(k):
            part = jnp.zeros((tm, cpad), jnp.float32)
            for dy in range(k):
                start = dy * width + dx
                part = part + jnp.dot(xbuf[start:start + tm, :],
                                      w_ref[dy * k + dx],
                                      preferred_element_type=jnp.float32)
            if dx != pad:   # taps that wrapped across the W boundary
                ok = jnp.logical_and(col >= pad - dx, col < width + pad - dx)
                part = jnp.where(ok, part, 0.0)
            acc = acc + part

        out_ref[0] = acc.astype(out_ref.dtype)
        # partial BN batch statistics for this tile (padded channels are zero)
        stats_ref[0, 0, 0:1, :] = jnp.sum(acc, axis=0, keepdims=True)
        stats_ref[0, 0, 1:2, :] = jnp.sum(acc * acc, axis=0, keepdims=True)

    return kernel


def _conv1x1_kernel(x_ref, w_ref, out_ref, stats_ref):
    acc = jnp.dot(x_ref[0], w_ref[0], preferred_element_type=jnp.float32)
    out_ref[0] = acc.astype(out_ref.dtype)
    stats_ref[0, 0, 0:1, :] = jnp.sum(acc, axis=0, keepdims=True)
    stats_ref[0, 0, 1:2, :] = jnp.sum(acc * acc, axis=0, keepdims=True)


def _conv2d_raw(x, weight_oihw, *, compute_dtype=jnp.float32, tile_rows=16,
                fuse_aff=None):
    """Raw (no-bias, no-BN) SAME conv, NHWC in / flat NHWC out.

    x: one (N,H,W,Cin) array, or — with fuse_aff — a pair (a, b); the conv
    input is then relu(a*s_a + b*s_b + (t_a + t_b)) with
    fuse_aff = (s_a, t_a, s_b, t_b) per-channel f32 vectors.
    Returns (y_flat (N, H*W, Cpad) f32, mean (Cpad,), var (Cpad,)) where the
    BN batch statistics come from per-tile partial sums accumulated inside the
    conv kernel.  Cpad = round_up(Cout, 128); extra channels are zero."""
    fuse_two = fuse_aff is not None
    xs = x if fuse_two else (x,)
    n, h, w, cin = xs[0].shape
    cout, cin_w, kh, kw = weight_oihw.shape
    assert kh == kw and cin_w <= cin
    k = kh
    pad = (k - 1) // 2
    cpad = _round_up(cout, _LANE)

    # (Cout,Cin_w,k,k) -> (k*k, Cin, Cpad), zero padded on both channel axes
    wt = jnp.transpose(weight_oihw, (2, 3, 1, 0)).reshape(k * k, cin_w, cout)
    wt = jnp.pad(wt, ((0, 0), (0, cin - cin_w), (0, cpad - cout)))
    wt = wt.astype(compute_dtype)

    th = _pick_tile_rows(h, tile_rows, max(pad, 1))
    n_t = h // th
    tm = th * w

    if k == 1:
        assert not fuse_two
        x_flat = xs[0].reshape(n, h * w, cin)
        in_specs = [pl.BlockSpec((1, tm, cin), lambda ni, ti: (ni, ti, 0)),
                    # constant index map -> weight stays resident in VMEM
                    pl.BlockSpec((1, cin, cpad), lambda ni, ti: (0, 0, 0))]
        args = [x_flat, wt]
        scratch = []
        kernel = _conv1x1_kernel
    else:
        assert w % 8 == 0, "width must be a multiple of 8"
        # TODO(synk): add a per-row assembly fallback for W % 8 != 0.
        assert h % pad == 0 and th % pad == 0
        thp, hp = th // pad, h // pad
        center = pl.BlockSpec((1, th, w, cin), lambda ni, ti: (ni, ti, 0, 0))
        top = pl.BlockSpec(
            (1, pad, w, cin),
            lambda ni, ti: (ni, jnp.maximum(ti * thp - 1, 0), 0, 0))
        bot = pl.BlockSpec(
            (1, pad, w, cin),
            lambda ni, ti: (ni, jnp.minimum((ti + 1) * thp, hp - 1), 0, 0))
        wspec = pl.BlockSpec((k * k, cin, cpad), lambda ni, ti: (0, 0, 0))
        if fuse_two:
            a4, b4 = xs
            aff = jnp.stack([fuse_aff[0], fuse_aff[2],
                             fuse_aff[1] + fuse_aff[3],
                             jnp.zeros_like(fuse_aff[0])]).astype(jnp.float32)
            in_specs = [center, top, bot, center, top, bot,
                        pl.BlockSpec((4, cin), lambda ni, ti: (0, 0)), wspec]
            args = [a4, a4, a4, b4, b4, b4, aff, wt]
        else:
            in_specs = [center, top, bot, wspec]
            args = [xs[0], xs[0], xs[0], wt]
        scratch = [pltpu.VMEM((2 * pad + (th + 2 * pad) * w, cin),
                              compute_dtype)]
        kernel = _make_conv_kernel(k, pad, th, w, cin, cpad, fuse_two,
                                   compute_dtype)

    y_flat, stats = pl.pallas_call(
        kernel,
        out_shape=[jax.ShapeDtypeStruct((n, h * w, cpad), jnp.float32),
                   jax.ShapeDtypeStruct((n, n_t, 2, cpad), jnp.float32)],
        grid=(n, n_t),
        in_specs=in_specs,
        out_specs=[pl.BlockSpec((1, tm, cpad), lambda ni, ti: (ni, ti, 0)),
                   pl.BlockSpec((1, 1, 2, cpad), lambda ni, ti: (ni, ti, 0, 0))],
        scratch_shapes=scratch,
        compiler_params=_params(("parallel", "parallel"), _CONV_VMEM),
    )(*args)
    # TODO(synk): on v7x, storing y_flat as bf16 would halve consumer HBM
    # traffic (the BN stats already come from the f32 in-kernel accumulator).
    # TODO(synk): with tiny Cin (toy channels=4) the activation stream and MXU
    # contraction are lane-sparse; fold k*k taps into K for production shapes.

    count = float(n * h * w)
    tot = jnp.sum(stats, axis=(0, 1))                     # (2, Cpad) — tiny
    mean = tot[0] / count
    var = jnp.maximum(tot[1] / count - mean * mean, 0.0)  # biased, like torch
    # TODO(synk): switch to a chunked/pairwise reduction if BN stats must
    # match PyTorch to tighter tolerance at very large N*H*W.
    return y_flat, mean, var


def _bn_scale_shift(gamma, beta, mean, var, cpad, eps):
    """Fold BN batch statistics + affine into per-channel (scale, shift)."""
    cout = gamma.shape[0]
    g = jnp.pad(gamma.astype(jnp.float32), (0, cpad - cout))
    b = jnp.pad(beta.astype(jnp.float32), (0, cpad - cout))
    inv = lax.rsqrt(var + eps)
    scale = g * inv
    shift = b - mean * scale
    return scale, shift


# ---------------------------------------------------------------------------
# Kernel 2: corner pooling (reverse running max), BN+ReLU fused on load,
# log2(len) shift-and-max doubling scan, tiled over the non-scan axis.
# ---------------------------------------------------------------------------
def _make_toppool_kernel(h):
    def kernel(x_ref, sc_ref, sh_ref, o_ref, buf):
        buf[...] = jnp.maximum(
            x_ref[0].astype(jnp.float32) * sc_ref[...] + sh_ref[...], 0.0)
        s = 1
        while s < h:                      # log2(H) steps along the lead axis
            buf[0:h - s] = jnp.maximum(buf[0:h - s], buf[s:h])
            s *= 2
        o_ref[0] = buf[...].astype(o_ref.dtype)
    return kernel


def _top_pool(y_raw, scale, shift, n, h, w, cpad, out_dtype):
    """TopPool of relu(y_raw*scale + shift); returns (N, H*W, Cpad)."""
    tw = _pick_pool_tile(w, h * cpad * 4, _POOL_BLOCK_BYTES, 8)
    x4 = y_raw.reshape(n, h, w, cpad)
    sc = scale.reshape(1, 1, cpad)
    sh = shift.reshape(1, 1, cpad)
    out = pl.pallas_call(
        _make_toppool_kernel(h),
        out_shape=jax.ShapeDtypeStruct((n, h, w, cpad), out_dtype),
        grid=(n, w // tw),
        in_specs=[pl.BlockSpec((1, h, tw, cpad), lambda ni, wi: (ni, 0, wi, 0)),
                  pl.BlockSpec((1, 1, cpad), lambda ni, wi: (0, 0, 0)),
                  pl.BlockSpec((1, 1, cpad), lambda ni, wi: (0, 0, 0))],
        out_specs=pl.BlockSpec((1, h, tw, cpad), lambda ni, wi: (ni, 0, wi, 0)),
        scratch_shapes=[pltpu.VMEM((h, tw, cpad), jnp.float32)],
        compiler_params=_params(("parallel", "parallel"), _POOL_VMEM),
    )(x4, sc, sh)
    return out.reshape(n, h * w, cpad)


def _make_leftpool_kernel(w, rows):
    def kernel(x_ref, add_ref, sc_ref, sh_ref, o_ref, buf):
        buf[...] = jnp.maximum(
            x_ref[0].astype(jnp.float32) * sc_ref[0] + sh_ref[0], 0.0)
        s = 1
        while s < w:                      # log2(W) steps along the sublane axis
            col = lax.broadcasted_iota(jnp.int32, (rows - s, 1), 0) % w
            shifted = jnp.where(col + s < w, buf[s:rows], -jnp.inf)
            buf[0:rows - s] = jnp.maximum(buf[0:rows - s], shifted)
            s *= 2
        o_ref[0] = (buf[...] + add_ref[0].astype(jnp.float32)).astype(o_ref.dtype)
    return kernel


def _left_pool_add(y_raw, scale, shift, add_flat, n, h, w, cpad, out_dtype):
    """LeftPool of relu(y_raw*scale + shift) plus add_flat (fused add)."""
    th = _pick_pool_tile(h, w * cpad * 4, _POOL_BLOCK_BYTES, 1)
    rows = th * w
    sc = scale.reshape(1, 1, cpad)
    sh = shift.reshape(1, 1, cpad)
    big = pl.BlockSpec((1, rows, cpad), lambda ni, ti: (ni, ti, 0))
    small = pl.BlockSpec((1, 1, cpad), lambda ni, ti: (0, 0, 0))
    return pl.pallas_call(
        _make_leftpool_kernel(w, rows),
        out_shape=jax.ShapeDtypeStruct((n, h * w, cpad), out_dtype),
        grid=(n, h // th),
        in_specs=[big, big, small, small],
        out_specs=big,
        scratch_shapes=[pltpu.VMEM((rows, cpad), jnp.float32)],
        compiler_params=_params(("parallel", "parallel"), _POOL_VMEM),
    )(y_raw, add_flat, sc, sh)


# ---------------------------------------------------------------------------
# Module-level forwards
# ---------------------------------------------------------------------------
def convolution_forward(x_nchw, weight, gamma, beta, *, eps=1e-5,
                        compute_dtype=jnp.float32, tile_rows=16):
    """`convolution(k, inp_dim, out_dim, with_bn=True)` forward (NCHW API)."""
    cout = weight.shape[0]
    n, _, h, w = x_nchw.shape
    x = jnp.transpose(x_nchw, (0, 2, 3, 1)).astype(compute_dtype)
    y_raw, mean, var = _conv2d_raw(x, weight, compute_dtype=compute_dtype,
                                   tile_rows=tile_rows)
    scale, shift = _bn_scale_shift(gamma, beta, mean, var, y_raw.shape[-1], eps)
    # final BN + ReLU fused (by XLA) with the channel slice / NCHW transpose
    y = jnp.maximum(y_raw * scale + shift, 0.0)[..., :cout]
    return jnp.transpose(y.reshape(n, h, w, cout), (0, 3, 1, 2))


def pool_forward(x_nchw, params, *, eps=1e-5, compute_dtype=jnp.float32,
                 tile_rows=16):
    """Forward pass of `pool(channels, pool1, pool2)`.

    pool1/pool2 are constructor-injected classes in the PyTorch module (not
    defined in the spec); as in CornerNet's `tl_pool` they default here to
    TopPool (reverse running max along H) and LeftPool (along W)."""
    # TODO(synk): expose pool1/pool2 direction injection if BottomPool /
    # RightPool configurations are required.
    channels = x_nchw.shape[1]
    n, _, h, w = x_nchw.shape
    x = jnp.transpose(x_nchw, (0, 2, 3, 1)).astype(compute_dtype)
    kw = dict(compute_dtype=compute_dtype, tile_rows=tile_rows)

    # --- the three convs that read x (raw outputs + BN batch statistics) ----
    p1_raw, m1, v1 = _conv2d_raw(x, params["p1_w"], **kw)   # 3x3, ch -> 128
    p2_raw, m2, v2 = _conv2d_raw(x, params["p2_w"], **kw)   # 3x3, ch -> 128
    c1_raw, mc, vc = _conv2d_raw(x, params["c1_w"], **kw)   # 1x1, ch -> ch
    mid_pad = p1_raw.shape[-1]
    ch_pad = c1_raw.shape[-1]

    s1, b1 = _bn_scale_shift(params["p1_g"], params["p1_b"], m1, v1, mid_pad, eps)
    s2, b2 = _bn_scale_shift(params["p2_g"], params["p2_b"], m2, v2, mid_pad, eps)

    # --- corner pools with BN+ReLU fused on load; LeftPool fuses `+ pool1` --
    pool1 = _top_pool(p1_raw, s1, b1, n, h, w, mid_pad, compute_dtype)
    pool_sum = _left_pool_add(p2_raw, s2, b2, pool1, n, h, w, mid_pad,
                              compute_dtype)

    # --- p_conv1 over (pool1 + pool2) ----------------------------------------
    pc_raw, mp, vp = _conv2d_raw(pool_sum.reshape(n, h, w, mid_pad),
                                 params["p_w"], **kw)
    sp, bp = _bn_scale_shift(params["p_g"], params["p_b"], mp, vp, ch_pad, eps)
    sc1, bc1 = _bn_scale_shift(params["c1_g"], params["c1_b"], mc, vc,
                               ch_pad, eps)

    # --- conv2, with relu(p_bn1 + bn1) fused into its input stage ------------
    out_raw, mo, vo = _conv2d_raw(
        (pc_raw.reshape(n, h, w, ch_pad), c1_raw.reshape(n, h, w, ch_pad)),
        params["c2_w"], fuse_aff=(sp, bp, sc1, bc1), **kw)
    so, bo = _bn_scale_shift(params["c2_g"], params["c2_b"], mo, vo,
                             out_raw.shape[-1], eps)

    # --- final BN + ReLU fused (by XLA) with the slice / NCHW transpose ------
    out = jnp.maximum(out_raw * so + bo, 0.0)[..., :channels]
    return jnp.transpose(out.reshape(n, h, w, channels), (0, 3, 1, 2))


# ---------------------------------------------------------------------------
# Pure-JAX references (correctness checks)
# ---------------------------------------------------------------------------
def _conv_bn_ref(x, w, g, b, *, relu, eps=1e-5):
    y = lax.conv_general_dilated(x, w, (1, 1), "SAME",
                                 dimension_numbers=("NCHW", "OIHW", "NCHW"))
    mean = y.mean(axis=(0, 2, 3), keepdims=True)
    var = y.var(axis=(0, 2, 3), keepdims=True)
    y = (y - mean) * lax.rsqrt(var + eps)
    y = y * g.reshape(1, -1, 1, 1) + b.reshape(1, -1, 1, 1)
    return jnp.maximum(y, 0.0) if relu else y


def _pool_ref(x, p, eps=1e-5):
    p1 = _conv_bn_ref(x, p["p1_w"], p["p1_g"], p["p1_b"], relu=True, eps=eps)
    pool1 = lax.cummax(p1, axis=2, reverse=True)                  # TopPool
    p2 = _conv_bn_ref(x, p["p2_w"], p["p2_g"], p["p2_b"], relu=True, eps=eps)
    pool2 = lax.cummax(p2, axis=3, reverse=True)                  # LeftPool
    pc = _conv_bn_ref(pool1 + pool2, p["p_w"], p["p_g"], p["p_b"],
                      relu=False, eps=eps)
    c1 = _conv_bn_ref(x, p["c1_w"], p["c1_g"], p["c1_b"], relu=False, eps=eps)
    r = jnp.maximum(pc + c1, 0.0)
    return _conv_bn_ref(r, p["c2_w"], p["c2_g"], p["c2_b"], relu=True, eps=eps)


if __name__ == "__main__":
    # pool(channels=4, TopPool, LeftPool) at small shapes
    n, channels, h, w = 2, 4, 16, 16
    mid = 128  # p1_conv1 / p2_conv1 out_dim is fixed to 128 by the module

    key = jax.random.PRNGKey(0)
    ks = jax.random.split(key, 16)

    def conv_w(k_, shape):
        return 0.1 * jax.random.normal(k_, shape, dtype=jnp.float32)

    def bn_g(k_, c):
        return 1.0 + 0.1 * jax.random.normal(k_, (c,), dtype=jnp.float32)

    def bn_b(k_, c):
        return 0.1 * jax.random.normal(k_, (c,), dtype=jnp.float32)

    x = jax.random.normal(ks[0], (n, channels, h, w), dtype=jnp.float32)
    params = {
        "p1_w": conv_w(ks[1], (mid, channels, 3, 3)),
        "p1_g": bn_g(ks[2], mid), "p1_b": bn_b(ks[3], mid),
        "p2_w": conv_w(ks[4], (mid, channels, 3, 3)),
        "p2_g": bn_g(ks[5], mid), "p2_b": bn_b(ks[6], mid),
        "p_w": conv_w(ks[7], (channels, mid, 3, 3)),
        "p_g": bn_g(ks[8], channels), "p_b": bn_b(ks[9], channels),
        "c1_w": conv_w(ks[10], (channels, channels, 1, 1)),
        "c1_g": bn_g(ks[11], channels), "c1_b": bn_b(ks[12], channels),
        "c2_w": conv_w(ks[13], (channels, channels, 3, 3)),
        "c2_g": bn_g(ks[14], channels), "c2_b": bn_b(ks[15], channels),
    }

    # 1) `convolution` building block (single-tile and multi-tile/halo paths)
    r_conv = _conv_bn_ref(x, params["p1_w"], params["p1_g"], params["p1_b"],
                          relu=True)
    for tr in (16, 8):
        y_conv = jax.block_until_ready(
            convolution_forward(x, params["p1_w"], params["p1_g"],
                                params["p1_b"], tile_rows=tr))
        np.testing.assert_allclose(np.asarray(y_conv), np.asarray(r_conv),
                                   rtol=1e-4, atol=1e-4)

    # 2) full `pool` forward (tile_rows=8 exercises the in-kernel halo path)
    y_pool = jax.block_until_ready(pool_forward(x, params, tile_rows=8))
    r_pool = _pool_ref(x, params)
    np.testing.assert_allclose(np.asarray(y_pool), np.asarray(r_pool),
                               rtol=2e-3, atol=2e-3)

    # 3) bf16 MXU-feed path (v5e/v6e/v7x optimization), loose check
    y_bf16 = jax.block_until_ready(
        convolution_forward(x, params["p1_w"], params["p1_g"], params["p1_b"],
                            compute_dtype=jnp.bfloat16))
    assert bool(jnp.all(jnp.isfinite(y_bf16)))
    np.testing.assert_allclose(np.asarray(y_bf16), np.asarray(r_conv),
                               rtol=0.2, atol=0.2)

    print("KERNEL_OK")
</pallas_src>

<mosaic_0001>
module attributes {stable_mosaic.version = 11 : i64} {
  func.func @kernel(%arg0: i32, %arg1: i32, %arg2: memref<1x16x16x4xf32, #tpu.memory_space<vmem>>, %arg3: memref<1x1x16x4xf32, #tpu.memory_space<vmem>>, %arg4: memref<1x1x16x4xf32, #tpu.memory_space<vmem>>, %arg5: memref<9x4x128xf32, #tpu.memory_space<vmem>>, %arg6: memref<1x256x128xf32, #tpu.memory_space<vmem>>, %arg7: memref<1x1x2x128xf32, #tpu.memory_space<vmem>>, %arg8: memref<290x4xf32, #tpu.memory_space<vmem>>) attributes {dimension_semantics = [#tpu.dimension_semantics<parallel>, #tpu.dimension_semantics<parallel>], iteration_bounds = array<i64: 2, 1>, scalar_prefetch = 0 : i64, scratch_operands = 1 : i64, tpu.core_type = #tpu.core_type<tc>, window_params = [{transform_indices = @transform_0, window_bounds = array<i64: 1, 16, 16, 4>}, {transform_indices = @transform_1, window_bounds = array<i64: 1, 1, 16, 4>}, {transform_indices = @transform_2, window_bounds = array<i64: 1, 1, 16, 4>}, {pipeline_mode = #tpu.pipeline_mode<synchronous>, transform_indices = @transform_3, window_bounds = array<i64: 9, 4, 128>}, {transform_indices = @transform_4, window_bounds = array<i64: 1, 256, 128>}, {transform_indices = @transform_5, window_bounds = array<i64: 1, 1, 2, 128>}]} {
    %cst = arith.constant 0.000000e+00 : f32
    %0 = vector.broadcast %cst : f32 to vector<16x4xf32>
    %cst_0 = arith.constant 0.000000e+00 : f32
    %1 = vector.broadcast %cst_0 : f32 to vector<1x4xf32>
    %c0 = arith.constant 0 : index
    %c0_1 = arith.constant 0 : index
    %2 = vector.load %arg8[%c0, %c0_1] : memref<290x4xf32, #tpu.memory_space<vmem>>, vector<1x4xf32>
    tpu.vector_store %arg8[%c0, %c0_1], %1 {strides = array<i32>} : memref<290x4xf32, #tpu.memory_space<vmem>>, vector<1x4xf32>,
    %cst_2 = arith.constant 0.000000e+00 : f32
    %3 = vector.broadcast %cst_2 : f32 to vector<1x4xf32>
    %c289 = arith.constant 289 : index
    %c0_3 = arith.constant 0 : index
    %4 = vector.load %arg8[%c289, %c0_3] : memref<290x4xf32, #tpu.memory_space<vmem>>, vector<1x4xf32>
    tpu.vector_store %arg8[%c289, %c0_3], %3 {strides = array<i32>} : memref<290x4xf32, #tpu.memory_space<vmem>>, vector<1x4xf32>,
    %c0_4 = arith.constant 0 : index
    %c0_5 = arith.constant 0 : index
    %c0_6 = arith.constant 0 : index
    %c0_7 = arith.constant 0 : index
    %5 = vector.load %arg2[%c0_4, %c0_5, %c0_6, %c0_7] : memref<1x16x16x4xf32, #tpu.memory_space<vmem>>, vector<1x16x16x4xf32>
    %6 = vector.shape_cast %5 : vector<1x16x16x4xf32> to vector<16x16x4xf32>
    %7 = vector.shape_cast %6 : vector<16x16x4xf32> to vector<256x4xf32>
    %c17 = arith.constant 17 : index
    %c0_8 = arith.constant 0 : index
    %8 = vector.load %arg8[%c17, %c0_8] : memref<290x4xf32, #tpu.memory_space<vmem>>, vector<256x4xf32>
    tpu.vector_store %arg8[%c17, %c0_8], %7 {strides = array<i32>} : memref<290x4xf32, #tpu.memory_space<vmem>>, vector<256x4xf32>,
    %c0_i32 = arith.constant 0 : i32
    %9 = arith.cmpi eq, %arg1, %c0_i32 : i32
    %10 = arith.extui %9 : i1 to i32
    %c0_i32_9 = arith.constant 0 : i32
    %11 = arith.cmpi ne, %10, %c0_i32_9 : i32
    scf.if %11 {
      %c1_81 = arith.constant 1 : index
      %c0_82 = arith.constant 0 : index
      %122 = vector.load %arg8[%c1_81, %c0_82] : memref<290x4xf32, #tpu.memory_space<vmem>>, vector<16x4xf32>
      tpu.vector_store %arg8[%c1_81, %c0_82], %0 {strides = array<i32>} : memref<290x4xf32, #tpu.memory_space<vmem>>, vector<16x4xf32>,
    } else {
    }
    %c0_i32_10 = arith.constant 0 : i32
    %12 = arith.cmpi sgt, %arg1, %c0_i32_10 : i32
    %13 = arith.extui %12 : i1 to i32
    %c0_i32_11 = arith.constant 0 : i32
    %14 = arith.cmpi ne, %13, %c0_i32_11 : i32
    scf.if %14 {
      %c0_81 = arith.constant 0 : index
      %c0_82 = arith.constant 0 : index
      %c0_83 = arith.constant 0 : index
      %c0_84 = arith.constant 0 : index
      %122 = vector.load %arg3[%c0_81, %c0_82, %c0_83, %c0_84] : memref<1x1x16x4xf32, #tpu.memory_space<vmem>>, vector<1x1x16x4xf32>
      %123 = vector.shape_cast %122 : vector<1x1x16x4xf32> to vector<1x16x4xf32>
      %124 = vector.shape_cast %123 : vector<1x16x4xf32> to vector<16x4xf32>
      %c1_85 = arith.constant 1 : index
      %c0_86 = arith.constant 0 : index
      %125 = vector.load %arg8[%c1_85, %c0_86] : memref<290x4xf32, #tpu.memory_space<vmem>>, vector<16x4xf32>
      tpu.vector_store %arg8[%c1_85, %c0_86], %124 {strides = array<i32>} : memref<290x4xf32, #tpu.memory_space<vmem>>, vector<16x4xf32>,
    } else {
    }
    %c0_i32_12 = arith.constant 0 : i32
    %15 = arith.cmpi eq, %arg1, %c0_i32_12 : i32
    %16 = arith.extui %15 : i1 to i32
    %c0_i32_13 = arith.constant 0 : i32
    %17 = arith.cmpi ne, %16, %c0_i32_13 : i32
    scf.if %17 {
      %c273 = arith.constant 273 : index
      %c0_81 = arith.constant 0 : index
      %122 = vector.load %arg8[%c273, %c0_81] : memref<290x4xf32, #tpu.memory_space<vmem>>, vector<16x4xf32>
      tpu.vector_store %arg8[%c273, %c0_81], %0 {strides = array<i32>} : memref<290x4xf32, #tpu.memory_space<vmem>>, vector<16x4xf32>,
    } else {
    }
    %c0_i32_14 = arith.constant 0 : i32
    %18 = arith.cmpi slt, %arg1, %c0_i32_14 : i32
    %19 = arith.extui %18 : i1 to i32
    %c0_i32_15 = arith.constant 0 : i32
    %20 = arith.cmpi ne, %19, %c0_i32_15 : i32
    scf.if %20 {
      %c0_81 = arith.constant 0 : index
      %c0_82 = arith.constant 0 : index
      %c0_83 = arith.constant 0 : index
      %c0_84 = arith.constant 0 : index
      %122 = vector.load %arg4[%c0_81, %c0_82, %c0_83, %c0_84] : memref<1x1x16x4xf32, #tpu.memory_space<vmem>>, vector<1x1x16x4xf32>
      %123 = vector.shape_cast %122 : vector<1x1x16x4xf32> to vector<1x16x4xf32>
      %124 = vector.shape_cast %123 : vector<1x16x4xf32> to vector<16x4xf32>
      %c273 = arith.constant 273 : index
      %c0_85 = arith.constant 0 : index
      %125 = vector.load %arg8[%c273, %c0_85] : memref<290x4xf32, #tpu.memory_space<vmem>>, vector<16x4xf32>
      tpu.vector_store %arg8[%c273, %c0_85], %124 {strides = array<i32>} : memref<290x4xf32, #tpu.memory_space<vmem>>, vector<16x4xf32>,
    } else {
    }
    %21 = tpu.iota {dimensions = array<i32: 0>} : vector<256x1xi32>
    %c16_i32 = arith.constant 16 : i32
    %c0_i32_16 = arith.constant 0 : i32
    %22 = arith.cmpi eq, %c16_i32, %c0_i32_16 : i32
    %c1_i32 = arith.constant 1 : i32
    %23 = arith.select %22, %c1_i32, %c16_i32 : i32
    %24 = vector.broadcast %23 : i32 to vector<256x1xi32>
    %25 = arith.remsi %21, %24 : vector<256x1xi32>
    %c0_i32_17 = arith.constant 0 : i32
    %26 = vector.broadcast %c0_i32_17 : i32 to vector<256x1xi32>
    %27 = arith.cmpi ne, %25, %26 : vector<256x1xi32>
    %c0_i32_18 = arith.constant 0 : i32
    %28 = vector.broadcast %c0_i32_18 : i32 to vector<256x1xi32>
    %29 = arith.cmpi slt, %25, %28 : vector<256x1xi32>
    %c0_i32_19 = arith.constant 0 : i32
    %30 = arith.cmpi slt, %23, %c0_i32_19 : i32
    %31 = vector.broadcast %30 : i1 to vector<256x1xi1>
    %32 = vector.broadcast %31 : vector<256x1xi1> to vector<256x1xi1>
    %33 = arith.xori %29, %32 : vector<256x1xi1>
    %34 = arith.andi %33, %27 : vector<256x1xi1>
    %35 = vector.broadcast %23 : i32 to vector<256x1xi32>
    %36 = arith.addi %25, %35 : vector<256x1xi32>
    %37 = arith.select %34, %36, %25 : vector<256x1xi1>, vector<256x1xi32>
    %cst_20 = arith.constant 0.000000e+00 : f32
    %38 = vector.broadcast %cst_20 : f32 to vector<256x128xf32>
    %cst_21 = arith.constant 0.000000e+00 : f32
    %39 = vector.broadcast %cst_21 : f32 to vector<256x128xf32>
    %c0_22 = arith.constant 0 : index
    %c0_23 = arith.constant 0 : index
    %40 = vector.load %arg8[%c0_22, %c0_23] : memref<290x4xf32, #tpu.memory_space<vmem>>, vector<256x4xf32>
    %c0_24 = arith.constant 0 : index
    %c0_25 = arith.constant 0 : index
    %c0_26 = arith.constant 0 : index
    %41 = vector.load %arg5[%c0_24, %c0_25, %c0_26] : memref<9x4x128xf32, #tpu.memory_space<vmem>>, vector<1x4x128xf32>
    %42 = vector.shape_cast %41 : vector<1x4x128xf32> to vector<4x128xf32>
    %cst_27 = arith.constant dense<0.000000e+00> : vector<256x128xf32>
    %43 = tpu.matmul %40, %42, %cst_27 {dimension_numbers = #tpu.dot_dimension_numbers<[1], [0], [0], [1], [0, 0, 1, 1], [], []>} : vector<256x4xf32>, vector<4x128xf32>, vector<256x128xf32> -> vector<256x128xf32>
    %44 = arith.addf %39, %43 : vector<256x128xf32>
    %c16 = arith.constant 16 : index
    %c0_28 = arith.constant 0 : index
    %45 = vector.load %arg8[%c16, %c0_28] : memref<290x4xf32, #tpu.memory_space<vmem>>, vector<256x4xf32>
    %c3 = arith.constant 3 : index
    %c0_29 = arith.constant 0 : index
    %c0_30 = arith.constant 0 : index
    %46 = vector.load %arg5[%c3, %c0_29, %c0_30] : memref<9x4x128xf32, #tpu.memory_space<vmem>>, vector<1x4x128xf32>
    %47 = vector.shape_cast %46 : vector<1x4x128xf32> to vector<4x128xf32>
    %cst_31 = arith.constant dense<0.000000e+00> : vector<256x128xf32>
    %48 = tpu.matmul %45, %47, %cst_31 {dimension_numbers = #tpu.dot_dimension_numbers<[1], [0], [0], [1], [0, 0, 1, 1], [], []>} : vector<256x4xf32>, vector<4x128xf32>, vector<256x128xf32> -> vector<256x128xf32>
    %49 = arith.addf %44, %48 : vector<256x128xf32>
    %c32 = arith.constant 32 : index
    %c0_32 = arith.constant 0 : index
    %50 = vector.load %arg8[%c32, %c0_32] : memref<290x4xf32, #tpu.memory_space<vmem>>, vector<256x4xf32>
    %c6 = arith.constant 6 : index
    %c0_33 = arith.constant 0 : index
    %c0_34 = arith.constant 0 : index
    %51 = vector.load %arg5[%c6, %c0_33, %c0_34] : memref<9x4x128xf32, #tpu.memory_space<vmem>>, vector<1x4x128xf32>
    %52 = vector.shape_cast %51 : vector<1x4x128xf32> to vector<4x128xf32>
    %cst_35 = arith.constant dense<0.000000e+00> : vector<256x128xf32>
    %53 = tpu.matmul %50, %52, %cst_35 {dimension_numbers = #tpu.dot_dimension_numbers<[1], [0], [0], [1], [0, 0, 1, 1], [], []>} : vector<256x4xf32>, vector<4x128xf32>, vector<256x128xf32> -> vector<256x128xf32>
    %54 = arith.addf %49, %53 : vector<256x128xf32>
    %c1_i32_36 = arith.constant 1 : i32
    %55 = vector.broadcast %c1_i32_36 : i32 to vector<256x1xi32>
    %56 = arith.cmpi sge, %37, %55 : vector<256x1xi32>
    %c17_i32 = arith.constant 17 : i32
    %57 = vector.broadcast %c17_i32 : i32 to vector<256x1xi32>
    %58 = arith.cmpi slt, %37, %57 : vector<256x1xi32>
    %59 = arith.andi %56, %58 : vector<256x1xi1>
    %cst_37 = arith.constant 0.000000e+00 : f32
    %60 = vector.shape_cast %59 : vector<256x1xi1> to vector<256x1xi1>
    %61 = vector.broadcast %60 : vector<256x1xi1> to vector<256x128xi1>
    %62 = vector.broadcast %cst_37 : f32 to vector<256x128xf32>
    %63 = arith.select %61, %54, %62 : vector<256x128xi1>, vector<256x128xf32>
    %64 = arith.addf %38, %63 : vector<256x128xf32>
    %cst_38 = arith.constant 0.000000e+00 : f32
    %65 = vector.broadcast %cst_38 : f32 to vector<256x128xf32>
    %c1 = arith.constant 1 : index
    %c0_39 = arith.constant 0 : index
    %66 = vector.load %arg8[%c1, %c0_39] : memref<290x4xf32, #tpu.memory_space<vmem>>, vector<256x4xf32>
    %c1_40 = arith.constant 1 : index
    %c0_41 = arith.constant 0 : index
    %c0_42 = arith.constant 0 : index
    %67 = vector.load %arg5[%c1_40, %c0_41, %c0_42] : memref<9x4x128xf32, #tpu.memory_space<vmem>>, vector<1x4x128xf32>
    %68 = vector.shape_cast %67 : vector<1x4x128xf32> to vector<4x128xf32>
    %cst_43 = arith.constant dense<0.000000e+00> : vector<256x128xf32>
    %69 = tpu.matmul %66, %68, %cst_43 {dimension_numbers = #tpu.dot_dimension_numbers<[1], [0], [0], [1], [0, 0, 1, 1], [], []>} : vector<256x4xf32>, vector<4x128xf32>, vector<256x128xf32> -> vector<256x128xf32>
    %70 = arith.addf %65, %69 : vector<256x128xf32>
    %c17_44 = arith.constant 17 : index
    %c0_45 = arith.constant 0 : index
    %71 = vector.load %arg8[%c17_44, %c0_45] : memref<290x4xf32, #tpu.memory_space<vmem>>, vector<256x4xf32>
    %c4 = arith.constant 4 : index
    %c0_46 = arith.constant 0 : index
    %c0_47 = arith.constant 0 : index
    %72 = vector.load %arg5[%c4, %c0_46, %c0_47] : memref<9x4x128xf32, #tpu.memory_space<vmem>>, vector<1x4x128xf32>
    %73 = vector.shape_cast %72 : vector<1x4x128xf32> to vector<4x128xf32>
    %cst_48 = arith.constant dense<0.000000e+00> : vector<256x128xf32>
    %74 = tpu.matmul %71, %73, %cst_48 {dimension_numbers = #tpu.dot_dimension_numbers<[1], [0], [0], [1], [0, 0, 1, 1], [], []>} : vector<256x4xf32>, vector<4x128xf32>, vector<256x128xf32> -> vector<256x128xf32>
    %75 = arith.addf %70, %74 : vector<256x128xf32>
    %c33 = arith.constant 33 : index
    %c0_49 = arith.constant 0 : index
    %76 = vector.load %arg8[%c33, %c0_49] : memref<290x4xf32, #tpu.memory_space<vmem>>, vector<256x4xf32>
    %c7 = arith.constant 7 : index
    %c0_50 = arith.constant 0 : index
    %c0_51 = arith.constant 0 : index
    %77 = vector.load %arg5[%c7, %c0_50, %c0_51] : memref<9x4x128xf32, #tpu.memory_space<vmem>>, vector<1x4x128xf32>
    %78 = vector.shape_cast %77 : vector<1x4x128xf32> to vector<4x128xf32>
    %cst_52 = arith.constant dense<0.000000e+00> : vector<256x128xf32>
    %79 = tpu.matmul %76, %78, %cst_52 {dimension_numbers = #tpu.dot_dimension_numbers<[1], [0], [0], [1], [0, 0, 1, 1], [], []>} : vector<256x4xf32>, vector<4x128xf32>, vector<256x128xf32> -> vector<256x128xf32>
    %80 = arith.addf %75, %79 : vector<256x128xf32>
    %81 = arith.addf %64, %80 : vector<256x128xf32>
    %cst_53 = arith.constant 0.000000e+00 : f32
    %82 = vector.broadcast %cst_53 : f32 to vector<256x128xf32>
    %c2 = arith.constant 2 : index
    %c0_54 = arith.constant 0 : index
    %83 = vector.load %arg8[%c2, %c0_54] : memref<290x4xf32, #tpu.memory_space<vmem>>, vector<256x4xf32>
    %c2_55 = arith.constant 2 : index
    %c0_56 = arith.constant 0 : index
    %c0_57 = arith.constant 0 : index
    %84 = vector.load %arg5[%c2_55, %c0_56, %c0_57] : memref<9x4x128xf32, #tpu.memory_space<vmem>>, vector<1x4x128xf32>
    %85 = vector.shape_cast %84 : vector<1x4x128xf32> to vector<4x128xf32>
    %cst_58 = arith.constant dense<0.000000e+00> : vector<256x128xf32>
    %86 = tpu.matmul %83, %85, %cst_58 {dimension_numbers = #tpu.dot_dimension_numbers<[1], [0], [0], [1], [0, 0, 1, 1], [], []>} : vector<256x4xf32>, vector<4x128xf32>, vector<256x128xf32> -> vector<256x128xf32>
    %87 = arith.addf %82, %86 : vector<256x128xf32>
    %c18 = arith.constant 18 : index
    %c0_59 = arith.constant 0 : index
    %88 = vector.load %arg8[%c18, %c0_59] : memref<290x4xf32, #tpu.memory_space<vmem>>, vector<256x4xf32>
    %c5 = arith.constant 5 : index
    %c0_60 = arith.constant 0 : index
    %c0_61 = arith.constant 0 : index
    %89 = vector.load %arg5[%c5, %c0_60, %c0_61] : memref<9x4x128xf32, #tpu.memory_space<vmem>>, vector<1x4x128xf32>
    %90 = vector.shape_cast %89 : vector<1x4x128xf32> to vector<4x128xf32>
    %cst_62 = arith.constant dense<0.000000e+00> : vector<256x128xf32>
    %91 = tpu.matmul %88, %90, %cst_62 {dimension_numbers = #tpu.dot_dimension_numbers<[1], [0], [0], [1], [0, 0, 1, 1], [], []>} : vector<256x4xf32>, vector<4x128xf32>, vector<256x128xf32> -> vector<256x128xf32>
    %92 = arith.addf %87, %91 : vector<256x128xf32>
    %c34 = arith.constant 34 : index
    %c0_63 = arith.constant 0 : index
    %93 = vector.load %arg8[%c34, %c0_63] : memref<290x4xf32, #tpu.memory_space<vmem>>, vector<256x4xf32>
    %c8 = arith.constant 8 : index
    %c0_64 = arith.constant 0 : index
    %c0_65 = arith.constant 0 : index
    %94 = vector.load %arg5[%c8, %c0_64, %c0_65] : memref<9x4x128xf32, #tpu.memory_space<vmem>>, vector<1x4x128xf32>
    %95 = vector.shape_cast %94 : vector<1x4x128xf32> to vector<4x128xf32>
    %cst_66 = arith.constant dense<0.000000e+00> : vector<256x128xf32>
    %96 = tpu.matmul %93, %95, %cst_66 {dimension_numbers = #tpu.dot_dimension_numbers<[1], [0], [0], [1], [0, 0, 1, 1], [], []>} : vector<256x4xf32>, vector<4x128xf32>, vector<256x128xf32> -> vector<256x128xf32>
    %97 = arith.addf %92, %96 : vector<256x128xf32>
    %c-1_i32 = arith.constant -1 : i32
    %98 = vector.broadcast %c-1_i32 : i32 to vector<256x1xi32>
    %99 = arith.cmpi sge, %37, %98 : vector<256x1xi32>
    %c15_i32 = arith.constant 15 : i32
    %100 = vector.broadcast %c15_i32 : i32 to vector<256x1xi32>
    %101 = arith.cmpi slt, %37, %100 : vector<256x1xi32>
    %102 = arith.andi %99, %101 : vector<256x1xi1>
    %cst_67 = arith.constant 0.000000e+00 : f32
    %103 = vector.shape_cast %102 : vector<256x1xi1> to vector<256x1xi1>
    %104 = vector.broadcast %103 : vector<256x1xi1> to vector<256x128xi1>
    %105 = vector.broadcast %cst_67 : f32 to vector<256x128xf32>
    %106 = arith.select %104, %97, %105 : vector<256x128xi1>, vector<256x128xf32>
    %107 = arith.addf %81, %106 : vector<256x128xf32>
    %c0_68 = arith.constant 0 : index
    %c0_69 = arith.constant 0 : index
    %c0_70 = arith.constant 0 : index
    %108 = vector.load %arg6[%c0_68, %c0_69, %c0_70] : memref<1x256x128xf32, #tpu.memory_space<vmem>>, vector<1x256x128xf32>
    %109 = vector.shape_cast %108 : vector<1x256x128xf32> to vector<256x128xf32>
    %110 = vector.shape_cast %107 : vector<256x128xf32> to vector<1x256x128xf32>
    tpu.vector_store %arg6[%c0_68, %c0_69, %c0_70], %110 {strides = array<i32>} : memref<1x256x128xf32, #tpu.memory_space<vmem>>, vector<1x256x128xf32>,
    %cst_71 = arith.constant dense<0.000000e+00> : vector<128xf32>
    %111 = vector.multi_reduction <add>, %107, %cst_71 [0] : vector<256x128xf32> to vector<128xf32>
    %112 = vector.shape_cast %111 : vector<128xf32> to vector<1x128xf32>
    %c0_72 = arith.constant 0 : index
    %c0_73 = arith.constant 0 : index
    %c0_74 = arith.constant 0 : index
    %c0_75 = arith.constant 0 : index
    %113 = vector.load %arg7[%c0_72, %c0_73, %c0_74, %c0_75] : memref<1x1x2x128xf32, #tpu.memory_space<vmem>>, vector<1x1x1x128xf32>
    %114 = vector.shape_cast %113 : vector<1x1x1x128xf32> to vector<1x128xf32>
    %115 = vector.shape_cast %112 : vector<1x128xf32> to vector<1x1x1x128xf32>
    tpu.vector_store %arg7[%c0_72, %c0_73, %c0_74, %c0_75], %115 {strides = array<i32>} : memref<1x1x2x128xf32, #tpu.memory_space<vmem>>, vector<1x1x1x128xf32>,
    %116 = arith.mulf %107, %107 : vector<256x128xf32>
    %cst_76 = arith.constant dense<0.000000e+00> : vector<128xf32>
    %117 = vector.multi_reduction <add>, %116, %cst_76 [0] : vector<256x128xf32> to vector<128xf32>
    %118 = vector.shape_cast %117 : vector<128xf32> to vector<1x128xf32>
    %c0_77 = arith.constant 0 : index
    %c0_78 = arith.constant 0 : index
    %c1_79 = arith.constant 1 : index
    %c0_80 = arith.constant 0 : index
    %119 = vector.load %arg7[%c0_77, %c0_78, %c1_79, %c0_80] : memref<1x1x2x128xf32, #tpu.memory_space<vmem>>, vector<1x1x1x128xf32>
    %120 = vector.shape_cast %119 : vector<1x1x1x128xf32> to vector<1x128xf32>
    %121 = vector.shape_cast %118 : vector<1x128xf32> to vector<1x1x1x128xf32>
    tpu.vector_store %arg7[%c0_77, %c0_78, %c1_79, %c0_80], %121 {strides = array<i32>} : memref<1x1x2x128xf32, #tpu.memory_space<vmem>>, vector<1x1x1x128xf32>,
    return
  }
  func.func @transform_0(%arg0: i32, %arg1: i32) -> (i32, i32, i32, i32) {
    %c0_i32 = arith.constant 0 : i32
    %c0_i32_0 = arith.constant 0 : i32
    %c0_i32_1 = arith.constant 0 : i32
    return %arg0, %arg1, %c0_i32, %c0_i32_0 : i32, i32, i32, i32
  }
  func.func @transform_1(%arg0: i32, %arg1: i32) -> (i32, i32, i32, i32) {
    %c16_i32 = arith.constant 16 : i32
    %0 = arith.muli %arg1, %c16_i32 : i32
    %c1_i32 = arith.constant 1 : i32
    %1 = arith.subi %0, %c1_i32 : i32
    %c0_i32 = arith.constant 0 : i32
    %2 = arith.maxsi %1, %c0_i32 : i32
    %c0_i32_0 = arith.constant 0 : i32
    %c0_i32_1 = arith.constant 0 : i32
    %c0_i32_2 = arith.constant 0 : i32
    return %arg0, %2, %c0_i32_0, %c0_i32_1 : i32, i32, i32, i32
  }
  func.func @transform_2(%arg0: i32, %arg1: i32) -> (i32, i32, i32, i32) {
    %c1_i32 = arith.constant 1 : i32
    %0 = arith.addi %arg1, %c1_i32 : i32
    %c16_i32 = arith.constant 16 : i32
    %1 = arith.muli %0, %c16_i32 : i32
    %c15_i32 = arith.constant 15 : i32
    %2 = arith.minsi %1, %c15_i32 : i32
    %c0_i32 = arith.constant 0 : i32
    %c0_i32_0 = arith.constant 0 : i32
    %c0_i32_1 = arith.constant 0 : i32
    return %arg0, %2, %c0_i32, %c0_i32_0 : i32, i32, i32, i32
  }
  func.func @transform_3(%arg0: i32, %arg1: i32) -> (i32, i32, i32) {
    %c0_i32 = arith.constant 0 : i32
    %c0_i32_0 = arith.constant 0 : i32
    %c0_i32_1 = arith.constant 0 : i32
    %c0_i32_2 = arith.constant 0 : i32
    return %c0_i32, %c0_i32_0, %c0_i32_1 : i32, i32, i32
  }
  func.func @transform_4(%arg0: i32, %arg1: i32) -> (i32, i32, i32) {
    %c0_i32 = arith.constant 0 : i32
    %c0_i32_0 = arith.constant 0 : i32
    return %arg0, %arg1, %c0_i32 : i32, i32, i32
  }
  func.func @transform_5(%arg0: i32, %arg1: i32) -> (i32, i32, i32, i32) {
    %c0_i32 = arith.constant 0 : i32
    %c0_i32_0 = arith.constant 0 : i32
    %c0_i32_1 = arith.constant 0 : i32
    return %arg0, %arg1, %c0_i32, %c0_i32_0 : i32, i32, i32, i32
  }
}

</mosaic_0001>

<llo_original>
// kernel: tpu_custom_call.1
$region0: #{tpu_custom_call.1}
  #allocation0 [shape = 'u32[]', space=smem, size = 0x4, offset = 0x4, fixed_abs, tag = 'smem constant byte address 0x4 - core index']
  #allocation1 [shape = 'u32[144,128]{1,0:T(1,128)}', space=vmem, size = 0x12000, scoped, tag = 'internal scratch']
  #allocation2 [shape = 'f32[290,4]{1,0:T(8,128)}', space=vmem, size = 0x25000, scoped, tag = 'scratch operand']
  %s0 = inlined_call_operand.vmem [shape: f32[2,16,16,4], index: 0, kind: input, shape index: {}]
  %s1 = inlined_call_operand.vmem [shape: f32[2,16,16,4], index: 1, kind: input, shape index: {}]
  %s2 = inlined_call_operand.vmem [shape: f32[2,16,16,4], index: 2, kind: input, shape index: {}]
  %s3 = inlined_call_operand.vmem [shape: f32[9,4,128], index: 3, kind: input, shape index: {}]
  %s4 = inlined_call_operand.hbm [shape: f32[2,256,128], index: 4, kind: output, shape index: {0}]
  %s5 = inlined_call_operand.hbm [shape: f32[2,1,2,128], index: 5, kind: output, shape index: {1}]
  %6 = xla_tuple %s4, %s5
  %s7 = sld [smem:[#allocation0]]
  $region73: #{tpu_custom_call.1} parent=0
    _
  %s9 = ssub.s32 1, %s7
  %s10 = scalar_select 0, %s9, %s7
  $region1: #{tpu_custom_call.1} parent=0
    #allocation3 [shape = 'u8[262144]{0}', space=vmem, size = 0x40000, scoped, tag = 'output window, operand 0']
    #allocation4 [shape = 's32[2]{0}', space=sflag, size = 0x8, scoped, tag = 'scoped memory for tpu_custom_call.1']
    #allocation5 [shape = 'u8[2048]{0}', space=vmem, size = 0x800, scoped, tag = 'output window, operand 1']
    #allocation6 [shape = 's32[2]{0}', space=sflag, size = 0x8, scoped, tag = 'scoped memory for tpu_custom_call.1']
    %11 = vsyncpa [#allocation4], 0
    %s12 = scalar_lea.sflag [#allocation4], 1
    %13 = vsyncpa %s12, 0
    %14 = vsyncpa [#allocation6], 0
    %s15 = scalar_lea.sflag [#allocation6], 1
    %16 = vsyncpa %s15, 0
    loop: start=0, step=1, limit=4
    $region2: #{tpu_custom_call.1} parent=1 // loop_pre_header
      _
    $region3: #{tpu_custom_call.1} parent=1 // loop_header
      %s18 = sphi 0, %s22
      %p19 = scmp.ge.s32.totalorder %s18, 4
      %s25 = sphi 0, %s37
      %s26 = sphi 0, %s33
      %s27 = sphi 0, %s25
      %s28 = sphi 0, %s26
      %s29 = sphi 0, %s27
      %s30 = sphi 0, %s28
      %s42 = sphi 0, %s44
      %s45 = sphi 0, %s42
      %s46 = sphi 0, %s45
      %s62 = sphi 0, %s46
      %s78 = sphi 0, %s80
      %s81 = sphi 0, %s78
      %s82 = sphi 0, %s81
      %s98 = sphi 0, %s82
      %s114 = sphi 0, %s116
      %s117 = sphi 0, %s114
      %s118 = sphi 0, %s117
      %s134 = sphi 0, %s118
      %s138 = sphi 0, %s138
      %s140 = sphi 0, %s138
      %s141 = sphi 0, %s140
      %s155 = sphi 0, %s141
      %s163 = sphi 0, %s165
      %s166 = sphi 0, %s163
      %s167 = sphi 0, %s166
      %s183 = sphi 0, %s167
      %s191 = sphi 0, %s193
      %s194 = sphi 0, %s191
      %s195 = sphi 0, %s194
      %s211 = sphi 0, %s195
    $region4: #{tpu_custom_call.1} parent=1 // loop_header_branch
      %21 = sbr.rel (%p19) target = $region8
    $region5: #{tpu_custom_call.1} parent=1 // loop_body
      %s23 = ssub.s32 %s18, 1
      %s24 = ssub.s32 %s18, 2
      %s31 = sadd.s32 1, %s26
      %p32 = scmp.ge.s32.totalorder %s31, 1
      %s33 = scalar_select %p32, 0, %s31
      %s34 = sadd.s32 1, %s25
      %s35 = scalar_select %p32, %s34, %s25
      %p36 = scmp.ge.s32.totalorder %s35, 2
      %s37 = scalar_select %p36, 0, %s35
      %s38 = ssub.s32 %s25, %s37
      %s39 = ssub.s32 %s26, %s33
      %s40 = sor.u32 %s38, %s39
      %p41 = scmp.eq.s32.totalorder %s40, 0
      %s43 = sadd.s32 %s42, 1
      %s44 = scalar_select %p41, %s42, %s43
      %p47 = pneg %p41
      %p48 = scmp.eq.s32.totalorder %s18, 1
      %p49 = por %p47, %p48
      %p50 = scmp.ne.s32.totalorder %s42, %s45
      %p51 = scmp.eq.s32.totalorder %s18, 0
      %p52 = por %p50, %p51
      %p53 = scmp.ne.s32.totalorder %s42, %s45
      %p54 = scmp.eq.s32.totalorder %s23, 1
      %p55 = por %p53, %p54
      %p56 = scmp.ne.s32.totalorder %s45, %s46
      %p57 = scmp.eq.s32.totalorder %s23, 0
      %p58 = por %p56, %p57
      %p59 = scmp.ne.s32.totalorder %s45, %s46
      %p60 = scmp.eq.s32.totalorder %s24, 1
      %p61 = por %p59, %p60
      %p63 = scmp.ne.s32.totalorder %s46, %s62
      %p64 = scmp.eq.s32.totalorder %s24, 0
      %p65 = por %p63, %p64
      %s66 = smul.u32 %s26, 16
      %s67 = ssub.s32 %s66, 1
      %p68 = scmp.gt.s32.totalorder %s67, 0
      %s69 = scalar_select %p68, %s67, 0
      %s70 = smul.u32 %s33, 16
      %s71 = ssub.s32 %s70, 1
      %p72 = scmp.gt.s32.totalorder %s71, 0
      %s73 = scalar_select %p72, %s71, 0
      %s74 = ssub.s32 %s25, %s37
      %s75 = ssub.s32 %s69, %s73
      %s76 = sor.u32 %s74, %s75
      %p77 = scmp.eq.s32.totalorder %s76, 0
      %s79 = sadd.s32 %s78, 1
      %s80 = scalar_select %p77, %s78, %s79
      %p83 = pneg %p77
      %p84 = scmp.eq.s32.totalorder %s18, 1
      %p85 = por %p83, %p84
      %p86 = scmp.ne.s32.totalorder %s78, %s81
      %p87 = scmp.eq.s32.totalorder %s18, 0
      %p88 = por %p86, %p87
      %p89 = scmp.ne.s32.totalorder %s78, %s81
      %p90 = scmp.eq.s32.totalorder %s23, 1
      %p91 = por %p89, %p90
      %p92 = scmp.ne.s32.totalorder %s81, %s82
      %p93 = scmp.eq.s32.totalorder %s23, 0
      %p94 = por %p92, %p93
      %p95 = scmp.ne.s32.totalorder %s81, %s82
      %p96 = scmp.eq.s32.totalorder %s24, 1
      %p97 = por %p95, %p96
      %p99 = scmp.ne.s32.totalorder %s82, %s98
      %p100 = scmp.eq.s32.totalorder %s24, 0
      %p101 = por %p99, %p100
      %s102 = sadd.s32 %s26, 1
      %s103 = smul.u32 %s102, 16
      %p104 = scmp.lt.s32.totalorder %s103, 15
      %s105 = scalar_select %p104, %s103, 15
      %s106 = sadd.s32 %s33, 1
      %s107 = smul.u32 %s106, 16
      %p108 = scmp.lt.s32.totalorder %s107, 15
      %s109 = scalar_select %p108, %s107, 15
      %s110 = ssub.s32 %s25, %s37
      %s111 = ssub.s32 %s105, %s109
      %s112 = sor.u32 %s110, %s111
      %p113 = scmp.eq.s32.totalorder %s112, 0
      %s115 = sadd.s32 %s114, 1
      %s116 = scalar_select %p113, %s114, %s115
      %p119 = pneg %p113
      %p120 = scmp.eq.s32.totalorder %s18, 1
      %p121 = por %p119, %p120
      %p122 = scmp.ne.s32.totalorder %s114, %s117
      %p123 = scmp.eq.s32.totalorder %s18, 0
      %p124 = por %p122, %p123
      %p125 = scmp.ne.s32.totalorder %s114, %s117
      %p126 = scmp.eq.s32.totalorder %s23, 1
      %p127 = por %p125, %p126
      %p128 = scmp.ne.s32.totalorder %s117, %s118
      %p129 = scmp.eq.s32.totalorder %s23, 0
      %p130 = por %p128, %p129
      %p131 = scmp.ne.s32.totalorder %s117, %s118
      %p132 = scmp.eq.s32.totalorder %s24, 1
      %p133 = por %p131, %p132
      %p135 = scmp.ne.s32.totalorder %s118, %s134
      %p136 = scmp.eq.s32.totalorder %s24, 0
      %p137 = por %p135, %p136
      %s139 = sadd.s32 %s138, 1
      %p142 = scmp.eq.s32.totalorder %s18, 1
      %p143 = scmp.ne.s32.totalorder %s138, %s140
      %p144 = scmp.eq.s32.totalorder %s18, 0
      %p145 = por %p143, %p144
      %p146 = scmp.ne.s32.totalorder %s138, %s140
      %p147 = scmp.eq.s32.totalorder %s23, 1
      %p148 = por %p146, %p147
      %p149 = scmp.ne.s32.totalorder %s140, %s141
      %p150 = scmp.eq.s32.totalorder %s23, 0
      %p151 = por %p149, %p150
      %p152 = scmp.ne.s32.totalorder %s140, %s141
      %p153 = scmp.eq.s32.totalorder %s24, 1
      %p154 = por %p152, %p153
      %p156 = scmp.ne.s32.totalorder %s141, %s155
      %p157 = scmp.eq.s32.totalorder %s24, 0
      %p158 = por %p156, %p157
      %s159 = ssub.s32 %s25, %s37
      %s160 = ssub.s32 %s26, %s33
      %s161 = sor.u32 %s159, %s160
      %p162 = scmp.eq.s32.totalorder %s161, 0
      %s164 = sadd.s32 %s163, 1
      %s165 = scalar_select %p162, %s163, %s164
      %p168 = pneg %p162
      %p169 = scmp.eq.s32.totalorder %s18, 1
      %p170 = por %p168, %p169
      %p171 = scmp.ne.s32.totalorder %s163, %s166
      %p172 = scmp.eq.s32.totalorder %s18, 0
      %p173 = por %p171, %p172
      %p174 = scmp.ne.s32.totalorder %s163, %s166
      %p175 = scmp.eq.s32.totalorder %s23, 1
      %p176 = por %p174, %p175
      %p177 = scmp.ne.s32.totalorder %s166, %s167
      %p178 = scmp.eq.s32.totalorder %s23, 0
      %p179 = por %p177, %p178
      %p180 = scmp.ne.s32.totalorder %s166, %s167
      %p181 = scmp.eq.s32.totalorder %s24, 1
      %p182 = por %p180, %p181
      %p184 = scmp.ne.s32.totalorder %s167, %s183
      %p185 = scmp.eq.s32.totalorder %s24, 0
      %p186 = por %p184, %p185
      %s187 = ssub.s32 %s25, %s37
      %s188 = ssub.s32 %s26, %s33
      %s189 = sor.u32 %s187, %s188
      %p190 = scmp.eq.s32.totalorder %s189, 0
      %s192 = sadd.s32 %s191, 1
      %s193 = scalar_select %p190, %s191, %s192
      %p196 = pneg %p190
      %p197 = scmp.eq.s32.totalorder %s18, 1
      %p198 = por %p196, %p197
      %p199 = scmp.ne.s32.totalorder %s191, %s194
      %p200 = scmp.eq.s32.totalorder %s18, 0
      %p201 = por %p199, %p200
      %p202 = scmp.ne.s32.totalorder %s191, %s194
      %p203 = scmp.eq.s32.totalorder %s23, 1
      %p204 = por %p202, %p203
      %p205 = scmp.ne.s32.totalorder %s194, %s195
      %p206 = scmp.eq.s32.totalorder %s23, 0
      %p207 = por %p205, %p206
      %p208 = scmp.ne.s32.totalorder %s194, %s195
      %p209 = scmp.eq.s32.totalorder %s24, 1
      %p210 = por %p208, %p209
      %p212 = scmp.ne.s32.totalorder %s195, %s211
      %p213 = scmp.eq.s32.totalorder %s24, 0
      %p214 = por %p212, %p213
      %p215 = scmp.le.s32.totalorder 1, %s18
      %p216 = scmp.lt.s32.totalorder %s18, 3
      %p217 = pnand %p215, %p216
      %p218 = pneg %p217
      // Predicated region
      $region9: #{tpu_custom_call.1} parent=5 // pred_check
        _
      $region10: #{tpu_custom_call.1} parent=5 // pred_check_branch
        %220 = sbr.rel (%p217) target = $region12
      $region11: #{tpu_custom_call.1} parent=5 // pred_region
        %s221 = ssub.s32 %s18, 1
        // Predicated region
        $region13: #{tpu_custom_call.1} parent=11 // pred_check
          %p222 = pneg %p151
        $region14: #{tpu_custom_call.1} parent=11 // pred_check_branch
          %224 = sbr.rel (%p222) target = $region16
        $region15: #{tpu_custom_call.1} parent=11 // pred_region
          _
        $region16: #{tpu_custom_call.1} parent=11 // pred_fallthru
          _
      $region12: #{tpu_custom_call.1} parent=5 // pred_fallthru
        _
      %p225 = scmp.lt.s32.totalorder %s18, 2
      // Predicated region
      $region17: #{tpu_custom_call.1} parent=5 // pred_check
        %p226 = pneg %p225
      $region18: #{tpu_custom_call.1} parent=5 // pred_check_branch
        %228 = sbr.rel (%p226) target = $region20
      $region19: #{tpu_custom_call.1} parent=5 // pred_region
        // Predicated region
        $region21: #{tpu_custom_call.1} parent=19 // pred_check
          %p229 = pneg %p52
        $region22: #{tpu_custom_call.1} parent=19 // pred_check_branch
          %231 = sbr.rel (%p229) target = $region24
        $region23: #{tpu_custom_call.1} parent=19 // pred_region
          %s232 = smul.u32 16, %s26
          %p233 = scmp.lt.s32.totalorder %s25, 1
          %s234 = scalar_select %p233, %s25, 1
          %p235 = scmp.lt.s32.totalorder %s232, 15
          %s236 = scalar_select %p235, %s232, 15
          %s237 = smul.addr %s236, 2
          %s238 = smul.addr %s234, 32
          %s239 = sadd.s32 %s237, %s238
          %s240 = smul.addr %s239, 8
          %s241 = scalar_lea.vmem %s0, %s240
          %s242 = smul.u32 16, %s26
        $region24: #{tpu_custom_call.1} parent=19 // pred_fallthru
          _
        // Predicated region
        $region25: #{tpu_custom_call.1} parent=19 // pred_check
          %p243 = pneg %p88
        $region26: #{tpu_custom_call.1} parent=19 // pred_check_branch
          %245 = sbr.rel (%p243) target = $region28
        $region27: #{tpu_custom_call.1} parent=19 // pred_region
          %s246 = smul.u32 %s26, 16
          %s247 = ssub.s32 %s246, 1
          %p248 = scmp.gt.s32.totalorder %s247, 0
          %s249 = scalar_select %p248, %s247, 0
          %p250 = scmp.lt.s32.totalorder %s25, 1
          %s251 = scalar_select %p250, %s25, 1
          %p252 = scmp.lt.s32.totalorder %s249, 15
          %s253 = scalar_select %p252, %s249, 15
          %s254 = smul.addr %s253, 2
          %s255 = smul.addr %s251, 32
          %s256 = sadd.s32 %s254, %s255
          %s257 = smul.addr %s256, 8
          %s258 = scalar_lea.vmem %s1, %s257
          %s259 = smul.u32 %s26, 16
          %s260 = ssub.s32 %s259, 1
          %p261 = scmp.gt.s32.totalorder %s260, 0
          %s262 = scalar_select %p261, %s260, 0
        $region28: #{tpu_custom_call.1} parent=19 // pred_fallthru
          _
        // Predicated region
        $region29: #{tpu_custom_call.1} parent=19 // pred_check
          %p263 = pneg %p124
        $region30: #{tpu_custom_call.1} parent=19 // pred_check_branch
          %265 = sbr.rel (%p263) target = $region32
        $region31: #{tpu_custom_call.1} parent=19 // pred_region
          %s266 = sadd.s32 %s26, 1
          %s267 = smul.u32 %s266, 16
          %p268 = scmp.lt.s32.totalorder %s267, 15
          %s269 = scalar_select %p268, %s267, 15
          %p270 = scmp.lt.s32.totalorder %s25, 1
          %s271 = scalar_select %p270, %s25, 1
          %p272 = scmp.lt.s32.totalorder %s269, 15
          %s273 = scalar_select %p272, %s269, 15
          %s274 = smul.addr %s273, 2
          %s275 = smul.addr %s271, 32
          %s276 = sadd.s32 %s274, %s275
          %s277 = smul.addr %s276, 8
          %s278 = scalar_lea.vmem %s2, %s277
          %s279 = sadd.s32 %s26, 1
          %s280 = smul.u32 %s279, 16
          %p281 = scmp.lt.s32.totalorder %s280, 15
          %s282 = scalar_select %p281, %s280, 15
        $region32: #{tpu_custom_call.1} parent=19 // pred_fallthru
          _
      $region20: #{tpu_custom_call.1} parent=5 // pred_fallthru
        _
      %p283 = scmp.le.s32.totalorder 1, %s18
      %p284 = scmp.lt.s32.totalorder %s18, 3
      %p285 = pnand %p283, %p284
      %p286 = pneg %p285
      // Predicated region
      $region33: #{tpu_custom_call.1} parent=5 // pred_check
        _
      $region34: #{tpu_custom_call.1} parent=5 // pred_check_branch
        %288 = sbr.rel (%p285) target = $region36
      $region35: #{tpu_custom_call.1} parent=5 // pred_region
        %s289 = ssub.s32 %s18, 1
        %s290 = smul.u32 16, %s28
        %p291 = scmp.lt.s32.totalorder %s27, 1
        %s292 = scalar_select %p291, %s27, 1
        %p293 = scmp.lt.s32.totalorder %s290, 15
        %s294 = scalar_select %p293, %s290, 15
        %s295 = smul.addr %s294, 2
        %s296 = smul.addr %s292, 32
        %s297 = sadd.s32 %s295, %s296
        %s298 = smul.addr %s297, 8
        %s299 = scalar_lea.vmem %s0, %s298
        %p300 = pneg %p58
        %p301 = pneg %p55
        %s302 = smul.u32 %s28, 16
        %s303 = ssub.s32 %s302, 1
        %p304 = scmp.gt.s32.totalorder %s303, 0
        %s305 = scalar_select %p304, %s303, 0
        %p306 = scmp.lt.s32.totalorder %s27, 1
        %s307 = scalar_select %p306, %s27, 1
        %p308 = scmp.lt.s32.totalorder %s305, 15
        %s309 = scalar_select %p308, %s305, 15
        %s310 = smul.addr %s309, 2
        %s311 = smul.addr %s307, 32
        %s312 = sadd.s32 %s310, %s311
        %s313 = smul.addr %s312, 8
        %s314 = scalar_lea.vmem %s1, %s313
        %p315 = pneg %p94
        %p316 = pneg %p91
        %s317 = sadd.s32 %s28, 1
        %s318 = smul.u32 %s317, 16
        %p319 = scmp.lt.s32.totalorder %s318, 15
        %s320 = scalar_select %p319, %s318, 15
        %p321 = scmp.lt.s32.totalorder %s27, 1
        %s322 = scalar_select %p321, %s27, 1
        %p323 = scmp.lt.s32.totalorder %s320, 15
        %s324 = scalar_select %p323, %s320, 15
        %s325 = smul.addr %s324, 2
        %s326 = smul.addr %s322, 32
        %s327 = sadd.s32 %s325, %s326
        %s328 = smul.addr %s327, 8
        %s329 = scalar_lea.vmem %s2, %s328
        %p330 = pneg %p130
        %p331 = pneg %p127
        %p332 = pneg %p151
        %p333 = pneg %p148
        %p334 = pneg %p179
        %p335 = pneg %p176
        %s336 = sand.u32 %s166, 1
        %s337 = scalar_lea.sflag [#allocation4], %s336
        %s338 = sand.u32 %s166, 1
        %s339 = smul.addr %s338, 256
        %s340 = scalar_lea.vmem [#allocation3], %s339
        %p341 = pneg %p207
        %p342 = pneg %p204
        %s343 = sand.u32 %s194, 1
        %s344 = scalar_lea.sflag [#allocation6], %s343
        %s345 = sand.u32 %s194, 1
        %s346 = smul.addr %s345, 2
        %s347 = scalar_lea.vmem [#allocation5], %s346
        %s348 = smul.u32 16, %s28
        %p349 = scmp.lt.s32.totalorder %s27, 1
        %s350 = scalar_select %p349, %s27, 1
        %p351 = scmp.lt.s32.totalorder %s348, 15
        %s352 = scalar_select %p351, %s348, 15
        %s353 = smul.addr %s352, 2
        %s354 = smul.addr %s350, 32
        %s355 = sadd.s32 %s353, %s354
        %s356 = smul.addr %s355, 8
        %s357 = scalar_lea.vmem %s0, %s356
        %s358 = smul.u32 16, %s28
        %s359 = smul.u32 %s28, 16
        %s360 = ssub.s32 %s359, 1
        %p361 = scmp.gt.s32.totalorder %s360, 0
        %s362 = scalar_select %p361, %s360, 0
        %p363 = scmp.lt.s32.totalorder %s27, 1
        %s364 = scalar_select %p363, %s27, 1
        %p365 = scmp.lt.s32.totalorder %s362, 15
        %s366 = scalar_select %p365, %s362, 15
        %s367 = smul.addr %s366, 2
        %s368 = smul.addr %s364, 32
        %s369 = sadd.s32 %s367, %s368
        %s370 = smul.addr %s369, 8
        %s371 = scalar_lea.vmem %s1, %s370
        %s372 = smul.u32 %s28, 16
        %s373 = ssub.s32 %s372, 1
        %p374 = scmp.gt.s32.totalorder %s373, 0
        %s375 = scalar_select %p374, %s373, 0
        %s376 = sadd.s32 %s28, 1
        %s377 = smul.u32 %s376, 16
        %p378 = scmp.lt.s32.totalorder %s377, 15
        %s379 = scalar_select %p378, %s377, 15
        %p380 = scmp.lt.s32.totalorder %s27, 1
        %s381 = scalar_select %p380, %s27, 1
        %p382 = scmp.lt.s32.totalorder %s379, 15
        %s383 = scalar_select %p382, %s379, 15
        %s384 = smul.addr %s383, 2
        %s385 = smul.addr %s381, 32
        %s386 = sadd.s32 %s384, %s385
        %s387 = smul.addr %s386, 8
        %s388 = scalar_lea.vmem %s2, %s387
        %s389 = sadd.s32 %s28, 1
        %s390 = smul.u32 %s389, 16
        %p391 = scmp.lt.s32.totalorder %s390, 15
        %s392 = scalar_select %p391, %s390, 15
        %s393 = smul.u32 32, %s28
        %vm394 = vcmask 24576
        %395 = vst.msk [vmem:[#allocation2] sm:$0x1] %vm394, 0.0
        %396 = vst.msk [vmem:[#allocation2 + $0x121] sm:$0x1] %vm394, 0.0
        %v397 = vld [vmem:[%s357] sm:$0xff]
        %v398 = vld [vmem:[%s357 + $0x8] sm:$0xff]
        %v399 = vld [vmem:[%s357 + $0x10] sm:$0xff]
        %v400 = vld [vmem:[%s357 + $0x18] sm:$0xff]
        %v401 = vld [vmem:[%s357 + $0x20] sm:$0xff]
        %v402 = vld [vmem:[%s357 + $0x28] sm:$0xff]
        %v403 = vld [vmem:[%s357 + $0x30] sm:$0xff]
        %v404 = vld [vmem:[%s357 + $0x38] sm:$0xff]
        %v405 = vld [vmem:[%s357 + $0x40] sm:$0xff]
        %v406 = vld [vmem:[%s357 + $0x48] sm:$0xff]
        %v407 = vld [vmem:[%s357 + $0x50] sm:$0xff]
        %v408 = vld [vmem:[%s357 + $0x58] sm:$0xff]
        %v409 = vld [vmem:[%s357 + $0x60] sm:$0xff]
        %v410 = vld [vmem:[%s357 + $0x68] sm:$0xff]
        %v411 = vld [vmem:[%s357 + $0x70] sm:$0xff]
        %v412 = vld [vmem:[%s357 + $0x78] sm:$0xff]
        %v413 = vld [vmem:[%s357 + $0x80] sm:$0xff]
        %v414 = vld [vmem:[%s357 + $0x88] sm:$0xff]
        %v415 = vld [vmem:[%s357 + $0x90] sm:$0xff]
        %v416 = vld [vmem:[%s357 + $0x98] sm:$0xff]
        %v417 = vld [vmem:[%s357 + $0xa0] sm:$0xff]
        %v418 = vld [vmem:[%s357 + $0xa8] sm:$0xff]
        %v419 = vld [vmem:[%s357 + $0xb0] sm:$0xff]
        %v420 = vld [vmem:[%s357 + $0xb8] sm:$0xff]
        %v421 = vld [vmem:[%s357 + $0xc0] sm:$0xff]
        %v422 = vld [vmem:[%s357 + $0xc8] sm:$0xff]
        %v423 = vld [vmem:[%s357 + $0xd0] sm:$0xff]
        %v424 = vld [vmem:[%s357 + $0xd8] sm:$0xff]
        %v425 = vld [vmem:[%s357 + $0xe0] sm:$0xff]
        %v426 = vld [vmem:[%s357 + $0xe8] sm:$0xff]
        %v427 = vld [vmem:[%s357 + $0xf0] sm:$0xff]
        %v428 = vld [vmem:[%s357 + $0xf8] sm:$0xff]
        %vm429 = vcmask 31744
        %430 = vst.msk [vmem:[#allocation2 + $0x11] sm:$0xff] %vm429, %v397
        %431 = vst.msk [vmem:[#allocation2 + $0x19] sm:$0xff] %vm429, %v398
        %432 = vst.msk [vmem:[#allocation2 + $0x21] sm:$0xff] %vm429, %v399
        %433 = vst.msk [vmem:[#allocation2 + $0x29] sm:$0xff] %vm429, %v400
        %434 = vst.msk [vmem:[#allocation2 + $0x31] sm:$0xff] %vm429, %v401
        %435 = vst.msk [vmem:[#allocation2 + $0x39] sm:$0xff] %vm429, %v402
        %436 = vst.msk [vmem:[#allocation2 + $0x41] sm:$0xff] %vm429, %v403
        %437 = vst.msk [vmem:[#allocation2 + $0x49] sm:$0xff] %vm429, %v404
        %438 = vst.msk [vmem:[#allocation2 + $0x51] sm:$0xff] %vm429, %v405
        %439 = vst.msk [vmem:[#allocation2 + $0x59] sm:$0xff] %vm429, %v406
        %440 = vst.msk [vmem:[#allocation2 + $0x61] sm:$0xff] %vm429, %v407
        %441 = vst.msk [vmem:[#allocation2 + $0x69] sm:$0xff] %vm429, %v408
        %442 = vst.msk [vmem:[#allocation2 + $0x71] sm:$0xff] %vm429, %v409
        %443 = vst.msk [vmem:[#allocation2 + $0x79] sm:$0xff] %vm429, %v410
        %444 = vst.msk [vmem:[#allocation2 + $0x81] sm:$0xff] %vm429, %v411
        %445 = vst.msk [vmem:[#allocation2 + $0x89] sm:$0xff] %vm429, %v412
        %446 = vst.msk [vmem:[#allocation2 + $0x91] sm:$0xff] %vm429, %v413
        %447 = vst.msk [vmem:[#allocation2 + $0x99] sm:$0xff] %vm429, %v414
        %448 = vst.msk [vmem:[#allocation2 + $0xa1] sm:$0xff] %vm429, %v415
        %449 = vst.msk [vmem:[#allocation2 + $0xa9] sm:$0xff] %vm429, %v416
        %450 = vst.msk [vmem:[#allocation2 + $0xb1] sm:$0xff] %vm429, %v417
        %451 = vst.msk [vmem:[#allocation2 + $0xb9] sm:$0xff] %vm429, %v418
        %452 = vst.msk [vmem:[#allocation2 + $0xc1] sm:$0xff] %vm429, %v419
        %453 = vst.msk [vmem:[#allocation2 + $0xc9] sm:$0xff] %vm429, %v420
        %454 = vst.msk [vmem:[#allocation2 + $0xd1] sm:$0xff] %vm429, %v421
        %455 = vst.msk [vmem:[#allocation2 + $0xd9] sm:$0xff] %vm429, %v422
        %456 = vst.msk [vmem:[#allocation2 + $0xe1] sm:$0xff] %vm429, %v423
        %457 = vst.msk [vmem:[#allocation2 + $0xe9] sm:$0xff] %vm429, %v424
        %458 = vst.msk [vmem:[#allocation2 + $0xf1] sm:$0xff] %vm429, %v425
        %459 = vst.msk [vmem:[#allocation2 + $0xf9] sm:$0xff] %vm429, %v426
        %460 = vst.msk [vmem:[#allocation2 + $0x101] sm:$0xff] %vm429, %v427
        %461 = vst.msk [vmem:[#allocation2 + $0x109] sm:$0xff] %vm429, %v428
        %p462 = scmp.eq.s32.totalorder %s28, 0
        // Predicated region
        $region37: #{tpu_custom_call.1} parent=35 // pred_check
          %p463 = pneg %p462
        $region38: #{tpu_custom_call.1} parent=35 // pred_check_branch
          %465 = sbr.rel (%p463) target = $region40
        $region39: #{tpu_custom_call.1} parent=35 // pred_region
          %466 = vst.msk [vmem:[#allocation2 + $0x1] sm:$0xff] %vm429, 0.0
          %467 = vst.msk [vmem:[#allocation2 + $0x9] sm:$0xff] %vm429, 0.0
        $region40: #{tpu_custom_call.1} parent=35 // pred_fallthru
          _
        %p468 = scmp.gt.s32.totalorder %s28, 0
        // Predicated region
        $region41: #{tpu_custom_call.1} parent=35 // pred_check
          %p469 = pneg %p468
        $region42: #{tpu_custom_call.1} parent=35 // pred_check_branch
          %471 = sbr.rel (%p469) target = $region44
        $region43: #{tpu_custom_call.1} parent=35 // pred_region
          %v472 = vld [vmem:[%s371] sm:$0xff]
          %v473 = vld [vmem:[%s371 + $0x8] sm:$0xff]
          %474 = vst.msk [vmem:[#allocation2 + $0x1] sm:$0xff] %vm429, %v472
          %475 = vst.msk [vmem:[#allocation2 + $0x9] sm:$0xff] %vm429, %v473
        $region44: #{tpu_custom_call.1} parent=35 // pred_fallthru
          _
        // Predicated region
        $region45: #{tpu_custom_call.1} parent=35 // pred_check
          %p476 = pneg %p462
        $region46: #{tpu_custom_call.1} parent=35 // pred_check_branch
          %478 = sbr.rel (%p476) target = $region48
        $region47: #{tpu_custom_call.1} parent=35 // pred_region
          %479 = vst.msk [vmem:[#allocation2 + $0x111] sm:$0xff] %vm429, 0.0
          %480 = vst.msk [vmem:[#allocation2 + $0x119] sm:$0xff] %vm429, 0.0
        $region48: #{tpu_custom_call.1} parent=35 // pred_fallthru
          _
        %p481 = scmp.lt.s32.totalorder %s28, 0
        // Predicated region
        $region49: #{tpu_custom_call.1} parent=35 // pred_check
          %p482 = pneg %p481
        $region50: #{tpu_custom_call.1} parent=35 // pred_check_branch
          %484 = sbr.rel (%p482) target = $region52
        $region51: #{tpu_custom_call.1} parent=35 // pred_region
          %v485 = vld [vmem:[%s388] sm:$0xff]
          %v486 = vld [vmem:[%s388 + $0x8] sm:$0xff]
          %487 = vst.msk [vmem:[#allocation2 + $0x111] sm:$0xff] %vm429, %v485
          %488 = vst.msk [vmem:[#allocation2 + $0x119] sm:$0xff] %vm429, %v486
        $region52: #{tpu_custom_call.1} parent=35 // pred_fallthru
          _
        %v489 = vlaneseq
        %v490 = vshrl.u32 %v489, 7
        %v491 = vadd.s32 %v490, 8
        %v492 = vadd.s32 %v490, 16
        %v493 = vadd.s32 %v490, 24
        %v494 = vadd.s32 %v490, 32
        %v495 = vadd.s32 %v490, 40
        %v496 = vadd.s32 %v490, 48
        %v497 = vadd.s32 %v490, 56
        %v498 = vadd.s32 %v490, 64
        %v499 = vadd.s32 %v490, 72
        %v500 = vadd.s32 %v490, 80
        %v501 = vadd.s32 %v490, 88
        %v502 = vadd.s32 %v490, 96
        %v503 = vadd.s32 %v490, 104
        %v504 = vadd.s32 %v490, 112
        %v505 = vadd.s32 %v490, 120
        %v506 = vadd.s32 %v490, 128
        %v507 = vadd.s32 %v490, 136
        %v508 = vadd.s32 %v490, 144
        %v509 = vadd.s32 %v490, 152
        %v510 = vadd.s32 %v490, 160
        %v511 = vadd.s32 %v490, 168
        %v512 = vadd.s32 %v490, 176
        %v513 = vadd.s32 %v490, 184
        %v514 = vadd.s32 %v490, 192
        %v515 = vadd.s32 %v490, 200
        %v516 = vadd.s32 %v490, 208
        %v517 = vadd.s32 %v490, 216
        %v518 = vadd.s32 %v490, 224
        %v519 = vadd.s32 %v490, 232
        %v520 = vadd.s32 %v490, 240
        %v521 = vadd.s32 %v490, 248
        %vm522 = vcmp.lt.s32.totalorder %v490, 0
        %v523 = vsub.s32 0, %v490
        %v524 = vsel %vm522, %v523, %v490
        %v525 = vshrl.u32 %v524, 4
        %v526 = vand.u32 %v524, 15
        %v527 = vsub.s32 0, %v526
        %v528 = vsel %vm522, %v527, %v526
        %vm529 = vcmp.lt.s32.totalorder %v491, 0
        %v530 = vsub.s32 0, %v491
        %v531 = vsel %vm529, %v530, %v491
        %v532 = vshrl.u32 %v531, 4
        %v533 = vand.u32 %v531, 15
        %v534 = vsub.s32 0, %v533
        %v535 = vsel %vm529, %v534, %v533
        %vm536 = vcmp.lt.s32.totalorder %v492, 0
        %v537 = vsub.s32 0, %v492
        %v538 = vsel %vm536, %v537, %v492
        %v539 = vshrl.u32 %v538, 4
        %v540 = vand.u32 %v538, 15
        %v541 = vsub.s32 0, %v540
        %v542 = vsel %vm536, %v541, %v540
        %vm543 = vcmp.lt.s32.totalorder %v493, 0
        %v544 = vsub.s32 0, %v493
        %v545 = vsel %vm543, %v544, %v493
        %v546 = vshrl.u32 %v545, 4
        %v547 = vand.u32 %v545, 15
        %v548 = vsub.s32 0, %v547
        %v549 = vsel %vm543, %v548, %v547
        %vm550 = vcmp.lt.s32.totalorder %v494, 0
        %v551 = vsub.s32 0, %v494
        %v552 = vsel %vm550, %v551, %v494
        %v553 = vshrl.u32 %v552, 4
        %v554 = vand.u32 %v552, 15
        %v555 = vsub.s32 0, %v554
        %v556 = vsel %vm550, %v555, %v554
        %vm557 = vcmp.lt.s32.totalorder %v495, 0
        %v558 = vsub.s32 0, %v495
        %v559 = vsel %vm557, %v558, %v495
        %v560 = vshrl.u32 %v559, 4
        %v561 = vand.u32 %v559, 15
        %v562 = vsub.s32 0, %v561
        %v563 = vsel %vm557, %v562, %v561
        %vm564 = vcmp.lt.s32.totalorder %v496, 0
        %v565 = vsub.s32 0, %v496
        %v566 = vsel %vm564, %v565, %v496
        %v567 = vshrl.u32 %v566, 4
        %v568 = vand.u32 %v566, 15
        %v569 = vsub.s32 0, %v568
        %v570 = vsel %vm564, %v569, %v568
        %vm571 = vcmp.lt.s32.totalorder %v497, 0
        %v572 = vsub.s32 0, %v497
        %v573 = vsel %vm571, %v572, %v497
        %v574 = vshrl.u32 %v573, 4
        %v575 = vand.u32 %v573, 15
        %v576 = vsub.s32 0, %v575
        %v577 = vsel %vm571, %v576, %v575
        %vm578 = vcmp.lt.s32.totalorder %v498, 0
        %v579 = vsub.s32 0, %v498
        %v580 = vsel %vm578, %v579, %v498
        %v581 = vshrl.u32 %v580, 4
        %v582 = vand.u32 %v580, 15
        %v583 = vsub.s32 0, %v582
        %v584 = vsel %vm578, %v583, %v582
        %vm585 = vcmp.lt.s32.totalorder %v499, 0
        %v586 = vsub.s32 0, %v499
        %v587 = vsel %vm585, %v586, %v499
        %v588 = vshrl.u32 %v587, 4
        %v589 = vand.u32 %v587, 15
        %v590 = vsub.s32 0, %v589
        %v591 = vsel %vm585, %v590, %v589
        %vm592 = vcmp.lt.s32.totalorder %v500, 0
        %v593 = vsub.s32 0, %v500
        %v594 = vsel %vm592, %v593, %v500
        %v595 = vshrl.u32 %v594, 4
        %v596 = vand.u32 %v594, 15
        %v597 = vsub.s32 0, %v596
        %v598 = vsel %vm592, %v597, %v596
        %vm599 = vcmp.lt.s32.totalorder %v501, 0
        %v600 = vsub.s32 0, %v501
        %v601 = vsel %vm599, %v600, %v501
        %v602 = vshrl.u32 %v601, 4
        %v603 = vand.u32 %v601, 15
        %v604 = vsub.s32 0, %v603
        %v605 = vsel %vm599, %v604, %v603
        %vm606 = vcmp.lt.s32.totalorder %v502, 0
        %v607 = vsub.s32 0, %v502
        %v608 = vsel %vm606, %v607, %v502
        %v609 = vshrl.u32 %v608, 4
        %v610 = vand.u32 %v608, 15
        %v611 = vsub.s32 0, %v610
        %v612 = vsel %vm606, %v611, %v610
        %vm613 = vcmp.lt.s32.totalorder %v503, 0
        %v614 = vsub.s32 0, %v503
        %v615 = vsel %vm613, %v614, %v503
        %v616 = vshrl.u32 %v615, 4
        %v617 = vand.u32 %v615, 15
        %v618 = vsub.s32 0, %v617
        %v619 = vsel %vm613, %v618, %v617
        %vm620 = vcmp.lt.s32.totalorder %v504, 0
        %v621 = vsub.s32 0, %v504
        %v622 = vsel %vm620, %v621, %v504
        %v623 = vshrl.u32 %v622, 4
        %v624 = vand.u32 %v622, 15
        %v625 = vsub.s32 0, %v624
        %v626 = vsel %vm620, %v625, %v624
        %vm627 = vcmp.lt.s32.totalorder %v505, 0
        %v628 = vsub.s32 0, %v505
        %v629 = vsel %vm627, %v628, %v505
        %v630 = vshrl.u32 %v629, 4
        %v631 = vand.u32 %v629, 15
        %v632 = vsub.s32 0, %v631
        %v633 = vsel %vm627, %v632, %v631
        %vm634 = vcmp.lt.s32.totalorder %v506, 0
        %v635 = vsub.s32 0, %v506
        %v636 = vsel %vm634, %v635, %v506
        %v637 = vshrl.u32 %v636, 4
        %v638 = vand.u32 %v636, 15
        %v639 = vsub.s32 0, %v638
        %v640 = vsel %vm634, %v639, %v638
        %vm641 = vcmp.lt.s32.totalorder %v507, 0
        %v642 = vsub.s32 0, %v507
        %v643 = vsel %vm641, %v642, %v507
        %v644 = vshrl.u32 %v643, 4
        %v645 = vand.u32 %v643, 15
        %v646 = vsub.s32 0, %v645
        %v647 = vsel %vm641, %v646, %v645
        %vm648 = vcmp.lt.s32.totalorder %v508, 0
        %v649 = vsub.s32 0, %v508
        %v650 = vsel %vm648, %v649, %v508
        %v651 = vshrl.u32 %v650, 4
        %v652 = vand.u32 %v650, 15
        %v653 = vsub.s32 0, %v652
        %v654 = vsel %vm648, %v653, %v652
        %vm655 = vcmp.lt.s32.totalorder %v509, 0
        %v656 = vsub.s32 0, %v509
        %v657 = vsel %vm655, %v656, %v509
        %v658 = vshrl.u32 %v657, 4
        %v659 = vand.u32 %v657, 15
        %v660 = vsub.s32 0, %v659
        %v661 = vsel %vm655, %v660, %v659
        %vm662 = vcmp.lt.s32.totalorder %v510, 0
        %v663 = vsub.s32 0, %v510
        %v664 = vsel %vm662, %v663, %v510
        %v665 = vshrl.u32 %v664, 4
        %v666 = vand.u32 %v664, 15
        %v667 = vsub.s32 0, %v666
        %v668 = vsel %vm662, %v667, %v666
        %vm669 = vcmp.lt.s32.totalorder %v511, 0
        %v670 = vsub.s32 0, %v511
        %v671 = vsel %vm669, %v670, %v511
        %v672 = vshrl.u32 %v671, 4
        %v673 = vand.u32 %v671, 15
        %v674 = vsub.s32 0, %v673
        %v675 = vsel %vm669, %v674, %v673
        %vm676 = vcmp.lt.s32.totalorder %v512, 0
        %v677 = vsub.s32 0, %v512
        %v678 = vsel %vm676, %v677, %v512
        %v679 = vshrl.u32 %v678, 4
        %v680 = vand.u32 %v678, 15
        %v681 = vsub.s32 0, %v680
        %v682 = vsel %vm676, %v681, %v680
        %vm683 = vcmp.lt.s32.totalorder %v513, 0
        %v684 = vsub.s32 0, %v513
        %v685 = vsel %vm683, %v684, %v513
        %v686 = vshrl.u32 %v685, 4
        %v687 = vand.u32 %v685, 15
        %v688 = vsub.s32 0, %v687
        %v689 = vsel %vm683, %v688, %v687
        %vm690 = vcmp.lt.s32.totalorder %v514, 0
        %v691 = vsub.s32 0, %v514
        %v692 = vsel %vm690, %v691, %v514
        %v693 = vshrl.u32 %v692, 4
        %v694 = vand.u32 %v692, 15
        %v695 = vsub.s32 0, %v694
        %v696 = vsel %vm690, %v695, %v694
        %vm697 = vcmp.lt.s32.totalorder %v515, 0
        %v698 = vsub.s32 0, %v515
        %v699 = vsel %vm697, %v698, %v515
        %v700 = vshrl.u32 %v699, 4
        %v701 = vand.u32 %v699, 15
        %v702 = vsub.s32 0, %v701
        %v703 = vsel %vm697, %v702, %v701
        %vm704 = vcmp.lt.s32.totalorder %v516, 0
        %v705 = vsub.s32 0, %v516
        %v706 = vsel %vm704, %v705, %v516
        %v707 = vshrl.u32 %v706, 4
        %v708 = vand.u32 %v706, 15
        %v709 = vsub.s32 0, %v708
        %v710 = vsel %vm704, %v709, %v708
        %vm711 = vcmp.lt.s32.totalorder %v517, 0
        %v712 = vsub.s32 0, %v517
        %v713 = vsel %vm711, %v712, %v517
        %v714 = vshrl.u32 %v713, 4
        %v715 = vand.u32 %v713, 15
        %v716 = vsub.s32 0, %v715
        %v717 = vsel %vm711, %v716, %v715
        %vm718 = vcmp.lt.s32.totalorder %v518, 0
        %v719 = vsub.s32 0, %v518
        %v720 = vsel %vm718, %v719, %v518
        %v721 = vshrl.u32 %v720, 4
        %v722 = vand.u32 %v720, 15
        %v723 = vsub.s32 0, %v722
        %v724 = vsel %vm718, %v723, %v722
        %vm725 = vcmp.lt.s32.totalorder %v519, 0
        %v726 = vsub.s32 0, %v519
        %v727 = vsel %vm725, %v726, %v519
        %v728 = vshrl.u32 %v727, 4
        %v729 = vand.u32 %v727, 15
        %v730 = vsub.s32 0, %v729
        %v731 = vsel %vm725, %v730, %v729
        %vm732 = vcmp.lt.s32.totalorder %v520, 0
        %v733 = vsub.s32 0, %v520
        %v734 = vsel %vm732, %v733, %v520
        %v735 = vshrl.u32 %v734, 4
        %v736 = vand.u32 %v734, 15
        %v737 = vsub.s32 0, %v736
        %v738 = vsel %vm732, %v737, %v736
        %vm739 = vcmp.lt.s32.totalorder %v521, 0
        %v740 = vsub.s32 0, %v521
        %v741 = vsel %vm739, %v740, %v521
        %v742 = vshrl.u32 %v741, 4
        %v743 = vand.u32 %v741, 15
        %v744 = vsub.s32 0, %v743
        %v745 = vsel %vm739, %v744, %v743
        %vm746 = vcmp.ne.s32.totalorder %v528, 0
        %vm747 = vcmp.ne.s32.totalorder %v535, 0
        %vm748 = vcmp.ne.s32.totalorder %v542, 0
        %vm749 = vcmp.ne.s32.totalorder %v549, 0
        %vm750 = vcmp.ne.s32.totalorder %v556, 0
        %vm751 = vcmp.ne.s32.totalorder %v563, 0
        %vm752 = vcmp.ne.s32.totalorder %v570, 0
        %vm753 = vcmp.ne.s32.totalorder %v577, 0
        %vm754 = vcmp.ne.s32.totalorder %v584, 0
        %vm755 = vcmp.ne.s32.totalorder %v591, 0
        %vm756 = vcmp.ne.s32.totalorder %v598, 0
        %vm757 = vcmp.ne.s32.totalorder %v605, 0
        %vm758 = vcmp.ne.s32.totalorder %v612, 0
        %vm759 = vcmp.ne.s32.totalorder %v619, 0
        %vm760 = vcmp.ne.s32.totalorder %v626, 0
        %vm761 = vcmp.ne.s32.totalorder %v633, 0
        %vm762 = vcmp.ne.s32.totalorder %v640, 0
        %vm763 = vcmp.ne.s32.totalorder %v647, 0
        %vm764 = vcmp.ne.s32.totalorder %v654, 0
        %vm765 = vcmp.ne.s32.totalorder %v661, 0
        %vm766 = vcmp.ne.s32.totalorder %v668, 0
        %vm767 = vcmp.ne.s32.totalorder %v675, 0
        %vm768 = vcmp.ne.s32.totalorder %v682, 0
        %vm769 = vcmp.ne.s32.totalorder %v689, 0
        %vm770 = vcmp.ne.s32.totalorder %v696, 0
        %vm771 = vcmp.ne.s32.totalorder %v703, 0
        %vm772 = vcmp.ne.s32.totalorder %v710, 0
        %vm773 = vcmp.ne.s32.totalorder %v717, 0
        %vm774 = vcmp.ne.s32.totalorder %v724, 0
        %vm775 = vcmp.ne.s32.totalorder %v731, 0
        %vm776 = vcmp.ne.s32.totalorder %v738, 0
        %vm777 = vcmp.ne.s32.totalorder %v745, 0
        %vm778 = vcmp.lt.s32.totalorder %v528, 0
        %vm779 = vcmp.lt.s32.totalorder %v535, 0
        %vm780 = vcmp.lt.s32.totalorder %v542, 0
        %vm781 = vcmp.lt.s32.totalorder %v549, 0
        %vm782 = vcmp.lt.s32.totalorder %v556, 0
        %vm783 = vcmp.lt.s32.totalorder %v563, 0
        %vm784 = vcmp.lt.s32.totalorder %v570, 0
        %vm785 = vcmp.lt.s32.totalorder %v577, 0
        %vm786 = vcmp.lt.s32.totalorder %v584, 0
        %vm787 = vcmp.lt.s32.totalorder %v591, 0
        %vm788 = vcmp.lt.s32.totalorder %v598, 0
        %vm789 = vcmp.lt.s32.totalorder %v605, 0
        %vm790 = vcmp.lt.s32.totalorder %v612, 0
        %vm791 = vcmp.lt.s32.totalorder %v619, 0
        %vm792 = vcmp.lt.s32.totalorder %v626, 0
        %vm793 = vcmp.lt.s32.totalorder %v633, 0
        %vm794 = vcmp.lt.s32.totalorder %v640, 0
        %vm795 = vcmp.lt.s32.totalorder %v647, 0
        %vm796 = vcmp.lt.s32.totalorder %v654, 0
        %vm797 = vcmp.lt.s32.totalorder %v661, 0
        %vm798 = vcmp.lt.s32.totalorder %v668, 0
        %vm799 = vcmp.lt.s32.totalorder %v675, 0
        %vm800 = vcmp.lt.s32.totalorder %v682, 0
        %vm801 = vcmp.lt.s32.totalorder %v689, 0
        %vm802 = vcmp.lt.s32.totalorder %v696, 0
        %vm803 = vcmp.lt.s32.totalorder %v703, 0
        %vm804 = vcmp.lt.s32.totalorder %v710, 0
        %vm805 = vcmp.lt.s32.totalorder %v717, 0
        %vm806 = vcmp.lt.s32.totalorder %v724, 0
        %vm807 = vcmp.lt.s32.totalorder %v731, 0
        %vm808 = vcmp.lt.s32.totalorder %v738, 0
        %vm809 = vcmp.lt.s32.totalorder %v745, 0
        %vm810 = vmand %vm778, %vm746
        %vm811 = vmand %vm779, %vm747
        %vm812 = vmand %vm780, %vm748
        %vm813 = vmand %vm781, %vm749
        %vm814 = vmand %vm782, %vm750
        %vm815 = vmand %vm783, %vm751
        %vm816 = vmand %vm784, %vm752
        %vm817 = vmand %vm785, %vm753
        %vm818 = vmand %vm786, %vm754
        %vm819 = vmand %vm787, %vm755
        %vm820 = vmand %vm788, %vm756
        %vm821 = vmand %vm789, %vm757
        %vm822 = vmand %vm790, %vm758
        %vm823 = vmand %vm791, %vm759
        %vm824 = vmand %vm792, %vm760
        %vm825 = vmand %vm793, %vm761
        %vm826 = vmand %vm794, %vm762
        %vm827 = vmand %vm795, %vm763
        %vm828 = vmand %vm796, %vm764
        %vm829 = vmand %vm797, %vm765
        %vm830 = vmand %vm798, %vm766
        %vm831 = vmand %vm799, %vm767
        %vm832 = vmand %vm800, %vm768
        %vm833 = vmand %vm801, %vm769
        %vm834 = vmand %vm802, %vm770
        %vm835 = vmand %vm803, %vm771
        %vm836 = vmand %vm804, %vm772
        %vm837 = vmand %vm805, %vm773
        %vm838 = vmand %vm806, %vm774
        %vm839 = vmand %vm807, %vm775
        %vm840 = vmand %vm808, %vm776
        %vm841 = vmand %vm809, %vm777
        %v842 = vadd.s32 %v528, 16
        %v843 = vadd.s32 %v535, 16
        %v844 = vadd.s32 %v542, 16
        %v845 = vadd.s32 %v549, 16
        %v846 = vadd.s32 %v556, 16
        %v847 = vadd.s32 %v563, 16
        %v848 = vadd.s32 %v570, 16
        %v849 = vadd.s32 %v577, 16
        %v850 = vadd.s32 %v584, 16
        %v851 = vadd.s32 %v591, 16
        %v852 = vadd.s32 %v598, 16
        %v853 = vadd.s32 %v605, 16
        %v854 = vadd.s32 %v612, 16
        %v855 = vadd.s32 %v619, 16
        %v856 = vadd.s32 %v626, 16
        %v857 = vadd.s32 %v633, 16
        %v858 = vadd.s32 %v640, 16
        %v859 = vadd.s32 %v647, 16
        %v860 = vadd.s32 %v654, 16
        %v861 = vadd.s32 %v661, 16
        %v862 = vadd.s32 %v668, 16
        %v863 = vadd.s32 %v675, 16
        %v864 = vadd.s32 %v682, 16
        %v865 = vadd.s32 %v689, 16
        %v866 = vadd.s32 %v696, 16
        %v867 = vadd.s32 %v703, 16
        %v868 = vadd.s32 %v710, 16
        %v869 = vadd.s32 %v717, 16
        %v870 = vadd.s32 %v724, 16
        %v871 = vadd.s32 %v731, 16
        %v872 = vadd.s32 %v738, 16
        %v873 = vadd.s32 %v745, 16
        %v874 = vsel %vm810, %v842, %v528
        %v875 = vsel %vm811, %v843, %v535
        %v876 = vsel %vm812, %v844, %v542
        %v877 = vsel %vm813, %v845, %v549
        %v878 = vsel %vm814, %v846, %v556
        %v879 = vsel %vm815, %v847, %v563
        %v880 = vsel %vm816, %v848, %v570
        %v881 = vsel %vm817, %v849, %v577
        %v882 = vsel %vm818, %v850, %v584
        %v883 = vsel %vm819, %v851, %v591
        %v884 = vsel %vm820, %v852, %v598
        %v885 = vsel %vm821, %v853, %v605
        %v886 = vsel %vm822, %v854, %v612
        %v887 = vsel %vm823, %v855, %v619
        %v888 = vsel %vm824, %v856, %v626
        %v889 = vsel %vm825, %v857, %v633
        %v890 = vsel %vm826, %v858, %v640
        %v891 = vsel %vm827, %v859, %v647
        %v892 = vsel %vm828, %v860, %v654
        %v893 = vsel %vm829, %v861, %v661
        %v894 = vsel %vm830, %v862, %v668
        %v895 = vsel %vm831, %v863, %v675
        %v896 = vsel %vm832, %v864, %v682
        %v897 = vsel %vm833, %v865, %v689
        %v898 = vsel %vm834, %v866, %v696
        %v899 = vsel %vm835, %v867, %v703
        %v900 = vsel %vm836, %v868, %v710
        %v901 = vsel %vm837, %v869, %v717
        %v902 = vsel %vm838, %v870, %v724
        %v903 = vsel %vm839, %v871, %v731
        %v904 = vsel %vm840, %v872, %v738
        %v905 = vsel %vm841, %v873, %v745
        %v906 = vld [vmem:[#allocation2] sm:$0xff]
        %v907 = vld [vmem:[#allocation2 + $0x8] sm:$0xff]
        %v908 = vld [vmem:[#allocation2 + $0x10] sm:$0xff]
        %v909 = vld [vmem:[#allocation2 + $0x18] sm:$0xff]
        %v910 = vld [vmem:[#allocation2 + $0x20] sm:$0xff]
        %v911 = vld [vmem:[#allocation2 + $0x28] sm:$0xff]
        %v912 = vld [vmem:[#allocation2 + $0x30] sm:$0xff]
        %v913 = vld [vmem:[#allocation2 + $0x38] sm:$0xff]
        %v914 = vld [vmem:[#allocation2 + $0x40] sm:$0xff]
        %v915 = vld [vmem:[#allocation2 + $0x48] sm:$0xff]
        %v916 = vld [vmem:[#allocation2 + $0x50] sm:$0xff]
        %v917 = vld [vmem:[#allocation2 + $0x58] sm:$0xff]
        %v918 = vld [vmem:[#allocation2 + $0x60] sm:$0xff]
        %v919 = vld [vmem:[#allocation2 + $0x68] sm:$0xff]
        %v920 = vld [vmem:[#allocation2 + $0x70] sm:$0xff]
        %v921 = vld [vmem:[#allocation2 + $0x78] sm:$0xff]
        %v922 = vld [vmem:[#allocation2 + $0x80] sm:$0xff]
        %v923 = vld [vmem:[#allocation2 + $0x88] sm:$0xff]
        %v924 = vld [vmem:[#allocation2 + $0x90] sm:$0xff]
        %v925 = vld [vmem:[#allocation2 + $0x98] sm:$0xff]
        %v926 = vld [vmem:[#allocation2 + $0xa0] sm:$0xff]
        %v927 = vld [vmem:[#allocation2 + $0xa8] sm:$0xff]
        %v928 = vld [vmem:[#allocation2 + $0xb0] sm:$0xff]
        %v929 = vld [vmem:[#allocation2 + $0xb8] sm:$0xff]
        %v930 = vld [vmem:[#allocation2 + $0xc0] sm:$0xff]
        %v931 = vld [vmem:[#allocation2 + $0xc8] sm:$0xff]
        %v932 = vld [vmem:[#allocation2 + $0xd0] sm:$0xff]
        %v933 = vld [vmem:[#allocation2 + $0xd8] sm:$0xff]
        %v934 = vld [vmem:[#allocation2 + $0xe0] sm:$0xff]
        %v935 = vld [vmem:[#allocation2 + $0xe8] sm:$0xff]
        %v936 = vld [vmem:[#allocation2 + $0xf0] sm:$0xff]
        %v937 = vld [vmem:[#allocation2 + $0xf8] sm:$0xff]
        %v938 = vld [vmem:[%s3] sm:$0xf]
        %v939 = vld [vmem:[#allocation2 + $0x100] sm:$0xff]
        %v940 = vld [vmem:[#allocation2 + $0x108] sm:$0xff]
        %s941 = scalar_lea.vmem %s3, 12
        %v942 = vld [vmem:[%s941] sm:$0xf]
        %v944 = vsel %vm429, %v908, 0
        %v947 = vsel %vm429, %v909, 0
        %v950 = vsel %vm429, %v910, 0
        %v953 = vsel %vm429, %v911, 0
        %v956 = vsel %vm429, %v912, 0
        %v959 = vsel %vm429, %v913, 0
        %v962 = vsel %vm429, %v914, 0
        %v965 = vsel %vm429, %v915, 0
        %v968 = vsel %vm429, %v916, 0
        %v971 = vsel %vm429, %v917, 0
        %v974 = vsel %vm429, %v918, 0
        %v977 = vsel %vm429, %v919, 0
        %v980 = vsel %vm429, %v920, 0
        %v983 = vsel %vm429, %v921, 0
        %v986 = vsel %vm429, %v922, 0
        %v989 = vsel %vm429, %v923, 0
        %v992 = vsel %vm429, %v924, 0
        %v995 = vsel %vm429, %v925, 0
        %v998 = vsel %vm429, %v926, 0
        %v1001 = vsel %vm429, %v927, 0
        %v1004 = vsel %vm429, %v928, 0
        %v1007 = vsel %vm429, %v929, 0
        %v1010 = vsel %vm429, %v930, 0
        %v1013 = vsel %vm429, %v931, 0
        %v1016 = vsel %vm429, %v932, 0
        %v1019 = vsel %vm429, %v933, 0
        %v1022 = vsel %vm429, %v934, 0
        %v1025 = vsel %vm429, %v935, 0
        %v1028 = vsel %vm429, %v936, 0
        %v1031 = vsel %vm429, %v937, 0
        %v1034 = vsel %vm429, %v939, 0
        %v1037 = vsel %vm429, %v940, 0
        %vm1039 = vcmask 1043456
        %v1041 = vsel %vm1039, %v942, 0
        %1043 = vmatprep.subr.mxu0 0.0
        %1044 = vmatpush1.msra.mxu0 0.0
        %1045 = vmatprep.subr.mxu0 0.0
        %1046 = vmatpush1.msra.mxu0 0.0
        %1047 = vmatprep.subr.mxu0 0.0
        %1048 = vmatpush1.msra.mxu0 0.0
        %1049 = vmatprep.subr.mxu0 0.0
        %1050 = vmatpush1.msra.mxu0 0.0
        %1051 = vmatprep.subr.mxu0 0.0
        %1052 = vmatpush1.msra.mxu0 0.0
        %1053 = vmatprep.subr.mxu0 0.0
        %1054 = vmatpush1.msra.mxu0 0.0
        %1055 = vmatprep.subr.mxu0 0.0
        %1056 = vmatpush1.msra.mxu0 0.0
        %1057 = vmatprep.subr.mxu0 0.0
        %1058 = vmatpush1.msra.mxu0 0.0
        %1059 = vmatprep.subr.mxu0 0.0
        %1060 = vmatpush1.msra.mxu0 0.0
        %1061 = vmatprep.subr.mxu0 0.0
        %1062 = vmatpush1.msra.mxu0 0.0
        %1063 = vmatprep.subr.mxu0 0.0
        %1064 = vmatpush1.msra.mxu0 0.0
        %1065 = vmatprep.subr.mxu0 0.0
        %1066 = vmatpush1.msra.mxu0 0.0
        %1067 = vmatprep.subr.mxu0 0.0
        %1068 = vmatpush1.msra.mxu0 0.0
        %1069 = vmatprep.subr.mxu0 0.0
        %1070 = vmatpush1.msra.mxu0 0.0
        %1071 = vmatprep.subr.mxu0 0.0
        %1072 = vmatpush1.msra.mxu0 0.0
        %1073 = vmatprep.subr.mxu0 0.0
        %1074 = vmatpush1.msra.mxu0 %v1041
        %1075 = vmatprep.subr.mxu0 0.0
        %1076 = vmatpush2.msra.mxu0 0.0
        %1077 = vmatprep.subr.mxu0 0.0
        %1078 = vmatpush2.msra.mxu0 0.0
        %1079 = vmatprep.subr.mxu0 0.0
        %1080 = vmatpush2.msra.mxu0 0.0
        %1081 = vmatprep.subr.mxu0 0.0
        %1082 = vmatpush2.msra.mxu0 0.0
        %1083 = vmatprep.subr.mxu0 0.0
        %1084 = vmatpush2.msra.mxu0 0.0
        %1085 = vmatprep.subr.mxu0 0.0
        %1086 = vmatpush2.msra.mxu0 0.0
        %1087 = vmatprep.subr.mxu0 0.0
        %1088 = vmatpush2.msra.mxu0 0.0
        %1089 = vmatprep.subr.mxu0 0.0
        %1090 = vmatpush2.msra.mxu0 0.0
        %1091 = vmatprep.subr.mxu0 0.0
        %1092 = vmatpush2.msra.mxu0 0.0
        %1093 = vmatprep.subr.mxu0 0.0
        %1094 = vmatpush2.msra.mxu0 0.0
        %1095 = vmatprep.subr.mxu0 0.0
        %1096 = vmatpush2.msra.mxu0 0.0
        %1097 = vmatprep.subr.mxu0 0.0
        %1098 = vmatpush2.msra.mxu0 0.0
        %1099 = vmatprep.subr.mxu0 0.0
        %1100 = vmatpush2.msra.mxu0 0.0
        %1101 = vmatprep.subr.mxu0 0.0
        %1102 = vmatpush2.msra.mxu0 0.0
        %1103 = vmatprep.subr.mxu0 0.0
        %1104 = vmatpush2.msra.mxu0 0.0
        %1105 = vmatprep.subr.mxu0 0.0
        %1106 = vmatpush2.msra.mxu0 0.0
        %1107 = vmatprep.mubr.f32.mxu0 0.0
        %1108 = vmatmul.mubr.f32.gmra.mxu0 %v944
        %v1109 = vpop.f32.mrf.mxu0
        %v1110 = vadd.f32 0.0, %v1109
        %v1111 = vpop.f32.mrf.mxu0
        %1112 = vmatprep.mubr.f32.mxu0 0.0
        %1113 = vmatmul.mubr.f32.gmra.mxu0 %v947
        %v1114 = vpop.f32.mrf.mxu0
        %v1115 = vadd.f32 0.0, %v1114
        %v1116 = vpop.f32.mrf.mxu0
        %1117 = vmatprep.mubr.f32.mxu0 0.0
        %1118 = vmatmul.mubr.f32.gmra.mxu0 %v950
        %v1119 = vpop.f32.mrf.mxu0
        %v1120 = vadd.f32 0.0, %v1119
        %v1121 = vpop.f32.mrf.mxu0
        %1122 = vmatprep.mubr.f32.mxu0 0.0
        %1123 = vmatmul.mubr.f32.gmra.mxu0 %v953
        %v1124 = vpop.f32.mrf.mxu0
        %v1125 = vadd.f32 0.0, %v1124
        %v1126 = vpop.f32.mrf.mxu0
        %1127 = vmatprep.mubr.f32.mxu0 0.0
        %1128 = vmatmul.mubr.f32.gmra.mxu0 %v956
        %v1129 = vpop.f32.mrf.mxu0
        %v1130 = vadd.f32 0.0, %v1129
        %v1131 = vpop.f32.mrf.mxu0
        %1132 = vmatprep.mubr.f32.mxu0 0.0
        %1133 = vmatmul.mubr.f32.gmra.mxu0 %v959
        %v1134 = vpop.f32.mrf.mxu0
        %v1135 = vadd.f32 0.0, %v1134
        %v1136 = vpop.f32.mrf.mxu0
        %1137 = vmatprep.mubr.f32.mxu0 0.0
        %1138 = vmatmul.mubr.f32.gmra.mxu0 %v962
        %v1139 = vpop.f32.mrf.mxu0
        %v1140 = vadd.f32 0.0, %v1139
        %v1141 = vpop.f32.mrf.mxu0
        %1142 = vmatprep.mubr.f32.mxu0 0.0
        %1143 = vmatmul.mubr.f32.gmra.mxu0 %v965
        %v1144 = vpop.f32.mrf.mxu0
        %v1145 = vadd.f32 0.0, %v1144
        %v1146 = vpop.f32.mrf.mxu0
        %1147 = vmatprep.mubr.f32.mxu0 0.0
        %1148 = vmatmul.mubr.f32.gmra.mxu0 %v968
        %v1149 = vpop.f32.mrf.mxu0
        %v1150 = vadd.f32 0.0, %v1149
        %v1151 = vpop.f32.mrf.mxu0
        %1152 = vmatprep.mubr.f32.mxu0 0.0
        %1153 = vmatmul.mubr.f32.gmra.mxu0 %v971
        %v1154 = vpop.f32.mrf.mxu0
        %v1155 = vadd.f32 0.0, %v1154
        %v1156 = vpop.f32.mrf.mxu0
        %1157 = vmatprep.mubr.f32.mxu0 0.0
        %1158 = vmatmul.mubr.f32.gmra.mxu0 %v974
        %v1159 = vpop.f32.mrf.mxu0
        %v1160 = vadd.f32 0.0, %v1159
        %v1161 = vpop.f32.mrf.mxu0
        %1162 = vmatprep.mubr.f32.mxu0 0.0
        %1163 = vmatmul.mubr.f32.gmra.mxu0 %v977
        %v1164 = vpop.f32.mrf.mxu0
        %v1165 = vadd.f32 0.0, %v1164
        %v1166 = vpop.f32.mrf.mxu0
        %1167 = vmatprep.mubr.f32.mxu0 0.0
        %1168 = vmatmul.mubr.f32.gmra.mxu0 %v980
        %v1169 = vpop.f32.mrf.mxu0
        %v1170 = vadd.f32 0.0, %v1169
        %v1171 = vpop.f32.mrf.mxu0
        %1172 = vmatprep.mubr.f32.mxu0 0.0
        %1173 = vmatmul.mubr.f32.gmra.mxu0 %v983
        %v1174 = vpop.f32.mrf.mxu0
        %v1175 = vadd.f32 0.0, %v1174
        %v1176 = vpop.f32.mrf.mxu0
        %1177 = vmatprep.mubr.f32.mxu0 0.0
        %1178 = vmatmul.mubr.f32.gmra.mxu0 %v986
        %v1179 = vpop.f32.mrf.mxu0
        %v1180 = vadd.f32 0.0, %v1179
        %v1181 = vpop.f32.mrf.mxu0
        %1182 = vmatprep.mubr.f32.mxu0 0.0
        %1183 = vmatmul.mubr.f32.gmra.mxu0 %v989
        %v1184 = vpop.f32.mrf.mxu0
        %v1185 = vadd.f32 0.0, %v1184
        %v1186 = vpop.f32.mrf.mxu0
        %1187 = vmatprep.mubr.f32.mxu0 0.0
        %1188 = vmatmul.mubr.f32.gmra.mxu0 %v992
        %v1189 = vpop.f32.mrf.mxu0
        %v1190 = vadd.f32 0.0, %v1189
        %v1191 = vpop.f32.mrf.mxu0
        %1192 = vmatprep.mubr.f32.mxu0 0.0
        %1193 = vmatmul.mubr.f32.gmra.mxu0 %v995
        %v1194 = vpop.f32.mrf.mxu0
        %v1195 = vadd.f32 0.0, %v1194
        %v1196 = vpop.f32.mrf.mxu0
        %1197 = vmatprep.mubr.f32.mxu0 0.0
        %1198 = vmatmul.mubr.f32.gmra.mxu0 %v998
        %v1199 = vpop.f32.mrf.mxu0
        %v1200 = vadd.f32 0.0, %v1199
        %v1201 = vpop.f32.mrf.mxu0
        %1202 = vmatprep.mubr.f32.mxu0 0.0
        %1203 = vmatmul.mubr.f32.gmra.mxu0 %v1001
        %v1204 = vpop.f32.mrf.mxu0
        %v1205 = vadd.f32 0.0, %v1204
        %v1206 = vpop.f32.mrf.mxu0
        %1207 = vmatprep.mubr.f32.mxu0 0.0
        %1208 = vmatmul.mubr.f32.gmra.mxu0 %v1004
        %v1209 = vpop.f32.mrf.mxu0
        %v1210 = vadd.f32 0.0, %v1209
        %v1211 = vpop.f32.mrf.mxu0
        %1212 = vmatprep.mubr.f32.mxu0 0.0
        %1213 = vmatmul.mubr.f32.gmra.mxu0 %v1007
        %v1214 = vpop.f32.mrf.mxu0
        %v1215 = vadd.f32 0.0, %v1214
        %v1216 = vpop.f32.mrf.mxu0
        %1217 = vmatprep.mubr.f32.mxu0 0.0
        %1218 = vmatmul.mubr.f32.gmra.mxu0 %v1010
        %v1219 = vpop.f32.mrf.mxu0
        %v1220 = vadd.f32 0.0, %v1219
        %v1221 = vpop.f32.mrf.mxu0
        %1222 = vmatprep.mubr.f32.mxu0 0.0
        %1223 = vmatmul.mubr.f32.gmra.mxu0 %v1013
        %v1224 = vpop.f32.mrf.mxu0
        %v1225 = vadd.f32 0.0, %v1224
        %v1226 = vpop.f32.mrf.mxu0
        %1227 = vmatprep.mubr.f32.mxu0 0.0
        %1228 = vmatmul.mubr.f32.gmra.mxu0 %v1016
        %v1229 = vpop.f32.mrf.mxu0
        %v1230 = vadd.f32 0.0, %v1229
        %v1231 = vpop.f32.mrf.mxu0
        %1232 = vmatprep.mubr.f32.mxu0 0.0
        %1233 = vmatmul.mubr.f32.gmra.mxu0 %v1019
        %v1234 = vpop.f32.mrf.mxu0
        %v1235 = vadd.f32 0.0, %v1234
        %v1236 = vpop.f32.mrf.mxu0
        %1237 = vmatprep.mubr.f32.mxu0 0.0
        %1238 = vmatmul.mubr.f32.gmra.mxu0 %v1022
        %v1239 = vpop.f32.mrf.mxu0
        %v1240 = vadd.f32 0.0, %v1239
        %v1241 = vpop.f32.mrf.mxu0
        %1242 = vmatprep.mubr.f32.mxu0 0.0
        %1243 = vmatmul.mubr.f32.gmra.mxu0 %v1025
        %v1244 = vpop.f32.mrf.mxu0
        %v1245 = vadd.f32 0.0, %v1244
        %v1246 = vpop.f32.mrf.mxu0
        %1247 = vmatprep.mubr.f32.mxu0 0.0
        %1248 = vmatmul.mubr.f32.gmra.mxu0 %v1028
        %v1249 = vpop.f32.mrf.mxu0
        %v1250 = vadd.f32 0.0, %v1249
        %v1251 = vpop.f32.mrf.mxu0
        %1252 = vmatprep.mubr.f32.mxu0 0.0
        %1253 = vmatmul.mubr.f32.gmra.mxu0 %v1031
        %v1254 = vpop.f32.mrf.mxu0
        %v1255 = vadd.f32 0.0, %v1254
        %v1256 = vpop.f32.mrf.mxu0
        %1257 = vmatprep.mubr.f32.mxu0 0.0
        %1258 = vmatmul.mubr.f32.gmra.mxu0 %v1034
        %v1259 = vpop.f32.mrf.mxu0
        %v1260 = vadd.f32 0.0, %v1259
        %v1261 = vpop.f32.mrf.mxu0
        %1262 = vmatprep.mubr.f32.mxu0 0.0
        %1263 = vmatmul.mubr.f32.gmra.mxu0 %v1037
        %v1264 = vpop.f32.mrf.mxu0
        %v1265 = vadd.f32 0.0, %v1264
        %v1266 = vpop.f32.mrf.mxu0
        %1267 = vdwg.mxu0
        %v1269 = vsel %vm429, %v906, 0
        %v1272 = vsel %vm429, %v907, 0
        %v1275 = vsel %vm1039, %v938, 0
        %1277 = vmatprep.subr.mxu0 0.0
        %1278 = vmatpush1.msra.mxu0 0.0
        %1279 = vmatprep.subr.mxu0 0.0
        %1280 = vmatpush1.msra.mxu0 0.0
        %1281 = vmatprep.subr.mxu0 0.0
        %1282 = vmatpush1.msra.mxu0 0.0
        %1283 = vmatprep.subr.mxu0 0.0
        %1284 = vmatpush1.msra.mxu0 0.0
        %1285 = vmatprep.subr.mxu0 0.0
        %1286 = vmatpush1.msra.mxu0 0.0
        %1287 = vmatprep.subr.mxu0 0.0
        %1288 = vmatpush1.msra.mxu0 0.0
        %1289 = vmatprep.subr.mxu0 0.0
        %1290 = vmatpush1.msra.mxu0 0.0
        %1291 = vmatprep.subr.mxu0 0.0
        %1292 = vmatpush1.msra.mxu0 0.0
        %1293 = vmatprep.subr.mxu0 0.0
        %1294 = vmatpush1.msra.mxu0 0.0
        %1295 = vmatprep.subr.mxu0 0.0
        %1296 = vmatpush1.msra.mxu0 0.0
        %1297 = vmatprep.subr.mxu0 0.0
        %1298 = vmatpush1.msra.mxu0 0.0
        %1299 = vmatprep.subr.mxu0 0.0
        %1300 = vmatpush1.msra.mxu0 0.0
        %1301 = vmatprep.subr.mxu0 0.0
        %1302 = vmatpush1.msra.mxu0 0.0
        %1303 = vmatprep.subr.mxu0 0.0
        %1304 = vmatpush1.msra.mxu0 0.0
        %1305 = vmatprep.subr.mxu0 0.0
        %1306 = vmatpush1.msra.mxu0 0.0
        %1307 = vmatprep.subr.mxu0 0.0
        %1308 = vmatpush1.msra.mxu0 %v1275
        %1309 = vmatprep.subr.mxu0 0.0
        %1310 = vmatpush2.msra.mxu0 0.0
        %1311 = vmatprep.subr.mxu0 0.0
        %1312 = vmatpush2.msra.mxu0 0.0
        %1313 = vmatprep.subr.mxu0 0.0
        %1314 = vmatpush2.msra.mxu0 0.0
        %1315 = vmatprep.subr.mxu0 0.0
        %1316 = vmatpush2.msra.mxu0 0.0
        %1317 = vmatprep.subr.mxu0 0.0
        %1318 = vmatpush2.msra.mxu0 0.0
        %1319 = vmatprep.subr.mxu0 0.0
        %1320 = vmatpush2.msra.mxu0 0.0
        %1321 = vmatprep.subr.mxu0 0.0
        %1322 = vmatpush2.msra.mxu0 0.0
        %1323 = vmatprep.subr.mxu0 0.0
        %1324 = vmatpush2.msra.mxu0 0.0
        %1325 = vmatprep.subr.mxu0 0.0
        %1326 = vmatpush2.msra.mxu0 0.0
        %1327 = vmatprep.subr.mxu0 0.0
        %1328 = vmatpush2.msra.mxu0 0.0
        %1329 = vmatprep.subr.mxu0 0.0
        %1330 = vmatpush2.msra.mxu0 0.0
        %1331 = vmatprep.subr.mxu0 0.0
        %1332 = vmatpush2.msra.mxu0 0.0
        %1333 = vmatprep.subr.mxu0 0.0
        %1334 = vmatpush2.msra.mxu0 0.0
        %1335 = vmatprep.subr.mxu0 0.0
        %1336 = vmatpush2.msra.mxu0 0.0
        %1337 = vmatprep.subr.mxu0 0.0
        %1338 = vmatpush2.msra.mxu0 0.0
        %1339 = vmatprep.subr.mxu0 0.0
        %1340 = vmatpush2.msra.mxu0 0.0
        %1341 = vmatprep.mubr.f32.mxu0 0.0
        %1342 = vmatmul.mubr.f32.gmra.mxu0 %v1269
        %v1343 = vpop.f32.mrf.mxu0
        %v1344 = vadd.f32 %v1110, %v1343
        %v1345 = vpop.f32.mrf.mxu0
        %1346 = vmatprep.mubr.f32.mxu0 0.0
        %1347 = vmatmul.mubr.f32.gmra.mxu0 %v1272
        %v1348 = vpop.f32.mrf.mxu0
        %v1349 = vadd.f32 %v1115, %v1348
        %v1350 = vpop.f32.mrf.mxu0
        %1351 = vmatprep.mubr.f32.mxu0 0.0
        %1352 = vmatmul.mubr.f32.gmra.mxu0 %v944
        %v1353 = vpop.f32.mrf.mxu0
        %v1354 = vadd.f32 %v1120, %v1353
        %v1355 = vpop.f32.mrf.mxu0
        %1356 = vmatprep.mubr.f32.mxu0 0.0
        %1357 = vmatmul.mubr.f32.gmra.mxu0 %v947
        %v1358 = vpop.f32.mrf.mxu0
        %v1359 = vadd.f32 %v1125, %v1358
        %v1360 = vpop.f32.mrf.mxu0
        %1361 = vmatprep.mubr.f32.mxu0 0.0
        %1362 = vmatmul.mubr.f32.gmra.mxu0 %v950
        %v1363 = vpop.f32.mrf.mxu0
        %v1364 = vadd.f32 %v1130, %v1363
        %v1365 = vpop.f32.mrf.mxu0
        %1366 = vmatprep.mubr.f32.mxu0 0.0
        %1367 = vmatmul.mubr.f32.gmra.mxu0 %v953
        %v1368 = vpop.f32.mrf.mxu0
        %v1369 = vadd.f32 %v1135, %v1368
        %v1370 = vpop.f32.mrf.mxu0
        %1371 = vmatprep.mubr.f32.mxu0 0.0
        %1372 = vmatmul.mubr.f32.gmra.mxu0 %v956
        %v1373 = vpop.f32.mrf.mxu0
        %v1374 = vadd.f32 %v1140, %v1373
        %v1375 = vpop.f32.mrf.mxu0
        %1376 = vmatprep.mubr.f32.mxu0 0.0
        %1377 = vmatmul.mubr.f32.gmra.mxu0 %v959
        %v1378 = vpop.f32.mrf.mxu0
        %v1379 = vadd.f32 %v1145, %v1378
        %v1380 = vpop.f32.mrf.mxu0
        %1381 = vmatprep.mubr.f32.mxu0 0.0
        %1382 = vmatmul.mubr.f32.gmra.mxu0 %v962
        %v1383 = vpop.f32.mrf.mxu0
        %v1384 = vadd.f32 %v1150, %v1383
        %v1385 = vpop.f32.mrf.mxu0
        %1386 = vmatprep.mubr.f32.mxu0 0.0
        %1387 = vmatmul.mubr.f32.gmra.mxu0 %v965
        %v1388 = vpop.f32.mrf.mxu0
        %v1389 = vadd.f32 %v1155, %v1388
        %v1390 = vpop.f32.mrf.mxu0
        %1391 = vmatprep.mubr.f32.mxu0 0.0
        %1392 = vmatmul.mubr.f32.gmra.mxu0 %v968
        %v1393 = vpop.f32.mrf.mxu0
        %v1394 = vadd.f32 %v1160, %v1393
        %v1395 = vpop.f32.mrf.mxu0
        %1396 = vmatprep.mubr.f32.mxu0 0.0
        %1397 = vmatmul.mubr.f32.gmra.mxu0 %v971
        %v1398 = vpop.f32.mrf.mxu0
        %v1399 = vadd.f32 %v1165, %v1398
        %v1400 = vpop.f32.mrf.mxu0
        %1401 = vmatprep.mubr.f32.mxu0 0.0
        %1402 = vmatmul.mubr.f32.gmra.mxu0 %v974
        %v1403 = vpop.f32.mrf.mxu0
        %v1404 = vadd.f32 %v1170, %v1403
        %v1405 = vpop.f32.mrf.mxu0
        %1406 = vmatprep.mubr.f32.mxu0 0.0
        %1407 = vmatmul.mubr.f32.gmra.mxu0 %v977
        %v1408 = vpop.f32.mrf.mxu0
        %v1409 = vadd.f32 %v1175, %v1408
        %v1410 = vpop.f32.mrf.mxu0
        %1411 = vmatprep.mubr.f32.mxu0 0.0
        %1412 = vmatmul.mubr.f32.gmra.mxu0 %v980
        %v1413 = vpop.f32.mrf.mxu0
        %v1414 = vadd.f32 %v1180, %v1413
        %v1415 = vpop.f32.mrf.mxu0
        %1416 = vmatprep.mubr.f32.mxu0 0.0
        %1417 = vmatmul.mubr.f32.gmra.mxu0 %v983
        %v1418 = vpop.f32.mrf.mxu0
        %v1419 = vadd.f32 %v1185, %v1418
        %v1420 = vpop.f32.mrf.mxu0
        %1421 = vmatprep.mubr.f32.mxu0 0.0
        %1422 = vmatmul.mubr.f32.gmra.mxu0 %v986
        %v1423 = vpop.f32.mrf.mxu0
        %v1424 = vadd.f32 %v1190, %v1423
        %v1425 = vpop.f32.mrf.mxu0
        %1426 = vmatprep.mubr.f32.mxu0 0.0
        %1427 = vmatmul.mubr.f32.gmra.mxu0 %v989
        %v1428 = vpop.f32.mrf.mxu0
        %v1429 = vadd.f32 %v1195, %v1428
        %v1430 = vpop.f32.mrf.mxu0
        %1431 = vmatprep.mubr.f32.mxu0 0.0
        %1432 = vmatmul.mubr.f32.gmra.mxu0 %v992
        %v1433 = vpop.f32.mrf.mxu0
        %v1434 = vadd.f32 %v1200, %v1433
        %v1435 = vpop.f32.mrf.mxu0
        %1436 = vmatprep.mubr.f32.mxu0 0.0
        %1437 = vmatmul.mubr.f32.gmra.mxu0 %v995
        %v1438 = vpop.f32.mrf.mxu0
        %v1439 = vadd.f32 %v1205, %v1438
        %v1440 = vpop.f32.mrf.mxu0
        %1441 = vmatprep.mubr.f32.mxu0 0.0
        %1442 = vmatmul.mubr.f32.gmra.mxu0 %v998
        %v1443 = vpop.f32.mrf.mxu0
        %v1444 = vadd.f32 %v1210, %v1443
        %v1445 = vpop.f32.mrf.mxu0
        %1446 = vmatprep.mubr.f32.mxu0 0.0
        %1447 = vmatmul.mubr.f32.gmra.mxu0 %v1001
        %v1448 = vpop.f32.mrf.mxu0
        %v1449 = vadd.f32 %v1215, %v1448
        %v1450 = vpop.f32.mrf.mxu0
        %1451 = vmatprep.mubr.f32.mxu0 0.0
        %1452 = vmatmul.mubr.f32.gmra.mxu0 %v1004
        %v1453 = vpop.f32.mrf.mxu0
        %v1454 = vadd.f32 %v1220, %v1453
        %v1455 = vpop.f32.mrf.mxu0
        %1456 = vmatprep.mubr.f32.mxu0 0.0
        %1457 = vmatmul.mubr.f32.gmra.mxu0 %v1007
        %v1458 = vpop.f32.mrf.mxu0
        %v1459 = vadd.f32 %v1225, %v1458
        %v1460 = vpop.f32.mrf.mxu0
        %1461 = vmatprep.mubr.f32.mxu0 0.0
        %1462 = vmatmul.mubr.f32.gmra.mxu0 %v1010
        %v1463 = vpop.f32.mrf.mxu0
        %v1464 = vadd.f32 %v1230, %v1463
        %v1465 = vpop.f32.mrf.mxu0
        %1466 = vmatprep.mubr.f32.mxu0 0.0
        %1467 = vmatmul.mubr.f32.gmra.mxu0 %v1013
        %v1468 = vpop.f32.mrf.mxu0
        %v1469 = vadd.f32 %v1235, %v1468
        %v1470 = vpop.f32.mrf.mxu0
        %1471 = vmatprep.mubr.f32.mxu0 0.0
        %1472 = vmatmul.mubr.f32.gmra.mxu0 %v1016
        %v1473 = vpop.f32.mrf.mxu0
        %v1474 = vadd.f32 %v1240, %v1473
        %v1475 = vpop.f32.mrf.mxu0
        %1476 = vmatprep.mubr.f32.mxu0 0.0
        %1477 = vmatmul.mubr.f32.gmra.mxu0 %v1019
        %v1478 = vpop.f32.mrf.mxu0
        %v1479 = vadd.f32 %v1245, %v1478
        %v1480 = vpop.f32.mrf.mxu0
        %1481 = vmatprep.mubr.f32.mxu0 0.0
        %1482 = vmatmul.mubr.f32.gmra.mxu0 %v1022
        %v1483 = vpop.f32.mrf.mxu0
        %v1484 = vadd.f32 %v1250, %v1483
        %v1485 = vpop.f32.mrf.mxu0
        %1486 = vmatprep.mubr.f32.mxu0 0.0
        %1487 = vmatmul.mubr.f32.gmra.mxu0 %v1025
        %v1488 = vpop.f32.mrf.mxu0
        %v1489 = vadd.f32 %v1255, %v1488
        %v1490 = vpop.f32.mrf.mxu0
        %1491 = vmatprep.mubr.f32.mxu0 0.0
        %1492 = vmatmul.mubr.f32.gmra.mxu0 %v1028
        %v1493 = vpop.f32.mrf.mxu0
        %v1494 = vadd.f32 %v1260, %v1493
        %v1495 = vpop.f32.mrf.mxu0
        %1496 = vmatprep.mubr.f32.mxu0 0.0
        %1497 = vmatmul.mubr.f32.gmra.mxu0 %v1031
        %v1498 = vpop.f32.mrf.mxu0
        %v1499 = vadd.f32 %v1265, %v1498
        %v1500 = vpop.f32.mrf.mxu0
        %1501 = vdwg.mxu0
        %v1502 = vld [vmem:[#allocation2 + $0x20] sm:$0xff]
        %v1503 = vld [vmem:[#allocation2 + $0x28] sm:$0xff]
        %v1504 = vld [vmem:[#allocation2 + $0x30] sm:$0xff]
        %v1505 = vld [vmem:[#allocation2 + $0x38] sm:$0xff]
        %v1506 = vld [vmem:[#allocation2 + $0x40] sm:$0xff]
        %v1507 = vld [vmem:[#allocation2 + $0x48] sm:$0xff]
        %v1508 = vld [vmem:[#allocation2 + $0x50] sm:$0xff]
        %v1509 = vld [vmem:[#allocation2 + $0x58] sm:$0xff]
        %v1510 = vld [vmem:[#allocation2 + $0x60] sm:$0xff]
        %v1511 = vld [vmem:[#allocation2 + $0x68] sm:$0xff]
        %v1512 = vld [vmem:[#allocation2 + $0x70] sm:$0xff]
        %v1513 = vld [vmem:[#allocation2 + $0x78] sm:$0xff]
        %v1514 = vld [vmem:[#allocation2 + $0x80] sm:$0xff]
        %v1515 = vld [vmem:[#allocation2 + $0x88] sm:$0xff]
        %v1516 = vld [vmem:[#allocation2 + $0x90] sm:$0xff]
        %v1517 = vld [vmem:[#allocation2 + $0x98] sm:$0xff]
        %v1518 = vld [vmem:[#allocation2 + $0xa0] sm:$0xff]
        %v1519 = vld [vmem:[#allocation2 + $0xa8] sm:$0xff]
        %v1520 = vld [vmem:[#allocation2 + $0xb0] sm:$0xff]
        %v1521 = vld [vmem:[#allocation2 + $0xb8] sm:$0xff]
        %v1522 = vld [vmem:[#allocation2 + $0xc0] sm:$0xff]
        %v1523 = vld [vmem:[#allocation2 + $0xc8] sm:$0xff]
        %v1524 = vld [vmem:[#allocation2 + $0xd0] sm:$0xff]
        %v1525 = vld [vmem:[#allocation2 + $0xd8] sm:$0xff]
        %v1526 = vld [vmem:[#allocation2 + $0xe0] sm:$0xff]
        %v1527 = vld [vmem:[#allocation2 + $0xe8] sm:$0xff]
        %v1528 = vld [vmem:[#allocation2 + $0xf0] sm:$0xff]
        %v1529 = vld [vmem:[#allocation2 + $0xf8] sm:$0xff]
        %v1530 = vld [vmem:[#allocation2 + $0x100] sm:$0xff]
        %v1531 = vld [vmem:[#allocation2 + $0x108] sm:$0xff]
        %v1532 = vld [vmem:[#allocation2 + $0x110] sm:$0xff]
        %v1533 = vld [vmem:[#allocation2 + $0x118] sm:$0xff]
        %s1534 = scalar_lea.vmem %s3, 24
        %v1535 = vld [vmem:[%s1534] sm:$0xf]
        %v1537 = vsel %vm429, %v1502, 0
        %v1540 = vsel %vm429, %v1503, 0
        %v1543 = vsel %vm429, %v1504, 0
        %v1546 = vsel %vm429, %v1505, 0
        %v1549 = vsel %vm429, %v1506, 0
        %v1552 = vsel %vm429, %v1507, 0
        %v1555 = vsel %vm429, %v1508, 0
        %v1558 = vsel %vm429, %v1509, 0
        %v1561 = vsel %vm429, %v1510, 0
        %v1564 = vsel %vm429, %v1511, 0
        %v1567 = vsel %vm429, %v1512, 0
        %v1570 = vsel %vm429, %v1513, 0
        %v1573 = vsel %vm429, %v1514, 0
        %v1576 = vsel %vm429, %v1515, 0
        %v1579 = vsel %vm429, %v1516, 0
        %v1582 = vsel %vm429, %v1517, 0
        %v1585 = vsel %vm429, %v1518, 0
        %v1588 = vsel %vm429, %v1519, 0
        %v1591 = vsel %vm429, %v1520, 0
        %v1594 = vsel %vm429, %v1521, 0
        %v1597 = vsel %vm429, %v1522, 0
        %v1600 = vsel %vm429, %v1523, 0
        %v1603 = vsel %vm429, %v1524, 0
        %v1606 = vsel %vm429, %v1525, 0
        %v1609 = vsel %vm429, %v1526, 0
        %v1612 = vsel %vm429, %v1527, 0
        %v1615 = vsel %vm429, %v1528, 0
        %v1618 = vsel %vm429, %v1529, 0
        %v1621 = vsel %vm429, %v1530, 0
        %v1624 = vsel %vm429, %v1531, 0
        %v1627 = vsel %vm429, %v1532, 0
        %v1630 = vsel %vm429, %v1533, 0
        %v1633 = vsel %vm1039, %v1535, 0
        %1635 = vmatprep.subr.mxu0 0.0
        %1636 = vmatpush1.msra.mxu0 0.0
        %1637 = vmatprep.subr.mxu0 0.0
        %1638 = vmatpush1.msra.mxu0 0.0
        %1639 = vmatprep.subr.mxu0 0.0
        %1640 = vmatpush1.msra.mxu0 0.0
        %1641 = vmatprep.subr.mxu0 0.0
        %1642 = vmatpush1.msra.mxu0 0.0
        %1643 = vmatprep.subr.mxu0 0.0
        %1644 = vmatpush1.msra.mxu0 0.0
        %1645 = vmatprep.subr.mxu0 0.0
        %1646 = vmatpush1.msra.mxu0 0.0
        %1647 = vmatprep.subr.mxu0 0.0
        %1648 = vmatpush1.msra.mxu0 0.0
        %1649 = vmatprep.subr.mxu0 0.0
        %1650 = vmatpush1.msra.mxu0 0.0
        %1651 = vmatprep.subr.mxu0 0.0
        %1652 = vmatpush1.msra.mxu0 0.0
        %1653 = vmatprep.subr.mxu0 0.0
        %1654 = vmatpush1.msra.mxu0 0.0
        %1655 = vmatprep.subr.mxu0 0.0
        %1656 = vmatpush1.msra.mxu0 0.0
        %1657 = vmatprep.subr.mxu0 0.0
        %1658 = vmatpush1.msra.mxu0 0.0
        %1659 = vmatprep.subr.mxu0 0.0
        %1660 = vmatpush1.msra.mxu0 0.0
        %1661 = vmatprep.subr.mxu0 0.0
        %1662 = vmatpush1.msra.mxu0 0.0
        %1663 = vmatprep.subr.mxu0 0.0
        %1664 = vmatpush1.msra.mxu0 0.0
        %1665 = vmatprep.subr.mxu0 0.0
        %1666 = vmatpush1.msra.mxu0 %v1633
        %1667 = vmatprep.subr.mxu0 0.0
        %1668 = vmatpush2.msra.mxu0 0.0
        %1669 = vmatprep.subr.mxu0 0.0
        %1670 = vmatpush2.msra.mxu0 0.0
        %1671 = vmatprep.subr.mxu0 0.0
        %1672 = vmatpush2.msra.mxu0 0.0
        %1673 = vmatprep.subr.mxu0 0.0
        %1674 = vmatpush2.msra.mxu0 0.0
        %1675 = vmatprep.subr.mxu0 0.0
        %1676 = vmatpush2.msra.mxu0 0.0
        %1677 = vmatprep.subr.mxu0 0.0
        %1678 = vmatpush2.msra.mxu0 0.0
        %1679 = vmatprep.subr.mxu0 0.0
        %1680 = vmatpush2.msra.mxu0 0.0
        %1681 = vmatprep.subr.mxu0 0.0
        %1682 = vmatpush2.msra.mxu0 0.0
        %1683 = vmatprep.subr.mxu0 0.0
        %1684 = vmatpush2.msra.mxu0 0.0
        %1685 = vmatprep.subr.mxu0 0.0
        %1686 = vmatpush2.msra.mxu0 0.0
        %1687 = vmatprep.subr.mxu0 0.0
        %1688 = vmatpush2.msra.mxu0 0.0
        %1689 = vmatprep.subr.mxu0 0.0
        %1690 = vmatpush2.msra.mxu0 0.0
        %1691 = vmatprep.subr.mxu0 0.0
        %1692 = vmatpush2.msra.mxu0 0.0
        %1693 = vmatprep.subr.mxu0 0.0
        %1694 = vmatpush2.msra.mxu0 0.0
        %1695 = vmatprep.subr.mxu0 0.0
        %1696 = vmatpush2.msra.mxu0 0.0
        %1697 = vmatprep.subr.mxu0 0.0
        %1698 = vmatpush2.msra.mxu0 0.0
        %1699 = vmatprep.mubr.f32.mxu0 0.0
        %1700 = vmatmul.mubr.f32.gmra.mxu0 %v1537
        %v1701 = vpop.f32.mrf.mxu0
        %v1702 = vadd.f32 0.0, %v1701
        %v1703 = vpop.f32.mrf.mxu0
        %1704 = vmatprep.mubr.f32.mxu0 0.0
        %1705 = vmatmul.mubr.f32.gmra.mxu0 %v1540
        %v1706 = vpop.f32.mrf.mxu0
        %v1707 = vadd.f32 0.0, %v1706
        %v1708 = vpop.f32.mrf.mxu0
        %1709 = vmatprep.mubr.f32.mxu0 0.0
        %1710 = vmatmul.mubr.f32.gmra.mxu0 %v1543
        %v1711 = vpop.f32.mrf.mxu0
        %v1712 = vadd.f32 0.0, %v1711
        %v1713 = vpop.f32.mrf.mxu0
        %1714 = vmatprep.mubr.f32.mxu0 0.0
        %1715 = vmatmul.mubr.f32.gmra.mxu0 %v1546
        %v1716 = vpop.f32.mrf.mxu0
        %v1717 = vadd.f32 0.0, %v1716
        %v1718 = vpop.f32.mrf.mxu0
        %1719 = vmatprep.mubr.f32.mxu0 0.0
        %1720 = vmatmul.mubr.f32.gmra.mxu0 %v1549
        %v1721 = vpop.f32.mrf.mxu0
        %v1722 = vadd.f32 0.0, %v1721
        %v1723 = vpop.f32.mrf.mxu0
        %1724 = vmatprep.mubr.f32.mxu0 0.0
        %1725 = vmatmul.mubr.f32.gmra.mxu0 %v1552
        %v1726 = vpop.f32.mrf.mxu0
        %v1727 = vadd.f32 0.0, %v1726
        %v1728 = vpop.f32.mrf.mxu0
        %1729 = vmatprep.mubr.f32.mxu0 0.0
        %1730 = vmatmul.mubr.f32.gmra.mxu0 %v1555
        %v1731 = vpop.f32.mrf.mxu0
        %v1732 = vadd.f32 0.0, %v1731
        %v1733 = vpop.f32.mrf.mxu0
        %1734 = vmatprep.mubr.f32.mxu0 0.0
        %1735 = vmatmul.mubr.f32.gmra.mxu0 %v1558
        %v1736 = vpop.f32.mrf.mxu0
        %v1737 = vadd.f32 0.0, %v1736
        %v1738 = vpop.f32.mrf.mxu0
        %1739 = vmatprep.mubr.f32.mxu0 0.0
        %1740 = vmatmul.mubr.f32.gmra.mxu0 %v1561
        %v1741 = vpop.f32.mrf.mxu0
        %v1742 = vadd.f32 0.0, %v1741
        %v1743 = vpop.f32.mrf.mxu0
        %1744 = vmatprep.mubr.f32.mxu0 0.0
        %1745 = vmatmul.mubr.f32.gmra.mxu0 %v1564
        %v1746 = vpop.f32.mrf.mxu0
        %v1747 = vadd.f32 0.0, %v1746
        %v1748 = vpop.f32.mrf.mxu0
        %1749 = vmatprep.mubr.f32.mxu0 0.0
        %1750 = vmatmul.mubr.f32.gmra.mxu0 %v1567
        %v1751 = vpop.f32.mrf.mxu0
        %v1752 = vadd.f32 0.0, %v1751
        %v1753 = vpop.f32.mrf.mxu0
        %1754 = vmatprep.mubr.f32.mxu0 0.0
        %1755 = vmatmul.mubr.f32.gmra.mxu0 %v1570
        %v1756 = vpop.f32.mrf.mxu0
        %v1757 = vadd.f32 0.0, %v1756
        %v1758 = vpop.f32.mrf.mxu0
        %1759 = vmatprep.mubr.f32.mxu0 0.0
        %1760 = vmatmul.mubr.f32.gmra.mxu0 %v1573
        %v1761 = vpop.f32.mrf.mxu0
        %v1762 = vadd.f32 0.0, %v1761
        %v1763 = vpop.f32.mrf.mxu0
        %1764 = vmatprep.mubr.f32.mxu0 0.0
        %1765 = vmatmul.mubr.f32.gmra.mxu0 %v1576
        %v1766 = vpop.f32.mrf.mxu0
        %v1767 = vadd.f32 0.0, %v1766
        %v1768 = vpop.f32.mrf.mxu0
        %1769 = vmatprep.mubr.f32.mxu0 0.0
        %1770 = vmatmul.mubr.f32.gmra.mxu0 %v1579
        %v1771 = vpop.f32.mrf.mxu0
        %v1772 = vadd.f32 0.0, %v1771
        %v1773 = vpop.f32.mrf.mxu0
        %1774 = vmatprep.mubr.f32.mxu0 0.0
        %1775 = vmatmul.mubr.f32.gmra.mxu0 %v1582
        %v1776 = vpop.f32.mrf.mxu0
        %v1777 = vadd.f32 0.0, %v1776
        %v1778 = vpop.f32.mrf.mxu0
        %1779 = vmatprep.mubr.f32.mxu0 0.0
        %1780 = vmatmul.mubr.f32.gmra.mxu0 %v1585
        %v1781 = vpop.f32.mrf.mxu0
        %v1782 = vadd.f32 0.0, %v1781
        %v1783 = vpop.f32.mrf.mxu0
        %1784 = vmatprep.mubr.f32.mxu0 0.0
        %1785 = vmatmul.mubr.f32.gmra.mxu0 %v1588
        %v1786 = vpop.f32.mrf.mxu0
        %v1787 = vadd.f32 0.0, %v1786
        %v1788 = vpop.f32.mrf.mxu0
        %1789 = vmatprep.mubr.f32.mxu0 0.0
        %1790 = vmatmul.mubr.f32.gmra.mxu0 %v1591
        %v1791 = vpop.f32.mrf.mxu0
        %v1792 = vadd.f32 0.0, %v1791
        %v1793 = vpop.f32.mrf.mxu0
        %1794 = vmatprep.mubr.f32.mxu0 0.0
        %1795 = vmatmul.mubr.f32.gmra.mxu0 %v1594
        %v1796 = vpop.f32.mrf.mxu0
        %v1797 = vadd.f32 0.0, %v1796
        %v1798 = vpop.f32.mrf.mxu0
        %1799 = vmatprep.mubr.f32.mxu0 0.0
        %1800 = vmatmul.mubr.f32.gmra.mxu0 %v1597
        %v1801 = vpop.f32.mrf.mxu0
        %v1802 = vadd.f32 0.0, %v1801
        %v1803 = vpop.f32.mrf.mxu0
        %1804 = vmatprep.mubr.f32.mxu0 0.0
        %1805 = vmatmul.mubr.f32.gmra.mxu0 %v1600
        %v1806 = vpop.f32.mrf.mxu0
        %v1807 = vadd.f32 0.0, %v1806
        %v1808 = vpop.f32.mrf.mxu0
        %1809 = vmatprep.mubr.f32.mxu0 0.0
        %1810 = vmatmul.mubr.f32.gmra.mxu0 %v1603
        %v1811 = vpop.f32.mrf.mxu0
        %v1812 = vadd.f32 0.0, %v1811
        %v1813 = vpop.f32.mrf.mxu0
        %1814 = vmatprep.mubr.f32.mxu0 0.0
        %1815 = vmatmul.mubr.f32.gmra.mxu0 %v1606
        %v1816 = vpop.f32.mrf.mxu0
        %v1817 = vadd.f32 0.0, %v1816
        %v1818 = vpop.f32.mrf.mxu0
        %1819 = vmatprep.mubr.f32.mxu0 0.0
        %1820 = vmatmul.mubr.f32.gmra.mxu0 %v1609
        %v1821 = vpop.f32.mrf.mxu0
        %v1822 = vadd.f32 0.0, %v1821
        %v1823 = vpop.f32.mrf.mxu0
        %1824 = vmatprep.mubr.f32.mxu0 0.0
        %1825 = vmatmul.mubr.f32.gmra.mxu0 %v1612
        %v1826 = vpop.f32.mrf.mxu0
        %v1827 = vadd.f32 0.0, %v1826
        %v1828 = vpop.f32.mrf.mxu0
        %1829 = vmatprep.mubr.f32.mxu0 0.0
        %1830 = vmatmul.mubr.f32.gmra.mxu0 %v1615
        %v1831 = vpop.f32.mrf.mxu0
        %v1832 = vadd.f32 0.0, %v1831
        %v1833 = vpop.f32.mrf.mxu0
        %1834 = vmatprep.mubr.f32.mxu0 0.0
        %1835 = vmatmul.mubr.f32.gmra.mxu0 %v1618
        %v1836 = vpop.f32.mrf.mxu0
        %v1837 = vadd.f32 0.0, %v1836
        %v1838 = vpop.f32.mrf.mxu0
        %1839 = vmatprep.mubr.f32.mxu0 0.0
        %1840 = vmatmul.mubr.f32.gmra.mxu0 %v1621
        %v1841 = vpop.f32.mrf.mxu0
        %v1842 = vadd.f32 0.0, %v1841
        %v1843 = vpop.f32.mrf.mxu0
        %1844 = vmatprep.mubr.f32.mxu0 0.0
        %1845 = vmatmul.mubr.f32.gmra.mxu0 %v1624
        %v1846 = vpop.f32.mrf.mxu0
        %v1847 = vadd.f32 0.0, %v1846
        %v1848 = vpop.f32.mrf.mxu0
        %1849 = vmatprep.mubr.f32.mxu0 0.0
        %1850 = vmatmul.mubr.f32.gmra.mxu0 %v1627
        %v1851 = vpop.f32.mrf.mxu0
        %v1852 = vadd.f32 0.0, %v1851
        %v1853 = vpop.f32.mrf.mxu0
        %1854 = vmatprep.mubr.f32.mxu0 0.0
        %1855 = vmatmul.mubr.f32.gmra.mxu0 %v1630
        %v1856 = vpop.f32.mrf.mxu0
        %v1857 = vadd.f32 0.0, %v1856
        %v1858 = vpop.f32.mrf.mxu0
        %1859 = vdwg.mxu0
        %v1860 = vadd.f32 %v1344, %v1702
        %v1861 = vadd.f32 %v1349, %v1707
        %v1862 = vadd.f32 %v1354, %v1712
        %v1863 = vadd.f32 %v1359, %v1717
        %v1864 = vadd.f32 %v1364, %v1722
        %v1865 = vadd.f32 %v1369, %v1727
        %v1866 = vadd.f32 %v1374, %v1732
        %v1867 = vadd.f32 %v1379, %v1737
        %v1868 = vadd.f32 %v1384, %v1742
        %v1869 = vadd.f32 %v1389, %v1747
        %v1870 = vadd.f32 %v1394, %v1752
        %v1871 = vadd.f32 %v1399, %v1757
        %v1872 = vadd.f32 %v1404, %v1762
        %v1873 = vadd.f32 %v1409, %v1767
        %v1874 = vadd.f32 %v1414, %v1772
        %v1875 = vadd.f32 %v1419, %v1777
        %v1876 = vadd.f32 %v1424, %v1782
        %v1877 = vadd.f32 %v1429, %v1787
        %v1878 = vadd.f32 %v1434, %v1792
        %v1879 = vadd.f32 %v1439, %v1797
        %v1880 = vadd.f32 %v1444, %v1802
        %v1881 = vadd.f32 %v1449, %v1807
        %v1882 = vadd.f32 %v1454, %v1812
        %v1883 = vadd.f32 %v1459, %v1817
        %v1884 = vadd.f32 %v1464, %v1822
        %v1885 = vadd.f32 %v1469, %v1827
        %v1886 = vadd.f32 %v1474, %v1832
        %v1887 = vadd.f32 %v1479, %v1837
        %v1888 = vadd.f32 %v1484, %v1842
        %v1889 = vadd.f32 %v1489, %v1847
        %v1890 = vadd.f32 %v1494, %v1852
        %v1891 = vadd.f32 %v1499, %v1857
        %vm1892 = vcmp.ge.s32.totalorder %v874, 1
        %vm1893 = vcmp.ge.s32.totalorder %v875, 1
        %vm1894 = vcmp.ge.s32.totalorder %v876, 1
        %vm1895 = vcmp.ge.s32.totalorder %v877, 1
        %vm1896 = vcmp.ge.s32.totalorder %v878, 1
        %vm1897 = vcmp.ge.s32.totalorder %v879, 1
        %vm1898 = vcmp.ge.s32.totalorder %v880, 1
        %vm1899 = vcmp.ge.s32.totalorder %v881, 1
        %vm1900 = vcmp.ge.s32.totalorder %v882, 1
        %vm1901 = vcmp.ge.s32.totalorder %v883, 1
        %vm1902 = vcmp.ge.s32.totalorder %v884, 1
        %vm1903 = vcmp.ge.s32.totalorder %v885, 1
        %vm1904 = vcmp.ge.s32.totalorder %v886, 1
        %vm1905 = vcmp.ge.s32.totalorder %v887, 1
        %vm1906 = vcmp.ge.s32.totalorder %v888, 1
        %vm1907 = vcmp.ge.s32.totalorder %v889, 1
        %vm1908 = vcmp.ge.s32.totalorder %v890, 1
        %vm1909 = vcmp.ge.s32.totalorder %v891, 1
        %vm1910 = vcmp.ge.s32.totalorder %v892, 1
        %vm1911 = vcmp.ge.s32.totalorder %v893, 1
        %vm1912 = vcmp.ge.s32.totalorder %v894, 1
        %vm1913 = vcmp.ge.s32.totalorder %v895, 1
        %vm1914 = vcmp.ge.s32.totalorder %v896, 1
        %vm1915 = vcmp.ge.s32.totalorder %v897, 1
        %vm1916 = vcmp.ge.s32.totalorder %v898, 1
        %vm1917 = vcmp.ge.s32.totalorder %v899, 1
        %vm1918 = vcmp.ge.s32.totalorder %v900, 1
        %vm1919 = vcmp.ge.s32.totalorder %v901, 1
        %vm1920 = vcmp.ge.s32.totalorder %v902, 1
        %vm1921 = vcmp.ge.s32.totalorder %v903, 1
        %vm1922 = vcmp.ge.s32.totalorder %v904, 1
        %vm1923 = vcmp.ge.s32.totalorder %v905, 1
        %vm1924 = vcmp.lt.s32.totalorder %v874, 17
        %vm1925 = vcmp.lt.s32.totalorder %v875, 17
        %vm1926 = vcmp.lt.s32.totalorder %v876, 17
        %vm1927 = vcmp.lt.s32.totalorder %v877, 17
        %vm1928 = vcmp.lt.s32.totalorder %v878, 17
        %vm1929 = vcmp.lt.s32.totalorder %v879, 17
        %vm1930 = vcmp.lt.s32.totalorder %v880, 17
        %vm1931 = vcmp.lt.s32.totalorder %v881, 17
        %vm1932 = vcmp.lt.s32.totalorder %v882, 17
        %vm1933 = vcmp.lt.s32.totalorder %v883, 17
        %vm1934 = vcmp.lt.s32.totalorder %v884, 17
        %vm1935 = vcmp.lt.s32.totalorder %v885, 17
        %vm1936 = vcmp.lt.s32.totalorder %v886, 17
        %vm1937 = vcmp.lt.s32.totalorder %v887, 17
        %vm1938 = vcmp.lt.s32.totalorder %v888, 17
        %vm1939 = vcmp.lt.s32.totalorder %v889, 17
        %vm1940 = vcmp.lt.s32.totalorder %v890, 17
        %vm1941 = vcmp.lt.s32.totalorder %v891, 17
        %vm1942 = vcmp.lt.s32.totalorder %v892, 17
        %vm1943 = vcmp.lt.s32.totalorder %v893, 17
        %vm1944 = vcmp.lt.s32.totalorder %v894, 17
        %vm1945 = vcmp.lt.s32.totalorder %v895, 17
        %vm1946 = vcmp.lt.s32.totalorder %v896, 17
        %vm1947 = vcmp.lt.s32.totalorder %v897, 17
        %vm1948 = vcmp.lt.s32.totalorder %v898, 17
        %vm1949 = vcmp.lt.s32.totalorder %v899, 17
        %vm1950 = vcmp.lt.s32.totalorder %v900, 17
        %vm1951 = vcmp.lt.s32.totalorder %v901, 17
        %vm1952 = vcmp.lt.s32.totalorder %v902, 17
        %vm1953 = vcmp.lt.s32.totalorder %v903, 17
        %vm1954 = vcmp.lt.s32.totalorder %v904, 17
        %vm1955 = vcmp.lt.s32.totalorder %v905, 17
        %vm1956 = vmand %vm1892, %vm1924
        %vm1957 = vmand %vm1893, %vm1925
        %vm1958 = vmand %vm1894, %vm1926
        %vm1959 = vmand %vm1895, %vm1927
        %vm1960 = vmand %vm1896, %vm1928
        %vm1961 = vmand %vm1897, %vm1929
        %vm1962 = vmand %vm1898, %vm1930
        %vm1963 = vmand %vm1899, %vm1931
        %vm1964 = vmand %vm1900, %vm1932
        %vm1965 = vmand %vm1901, %vm1933
        %vm1966 = vmand %vm1902, %vm1934
        %vm1967 = vmand %vm1903, %vm1935
        %vm1968 = vmand %vm1904, %vm1936
        %vm1969 = vmand %vm1905, %vm1937
        %vm1970 = vmand %vm1906, %vm1938
        %vm1971 = vmand %vm1907, %vm1939
        %vm1972 = vmand %vm1908, %vm1940
        %vm1973 = vmand %vm1909, %vm1941
        %vm1974 = vmand %vm1910, %vm1942
        %vm1975 = vmand %vm1911, %vm1943
        %vm1976 = vmand %vm1912, %vm1944
        %vm1977 = vmand %vm1913, %vm1945
        %vm1978 = vmand %vm1914, %vm1946
        %vm1979 = vmand %vm1915, %vm1947
        %vm1980 = vmand %vm1916, %vm1948
        %vm1981 = vmand %vm1917, %vm1949
        %vm1982 = vmand %vm1918, %vm1950
        %vm1983 = vmand %vm1919, %vm1951
        %vm1984 = vmand %vm1920, %vm1952
        %vm1985 = vmand %vm1921, %vm1953
        %vm1986 = vmand %vm1922, %vm1954
        %vm1987 = vmand %vm1923, %vm1955
        %v1988 = vsel %vm1956, 1, 0
        %v1989 = vsel %vm1957, 1, 0
        %v1990 = vsel %vm1958, 1, 0
        %v1991 = vsel %vm1959, 1, 0
        %v1992 = vsel %vm1960, 1, 0
        %v1993 = vsel %vm1961, 1, 0
        %v1994 = vsel %vm1962, 1, 0
        %v1995 = vsel %vm1963, 1, 0
        %v1996 = vsel %vm1964, 1, 0
        %v1997 = vsel %vm1965, 1, 0
        %v1998 = vsel %vm1966, 1, 0
        %v1999 = vsel %vm1967, 1, 0
        %v2000 = vsel %vm1968, 1, 0
        %v2001 = vsel %vm1969, 1, 0
        %v2002 = vsel %vm1970, 1, 0
        %v2003 = vsel %vm1971, 1, 0
        %v2004 = vsel %vm1972, 1, 0
        %v2005 = vsel %vm1973, 1, 0
        %v2006 = vsel %vm1974, 1, 0
        %v2007 = vsel %vm1975, 1, 0
        %v2008 = vsel %vm1976, 1, 0
        %v2009 = vsel %vm1977, 1, 0
        %v2010 = vsel %vm1978, 1, 0
        %v2011 = vsel %vm1979, 1, 0
        %v2012 = vsel %vm1980, 1, 0
        %v2013 = vsel %vm1981, 1, 0
        %v2014 = vsel %vm1982, 1, 0
        %v2015 = vsel %vm1983, 1, 0
        %v2016 = vsel %vm1984, 1, 0
        %v2017 = vsel %vm1985, 1, 0
        %v2018 = vsel %vm1986, 1, 0
        %v2019 = vsel %vm1987, 1, 0
        %vm2020 = vcmp.eq.s32.totalorder %v1988, 1
        %vm2021 = vcmp.eq.s32.totalorder %v1989, 1
        %vm2022 = vcmp.eq.s32.totalorder %v1990, 1
        %vm2023 = vcmp.eq.s32.totalorder %v1991, 1
        %vm2024 = vcmp.eq.s32.totalorder %v1992, 1
        %vm2025 = vcmp.eq.s32.totalorder %v1993, 1
        %vm2026 = vcmp.eq.s32.totalorder %v1994, 1
        %vm2027 = vcmp.eq.s32.totalorder %v1995, 1
        %vm2028 = vcmp.eq.s32.totalorder %v1996, 1
        %vm2029 = vcmp.eq.s32.totalorder %v1997, 1
        %vm2030 = vcmp.eq.s32.totalorder %v1998, 1
        %vm2031 = vcmp.eq.s32.totalorder %v1999, 1
        %vm2032 = vcmp.eq.s32.totalorder %v2000, 1
        %vm2033 = vcmp.eq.s32.totalorder %v2001, 1
        %vm2034 = vcmp.eq.s32.totalorder %v2002, 1
        %vm2035 = vcmp.eq.s32.totalorder %v2003, 1
        %vm2036 = vcmp.eq.s32.totalorder %v2004, 1
        %vm2037 = vcmp.eq.s32.totalorder %v2005, 1
        %vm2038 = vcmp.eq.s32.totalorder %v2006, 1
        %vm2039 = vcmp.eq.s32.totalorder %v2007, 1
        %vm2040 = vcmp.eq.s32.totalorder %v2008, 1
        %vm2041 = vcmp.eq.s32.totalorder %v2009, 1
        %vm2042 = vcmp.eq.s32.totalorder %v2010, 1
        %vm2043 = vcmp.eq.s32.totalorder %v2011, 1
        %vm2044 = vcmp.eq.s32.totalorder %v2012, 1
        %vm2045 = vcmp.eq.s32.totalorder %v2013, 1
        %vm2046 = vcmp.eq.s32.totalorder %v2014, 1
        %vm2047 = vcmp.eq.s32.totalorder %v2015, 1
        %vm2048 = vcmp.eq.s32.totalorder %v2016, 1
        %vm2049 = vcmp.eq.s32.totalorder %v2017, 1
        %vm2050 = vcmp.eq.s32.totalorder %v2018, 1
        %vm2051 = vcmp.eq.s32.totalorder %v2019, 1
        %v2052 = vsel %vm2020, %v1860, 0.0
        %v2053 = vsel %vm2021, %v1861, 0.0
        %v2054 = vsel %vm2022, %v1862, 0.0
        %v2055 = vsel %vm2023, %v1863, 0.0
        %v2056 = vsel %vm2024, %v1864, 0.0
        %v2057 = vsel %vm2025, %v1865, 0.0
        %v2058 = vsel %vm2026, %v1866, 0.0
        %v2059 = vsel %vm2027, %v1867, 0.0
        %v2060 = vsel %vm2028, %v1868, 0.0
        %v2061 = vsel %vm2029, %v1869, 0.0
        %v2062 = vsel %vm2030, %v1870, 0.0
        %v2063 = vsel %vm2031, %v1871, 0.0
        %v2064 = vsel %vm2032, %v1872, 0.0
        %v2065 = vsel %vm2033, %v1873, 0.0
        %v2066 = vsel %vm2034, %v1874, 0.0
        %v2067 = vsel %vm2035, %v1875, 0.0
        %v2068 = vsel %vm2036, %v1876, 0.0
        %v2069 = vsel %vm2037, %v1877, 0.0
        %v2070 = vsel %vm2038, %v1878, 0.0
        %v2071 = vsel %vm2039, %v1879, 0.0
        %v2072 = vsel %vm2040, %v1880, 0.0
        %v2073 = vsel %vm2041, %v1881, 0.0
        %v2074 = vsel %vm2042, %v1882, 0.0
        %v2075 = vsel %vm2043, %v1883, 0.0
        %v2076 = vsel %vm2044, %v1884, 0.0
        %v2077 = vsel %vm2045, %v1885, 0.0
        %v2078 = vsel %vm2046, %v1886, 0.0
        %v2079 = vsel %vm2047, %v1887, 0.0
        %v2080 = vsel %vm2048, %v1888, 0.0
        %v2081 = vsel %vm2049, %v1889, 0.0
        %v2082 = vsel %vm2050, %v1890, 0.0
        %v2083 = vsel %vm2051, %v1891, 0.0
        %v2084 = vadd.f32 %v2052, 0.0
        %v2085 = vadd.f32 %v2053, 0.0
        %v2086 = vadd.f32 %v2054, 0.0
        %v2087 = vadd.f32 %v2055, 0.0
        %v2088 = vadd.f32 %v2056, 0.0
        %v2089 = vadd.f32 %v2057, 0.0
        %v2090 = vadd.f32 %v2058, 0.0
        %v2091 = vadd.f32 %v2059, 0.0
        %v2092 = vadd.f32 %v2060, 0.0
        %v2093 = vadd.f32 %v2061, 0.0
        %v2094 = vadd.f32 %v2062, 0.0
        %v2095 = vadd.f32 %v2063, 0.0
        %v2096 = vadd.f32 %v2064, 0.0
        %v2097 = vadd.f32 %v2065, 0.0
        %v2098 = vadd.f32 %v2066, 0.0
        %v2099 = vadd.f32 %v2067, 0.0
        %v2100 = vadd.f32 %v2068, 0.0
        %v2101 = vadd.f32 %v2069, 0.0
        %v2102 = vadd.f32 %v2070, 0.0
        %v2103 = vadd.f32 %v2071, 0.0
        %v2104 = vadd.f32 %v2072, 0.0
        %v2105 = vadd.f32 %v2073, 0.0
        %v2106 = vadd.f32 %v2074, 0.0
        %v2107 = vadd.f32 %v2075, 0.0
        %v2108 = vadd.f32 %v2076, 0.0
        %v2109 = vadd.f32 %v2077, 0.0
        %v2110 = vadd.f32 %v2078, 0.0
        %v2111 = vadd.f32 %v2079, 0.0
        %v2112 = vadd.f32 %v2080, 0.0
        %v2113 = vadd.f32 %v2081, 0.0
        %v2114 = vadd.f32 %v2082, 0.0
        %v2115 = vadd.f32 %v2083, 0.0
        %v2116 = vld [vmem:[#allocation2 + $0x1] sm:$0xff]
        %v2117 = vld [vmem:[#allocation2 + $0x9] sm:$0xff]
        %v2118 = vld [vmem:[#allocation2 + $0x11] sm:$0xff]
        %v2119 = vld [vmem:[#allocation2 + $0x19] sm:$0xff]
        %v2120 = vld [vmem:[#allocation2 + $0x21] sm:$0xff]
        %v2121 = vld [vmem:[#allocation2 + $0x29] sm:$0xff]
        %v2122 = vld [vmem:[#allocation2 + $0x31] sm:$0xff]
        %v2123 = vld [vmem:[#allocation2 + $0x39] sm:$0xff]
        %v2124 = vld [vmem:[#allocation2 + $0x41] sm:$0xff]
        %v2125 = vld [vmem:[#allocation2 + $0x49] sm:$0xff]
        %v2126 = vld [vmem:[#allocation2 + $0x51] sm:$0xff]
        %v2127 = vld [vmem:[#allocation2 + $0x59] sm:$0xff]
        %v2128 = vld [vmem:[#allocation2 + $0x61] sm:$0xff]
        %v2129 = vld [vmem:[#allocation2 + $0x69] sm:$0xff]
        %v2130 = vld [vmem:[#allocation2 + $0x71] sm:$0xff]
        %v2131 = vld [vmem:[#allocation2 + $0x79] sm:$0xff]
        %v2132 = vld [vmem:[#allocation2 + $0x81] sm:$0xff]
        %v2133 = vld [vmem:[#allocation2 + $0x89] sm:$0xff]
        %v2134 = vld [vmem:[#allocation2 + $0x91] sm:$0xff]
        %v2135 = vld [vmem:[#allocation2 + $0x99] sm:$0xff]
        %v2136 = vld [vmem:[#allocation2 + $0xa1] sm:$0xff]
        %v2137 = vld [vmem:[#allocation2 + $0xa9] sm:$0xff]
        %v2138 = vld [vmem:[#allocation2 + $0xb1] sm:$0xff]
        %v2139 = vld [vmem:[#allocation2 + $0xb9] sm:$0xff]
        %v2140 = vld [vmem:[#allocation2 + $0xc1] sm:$0xff]
        %v2141 = vld [vmem:[#allocation2 + $0xc9] sm:$0xff]
        %v2142 = vld [vmem:[#allocation2 + $0xd1] sm:$0xff]
        %v2143 = vld [vmem:[#allocation2 + $0xd9] sm:$0xff]
        %v2144 = vld [vmem:[#allocation2 + $0xe1] sm:$0xff]
        %v2145 = vld [vmem:[#allocation2 + $0xe9] sm:$0xff]
        %v2146 = vld [vmem:[#allocation2 + $0xf1] sm:$0xff]
        %v2147 = vld [vmem:[#allocation2 + $0xf9] sm:$0xff]
        %s2148 = scalar_lea.vmem %s3, 4
        %v2149 = vld [vmem:[%s2148] sm:$0xf]
        %v2150 = vld [vmem:[#allocation2 + $0x101] sm:$0xff]
        %v2151 = vld [vmem:[#allocation2 + $0x109] sm:$0xff]
        %s2152 = scalar_lea.vmem %s3, 16
        %v2153 = vld [vmem:[%s2152] sm:$0xf]
        %v2155 = vsel %vm429, %v2118, 0
        %v2158 = vsel %vm429, %v2119, 0
        %v2161 = vsel %vm429, %v2120, 0
        %v2164 = vsel %vm429, %v2121, 0
        %v2167 = vsel %vm429, %v2122, 0
        %v2170 = vsel %vm429, %v2123, 0
        %v2173 = vsel %vm429, %v2124, 0
        %v2176 = vsel %vm429, %v2125, 0
        %v2179 = vsel %vm429, %v2126, 0
        %v2182 = vsel %vm429, %v2127, 0
        %v2185 = vsel %vm429, %v2128, 0
        %v2188 = vsel %vm429, %v2129, 0
        %v2191 = vsel %vm429, %v2130, 0
        %v2194 = vsel %vm429, %v2131, 0
        %v2197 = vsel %vm429, %v2132, 0
        %v2200 = vsel %vm429, %v2133, 0
        %v2203 = vsel %vm429, %v2134, 0
        %v2206 = vsel %vm429, %v2135, 0
        %v2209 = vsel %vm429, %v2136, 0
        %v2212 = vsel %vm429, %v2137, 0
        %v2215 = vsel %vm429, %v2138, 0
        %v2218 = vsel %vm429, %v2139, 0
        %v2221 = vsel %vm429, %v2140, 0
        %v2224 = vsel %vm429, %v2141, 0
        %v2227 = vsel %vm429, %v2142, 0
        %v2230 = vsel %vm429, %v2143, 0
        %v2233 = vsel %vm429, %v2144, 0
        %v2236 = vsel %vm429, %v2145, 0
        %v2239 = vsel %vm429, %v2146, 0
        %v2242 = vsel %vm429, %v2147, 0
        %v2245 = vsel %vm429, %v2150, 0
        %v2248 = vsel %vm429, %v2151, 0
        %v2251 = vsel %vm1039, %v2153, 0
        %2253 = vmatprep.subr.mxu0 0.0
        %2254 = vmatpush1.msra.mxu0 0.0
        %2255 = vmatprep.subr.mxu0 0.0
        %2256 = vmatpush1.msra.mxu0 0.0
        %2257 = vmatprep.subr.mxu0 0.0
        %2258 = vmatpush1.msra.mxu0 0.0
        %2259 = vmatprep.subr.mxu0 0.0
        %2260 = vmatpush1.msra.mxu0 0.0
        %2261 = vmatprep.subr.mxu0 0.0
        %2262 = vmatpush1.msra.mxu0 0.0
        %2263 = vmatprep.subr.mxu0 0.0
        %2264 = vmatpush1.msra.mxu0 0.0
        %2265 = vmatprep.subr.mxu0 0.0
        %2266 = vmatpush1.msra.mxu0 0.0
        %2267 = vmatprep.subr.mxu0 0.0
        %2268 = vmatpush1.msra.mxu0 0.0
        %2269 = vmatprep.subr.mxu0 0.0
        %2270 = vmatpush1.msra.mxu0 0.0
        %2271 = vmatprep.subr.mxu0 0.0
        %2272 = vmatpush1.msra.mxu0 0.0
        %2273 = vmatprep.subr.mxu0 0.0
        %2274 = vmatpush1.msra.mxu0 0.0
        %2275 = vmatprep.subr.mxu0 0.0
        %2276 = vmatpush1.msra.mxu0 0.0
        %2277 = vmatprep.subr.mxu0 0.0
        %2278 = vmatpush1.msra.mxu0 0.0
        %2279 = vmatprep.subr.mxu0 0.0
        %2280 = vmatpush1.msra.mxu0 0.0
        %2281 = vmatprep.subr.mxu0 0.0
        %2282 = vmatpush1.msra.mxu0 0.0
        %2283 = vmatprep.subr.mxu0 0.0
        %2284 = vmatpush1.msra.mxu0 %v2251
        %2285 = vmatprep.subr.mxu0 0.0
        %2286 = vmatpush2.msra.mxu0 0.0
        %2287 = vmatprep.subr.mxu0 0.0
        %2288 = vmatpush2.msra.mxu0 0.0
        %2289 = vmatprep.subr.mxu0 0.0
        %2290 = vmatpush2.msra.mxu0 0.0
        %2291 = vmatprep.subr.mxu0 0.0
        %2292 = vmatpush2.msra.mxu0 0.0
        %2293 = vmatprep.subr.mxu0 0.0
        %2294 = vmatpush2.msra.mxu0 0.0
        %2295 = vmatprep.subr.mxu0 0.0
        %2296 = vmatpush2.msra.mxu0 0.0
        %2297 = vmatprep.subr.mxu0 0.0
        %2298 = vmatpush2.msra.mxu0 0.0
        %2299 = vmatprep.subr.mxu0 0.0
        %2300 = vmatpush2.msra.mxu0 0.0
        %2301 = vmatprep.subr.mxu0 0.0
        %2302 = vmatpush2.msra.mxu0 0.0
        %2303 = vmatprep.subr.mxu0 0.0
        %2304 = vmatpush2.msra.mxu0 0.0
        %2305 = vmatprep.subr.mxu0 0.0
        %2306 = vmatpush2.msra.mxu0 0.0
        %2307 = vmatprep.subr.mxu0 0.0
        %2308 = vmatpush2.msra.mxu0 0.0
        %2309 = vmatprep.subr.mxu0 0.0
        %2310 = vmatpush2.msra.mxu0 0.0
        %2311 = vmatprep.subr.mxu0 0.0
        %2312 = vmatpush2.msra.mxu0 0.0
        %2313 = vmatprep.subr.mxu0 0.0
        %2314 = vmatpush2.msra.mxu0 0.0
        %2315 = vmatprep.subr.mxu0 0.0
        %2316 = vmatpush2.msra.mxu0 0.0
        %2317 = vmatprep.mubr.f32.mxu0 0.0
        %2318 = vmatmul.mubr.f32.gmra.mxu0 %v2155
        %v2319 = vpop.f32.mrf.mxu0
        %v2320 = vadd.f32 0.0, %v2319
        %v2321 = vpop.f32.mrf.mxu0
        %2322 = vmatprep.mubr.f32.mxu0 0.0
        %2323 = vmatmul.mubr.f32.gmra.mxu0 %v2158
        %v2324 = vpop.f32.mrf.mxu0
        %v2325 = vadd.f32 0.0, %v2324
        %v2326 = vpop.f32.mrf.mxu0
        %2327 = vmatprep.mubr.f32.mxu0 0.0
        %2328 = vmatmul.mubr.f32.gmra.mxu0 %v2161
        %v2329 = vpop.f32.mrf.mxu0
        %v2330 = vadd.f32 0.0, %v2329
        %v2331 = vpop.f32.mrf.mxu0
        %2332 = vmatprep.mubr.f32.mxu0 0.0
        %2333 = vmatmul.mubr.f32.gmra.mxu0 %v2164
        %v2334 = vpop.f32.mrf.mxu0
        %v2335 = vadd.f32 0.0, %v2334
        %v2336 = vpop.f32.mrf.mxu0
        %2337 = vmatprep.mubr.f32.mxu0 0.0
        %2338 = vmatmul.mubr.f32.gmra.mxu0 %v2167
        %v2339 = vpop.f32.mrf.mxu0
        %v2340 = vadd.f32 0.0, %v2339
        %v2341 = vpop.f32.mrf.mxu0
        %2342 = vmatprep.mubr.f32.mxu0 0.0
        %2343 = vmatmul.mubr.f32.gmra.mxu0 %v2170
        %v2344 = vpop.f32.mrf.mxu0
        %v2345 = vadd.f32 0.0, %v2344
        %v2346 = vpop.f32.mrf.mxu0
        %2347 = vmatprep.mubr.f32.mxu0 0.0
        %2348 = vmatmul.mubr.f32.gmra.mxu0 %v2173
        %v2349 = vpop.f32.mrf.mxu0
        %v2350 = vadd.f32 0.0, %v2349
        %v2351 = vpop.f32.mrf.mxu0
        %2352 = vmatprep.mubr.f32.mxu0 0.0
        %2353 = vmatmul.mubr.f32.gmra.mxu0 %v2176
        %v2354 = vpop.f32.mrf.mxu0
        %v2355 = vadd.f32 0.0, %v2354
        %v2356 = vpop.f32.mrf.mxu0
        %2357 = vmatprep.mubr.f32.mxu0 0.0
        %2358 = vmatmul.mubr.f32.gmra.mxu0 %v2179
        %v2359 = vpop.f32.mrf.mxu0
        %v2360 = vadd.f32 0.0, %v2359
        %v2361 = vpop.f32.mrf.mxu0
        %2362 = vmatprep.mubr.f32.mxu0 0.0
        %2363 = vmatmul.mubr.f32.gmra.mxu0 %v2182
        %v2364 = vpop.f32.mrf.mxu0
        %v2365 = vadd.f32 0.0, %v2364
        %v2366 = vpop.f32.mrf.mxu0
        %2367 = vmatprep.mubr.f32.mxu0 0.0
        %2368 = vmatmul.mubr.f32.gmra.mxu0 %v2185
        %v2369 = vpop.f32.mrf.mxu0
        %v2370 = vadd.f32 0.0, %v2369
        %v2371 = vpop.f32.mrf.mxu0
        %2372 = vmatprep.mubr.f32.mxu0 0.0
        %2373 = vmatmul.mubr.f32.gmra.mxu0 %v2188
        %v2374 = vpop.f32.mrf.mxu0
        %v2375 = vadd.f32 0.0, %v2374
        %v2376 = vpop.f32.mrf.mxu0
        %2377 = vmatprep.mubr.f32.mxu0 0.0
        %2378 = vmatmul.mubr.f32.gmra.mxu0 %v2191
        %v2379 = vpop.f32.mrf.mxu0
        %v2380 = vadd.f32 0.0, %v2379
        %v2381 = vpop.f32.mrf.mxu0
        %2382 = vmatprep.mubr.f32.mxu0 0.0
        %2383 = vmatmul.mubr.f32.gmra.mxu0 %v2194
        %v2384 = vpop.f32.mrf.mxu0
        %v2385 = vadd.f32 0.0, %v2384
        %v2386 = vpop.f32.mrf.mxu0
        %2387 = vmatprep.mubr.f32.mxu0 0.0
        %2388 = vmatmul.mubr.f32.gmra.mxu0 %v2197
        %v2389 = vpop.f32.mrf.mxu0
        %v2390 = vadd.f32 0.0, %v2389
        %v2391 = vpop.f32.mrf.mxu0
        %2392 = vmatprep.mubr.f32.mxu0 0.0
        %2393 = vmatmul.mubr.f32.gmra.mxu0 %v2200
        %v2394 = vpop.f32.mrf.mxu0
        %v2395 = vadd.f32 0.0, %v2394
        %v2396 = vpop.f32.mrf.mxu0
        %2397 = vmatprep.mubr.f32.mxu0 0.0
        %2398 = vmatmul.mubr.f32.gmra.mxu0 %v2203
        %v2399 = vpop.f32.mrf.mxu0
        %v2400 = vadd.f32 0.0, %v2399
        %v2401 = vpop.f32.mrf.mxu0
        %2402 = vmatprep.mubr.f32.mxu0 0.0
        %2403 = vmatmul.mubr.f32.gmra.mxu0 %v2206
        %v2404 = vpop.f32.mrf.mxu0
        %v2405 = vadd.f32 0.0, %v2404
        %v2406 = vpop.f32.mrf.mxu0
        %2407 = vmatprep.mubr.f32.mxu0 0.0
        %2408 = vmatmul.mubr.f32.gmra.mxu0 %v2209
        %v2409 = vpop.f32.mrf.mxu0
        %v2410 = vadd.f32 0.0, %v2409
        %v2411 = vpop.f32.mrf.mxu0
        %2412 = vmatprep.mubr.f32.mxu0 0.0
        %2413 = vmatmul.mubr.f32.gmra.mxu0 %v2212
        %v2414 = vpop.f32.mrf.mxu0
        %v2415 = vadd.f32 0.0, %v2414
        %v2416 = vpop.f32.mrf.mxu0
        %2417 = vmatprep.mubr.f32.mxu0 0.0
        %2418 = vmatmul.mubr.f32.gmra.mxu0 %v2215
        %v2419 = vpop.f32.mrf.mxu0
        %v2420 = vadd.f32 0.0, %v2419
        %v2421 = vpop.f32.mrf.mxu0
        %2422 = vmatprep.mubr.f32.mxu0 0.0
        %2423 = vmatmul.mubr.f32.gmra.mxu0 %v2218
        %v2424 = vpop.f32.mrf.mxu0
        %v2425 = vadd.f32 0.0, %v2424
        %v2426 = vpop.f32.mrf.mxu0
        %2427 = vmatprep.mubr.f32.mxu0 0.0
        %2428 = vmatmul.mubr.f32.gmra.mxu0 %v2221
        %v2429 = vpop.f32.mrf.mxu0
        %v2430 = vadd.f32 0.0, %v2429
        %v2431 = vpop.f32.mrf.mxu0
        %2432 = vmatprep.mubr.f32.mxu0 0.0
        %2433 = vmatmul.mubr.f32.gmra.mxu0 %v2224
        %v2434 = vpop.f32.mrf.mxu0
        %v2435 = vadd.f32 0.0, %v2434
        %v2436 = vpop.f32.mrf.mxu0
        %2437 = vmatprep.mubr.f32.mxu0 0.0
        %2438 = vmatmul.mubr.f32.gmra.mxu0 %v2227
        %v2439 = vpop.f32.mrf.mxu0
        %v2440 = vadd.f32 0.0, %v2439
        %v2441 = vpop.f32.mrf.mxu0
        %2442 = vmatprep.mubr.f32.mxu0 0.0
        %2443 = vmatmul.mubr.f32.gmra.mxu0 %v2230
        %v2444 = vpop.f32.mrf.mxu0
        %v2445 = vadd.f32 0.0, %v2444
        %v2446 = vpop.f32.mrf.mxu0
        %2447 = vmatprep.mubr.f32.mxu0 0.0
        %2448 = vmatmul.mubr.f32.gmra.mxu0 %v2233
        %v2449 = vpop.f32.mrf.mxu0
        %v2450 = vadd.f32 0.0, %v2449
        %v2451 = vpop.f32.mrf.mxu0
        %2452 = vmatprep.mubr.f32.mxu0 0.0
        %2453 = vmatmul.mubr.f32.gmra.mxu0 %v2236
        %v2454 = vpop.f32.mrf.mxu0
        %v2455 = vadd.f32 0.0, %v2454
        %v2456 = vpop.f32.mrf.mxu0
        %2457 = vmatprep.mubr.f32.mxu0 0.0
        %2458 = vmatmul.mubr.f32.gmra.mxu0 %v2239
        %v2459 = vpop.f32.mrf.mxu0
        %v2460 = vadd.f32 0.0, %v2459
        %v2461 = vpop.f32.mrf.mxu0
        %2462 = vmatprep.mubr.f32.mxu0 0.0
        %2463 = vmatmul.mubr.f32.gmra.mxu0 %v2242
        %v2464 = vpop.f32.mrf.mxu0
        %v2465 = vadd.f32 0.0, %v2464
        %v2466 = vpop.f32.mrf.mxu0
        %2467 = vmatprep.mubr.f32.mxu0 0.0
        %2468 = vmatmul.mubr.f32.gmra.mxu0 %v2245
        %v2469 = vpop.f32.mrf.mxu0
        %v2470 = vadd.f32 0.0, %v2469
        %v2471 = vpop.f32.mrf.mxu0
        %2472 = vmatprep.mubr.f32.mxu0 0.0
        %2473 = vmatmul.mubr.f32.gmra.mxu0 %v2248
        %v2474 = vpop.f32.mrf.mxu0
        %v2475 = vadd.f32 0.0, %v2474
        %v2476 = vpop.f32.mrf.mxu0
        %2477 = vdwg.mxu0
        %v2479 = vsel %vm429, %v2116, 0
        %v2482 = vsel %vm429, %v2117, 0
        %v2485 = vsel %vm1039, %v2149, 0
        %2487 = vmatprep.subr.mxu0 0.0
        %2488 = vmatpush1.msra.mxu0 0.0
        %2489 = vmatprep.subr.mxu0 0.0
        %2490 = vmatpush1.msra.mxu0 0.0
        %2491 = vmatprep.subr.mxu0 0.0
        %2492 = vmatpush1.msra.mxu0 0.0
        %2493 = vmatprep.subr.mxu0 0.0
        %2494 = vmatpush1.msra.mxu0 0.0
        %2495 = vmatprep.subr.mxu0 0.0
        %2496 = vmatpush1.msra.mxu0 0.0
        %2497 = vmatprep.subr.mxu0 0.0
        %2498 = vmatpush1.msra.mxu0 0.0
        %2499 = vmatprep.subr.mxu0 0.0
        %2500 = vmatpush1.msra.mxu0 0.0
        %2501 = vmatprep.subr.mxu0 0.0
        %2502 = vmatpush1.msra.mxu0 0.0
        %2503 = vmatprep.subr.mxu0 0.0
        %2504 = vmatpush1.msra.mxu0 0.0
        %2505 = vmatprep.subr.mxu0 0.0
        %2506 = vmatpush1.msra.mxu0 0.0
        %2507 = vmatprep.subr.mxu0 0.0
        %2508 = vmatpush1.msra.mxu0 0.0
        %2509 = vmatprep.subr.mxu0 0.0
        %2510 = vmatpush1.msra.mxu0 0.0
        %2511 = vmatprep.subr.mxu0 0.0
        %2512 = vmatpush1.msra.mxu0 0.0
        %2513 = vmatprep.subr.mxu0 0.0
        %2514 = vmatpush1.msra.mxu0 0.0
        %2515 = vmatprep.subr.mxu0 0.0
        %2516 = vmatpush1.msra.mxu0 0.0
        %2517 = vmatprep.subr.mxu0 0.0
        %2518 = vmatpush1.msra.mxu0 %v2485
        %2519 = vmatprep.subr.mxu0 0.0
        %2520 = vmatpush2.msra.mxu0 0.0
        %2521 = vmatprep.subr.mxu0 0.0
        %2522 = vmatpush2.msra.mxu0 0.0
        %2523 = vmatprep.subr.mxu0 0.0
        %2524 = vmatpush2.msra.mxu0 0.0
        %2525 = vmatprep.subr.mxu0 0.0
        %2526 = vmatpush2.msra.mxu0 0.0
        %2527 = vmatprep.subr.mxu0 0.0
        %2528 = vmatpush2.msra.mxu0 0.0
        %2529 = vmatprep.subr.mxu0 0.0
        %2530 = vmatpush2.msra.mxu0 0.0
        %2531 = vmatprep.subr.mxu0 0.0
        %2532 = vmatpush2.msra.mxu0 0.0
        %2533 = vmatprep.subr.mxu0 0.0
        %2534 = vmatpush2.msra.mxu0 0.0
        %2535 = vmatprep.subr.mxu0 0.0
        %2536 = vmatpush2.msra.mxu0 0.0
        %2537 = vmatprep.subr.mxu0 0.0
        %2538 = vmatpush2.msra.mxu0 0.0
        %2539 = vmatprep.subr.mxu0 0.0
        %2540 = vmatpush2.msra.mxu0 0.0
        %2541 = vmatprep.subr.mxu0 0.0
        %2542 = vmatpush2.msra.mxu0 0.0
        %2543 = vmatprep.subr.mxu0 0.0
        %2544 = vmatpush2.msra.mxu0 0.0
        %2545 = vmatprep.subr.mxu0 0.0
        %2546 = vmatpush2.msra.mxu0 0.0
        %2547 = vmatprep.subr.mxu0 0.0
        %2548 = vmatpush2.msra.mxu0 0.0
        %2549 = vmatprep.subr.mxu0 0.0
        %2550 = vmatpush2.msra.mxu0 0.0
        %2551 = vmatprep.mubr.f32.mxu0 0.0
        %2552 = vmatmul.mubr.f32.gmra.mxu0 %v2479
        %v2553 = vpop.f32.mrf.mxu0
        %v2554 = vadd.f32 %v2320, %v2553
        %v2555 = vpop.f32.mrf.mxu0
        %2556 = vmatprep.mubr.f32.mxu0 0.0
        %2557 = vmatmul.mubr.f32.gmra.mxu0 %v2482
        %v2558 = vpop.f32.mrf.mxu0
        %v2559 = vadd.f32 %v2325, %v2558
        %v2560 = vpop.f32.mrf.mxu0
        %2561 = vmatprep.mubr.f32.mxu0 0.0
        %2562 = vmatmul.mubr.f32.gmra.mxu0 %v2155
        %v2563 = vpop.f32.mrf.mxu0
        %v2564 = vadd.f32 %v2330, %v2563
        %v2565 = vpop.f32.mrf.mxu0
        %2566 = vmatprep.mubr.f32.mxu0 0.0
        %2567 = vmatmul.mubr.f32.gmra.mxu0 %v2158
        %v2568 = vpop.f32.mrf.mxu0
        %v2569 = vadd.f32 %v2335, %v2568
        %v2570 = vpop.f32.mrf.mxu0
        %2571 = vmatprep.mubr.f32.mxu0 0.0
        %2572 = vmatmul.mubr.f32.gmra.mxu0 %v2161
        %v2573 = vpop.f32.mrf.mxu0
        %v2574 = vadd.f32 %v2340, %v2573
        %v2575 = vpop.f32.mrf.mxu0
        %2576 = vmatprep.mubr.f32.mxu0 0.0
        %2577 = vmatmul.mubr.f32.gmra.mxu0 %v2164
        %v2578 = vpop.f32.mrf.mxu0
        %v2579 = vadd.f32 %v2345, %v2578
        %v2580 = vpop.f32.mrf.mxu0
        %2581 = vmatprep.mubr.f32.mxu0 0.0
        %2582 = vmatmul.mubr.f32.gmra.mxu0 %v2167
        %v2583 = vpop.f32.mrf.mxu0
        %v2584 = vadd.f32 %v2350, %v2583
        %v2585 = vpop.f32.mrf.mxu0
        %2586 = vmatprep.mubr.f32.mxu0 0.0
        %2587 = vmatmul.mubr.f32.gmra.mxu0 %v2170
        %v2588 = vpop.f32.mrf.mxu0
        %v2589 = vadd.f32 %v2355, %v2588
        %v2590 = vpop.f32.mrf.mxu0
        %2591 = vmatprep.mubr.f32.mxu0 0.0
        %2592 = vmatmul.mubr.f32.gmra.mxu0 %v2173
        %v2593 = vpop.f32.mrf.mxu0
        %v2594 = vadd.f32 %v2360, %v2593
        %v2595 = vpop.f32.mrf.mxu0
        %2596 = vmatprep.mubr.f32.mxu0 0.0
        %2597 = vmatmul.mubr.f32.gmra.mxu0 %v2176
        %v2598 = vpop.f32.mrf.mxu0
        %v2599 = vadd.f32 %v2365, %v2598
        %v2600 = vpop.f32.mrf.mxu0
        %2601 = vmatprep.mubr.f32.mxu0 0.0
        %2602 = vmatmul.mubr.f32.gmra.mxu0 %v2179
        %v2603 = vpop.f32.mrf.mxu0
        %v2604 = vadd.f32 %v2370, %v2603
        %v2605 = vpop.f32.mrf.mxu0
        %2606 = vmatprep.mubr.f32.mxu0 0.0
        %2607 = vmatmul.mubr.f32.gmra.mxu0 %v2182
        %v2608 = vpop.f32.mrf.mxu0
        %v2609 = vadd.f32 %v2375, %v2608
        %v2610 = vpop.f32.mrf.mxu0
        %2611 = vmatprep.mubr.f32.mxu0 0.0
        %2612 = vmatmul.mubr.f32.gmra.mxu0 %v2185
        %v2613 = vpop.f32.mrf.mxu0
        %v2614 = vadd.f32 %v2380, %v2613
        %v2615 = vpop.f32.mrf.mxu0
        %2616 = vmatprep.mubr.f32.mxu0 0.0
        %2617 = vmatmul.mubr.f32.gmra.mxu0 %v2188
        %v2618 = vpop.f32.mrf.mxu0
        %v2619 = vadd.f32 %v2385, %v2618
        %v2620 = vpop.f32.mrf.mxu0
        %2621 = vmatprep.mubr.f32.mxu0 0.0
        %2622 = vmatmul.mubr.f32.gmra.mxu0 %v2191
        %v2623 = vpop.f32.mrf.mxu0
        %v2624 = vadd.f32 %v2390, %v2623
        %v2625 = vpop.f32.mrf.mxu0
        %2626 = vmatprep.mubr.f32.mxu0 0.0
        %2627 = vmatmul.mubr.f32.gmra.mxu0 %v2194
        %v2628 = vpop.f32.mrf.mxu0
        %v2629 = vadd.f32 %v2395, %v2628
        %v2630 = vpop.f32.mrf.mxu0
        %2631 = vmatprep.mubr.f32.mxu0 0.0
        %2632 = vmatmul.mubr.f32.gmra.mxu0 %v2197
        %v2633 = vpop.f32.mrf.mxu0
        %v2634 = vadd.f32 %v2400, %v2633
        %v2635 = vpop.f32.mrf.mxu0
        %2636 = vmatprep.mubr.f32.mxu0 0.0
        %2637 = vmatmul.mubr.f32.gmra.mxu0 %v2200
        %v2638 = vpop.f32.mrf.mxu0
        %v2639 = vadd.f32 %v2405, %v2638
        %v2640 = vpop.f32.mrf.mxu0
        %2641 = vmatprep.mubr.f32.mxu0 0.0
        %2642 = vmatmul.mubr.f32.gmra.mxu0 %v2203
        %v2643 = vpop.f32.mrf.mxu0
        %v2644 = vadd.f32 %v2410, %v2643
        %v2645 = vpop.f32.mrf.mxu0
        %2646 = vmatprep.mubr.f32.mxu0 0.0
        %2647 = vmatmul.mubr.f32.gmra.mxu0 %v2206
        %v2648 = vpop.f32.mrf.mxu0
        %v2649 = vadd.f32 %v2415, %v2648
        %v2650 = vpop.f32.mrf.mxu0
        %2651 = vmatprep.mubr.f32.mxu0 0.0
        %2652 = vmatmul.mubr.f32.gmra.mxu0 %v2209
        %v2653 = vpop.f32.mrf.mxu0
        %v2654 = vadd.f32 %v2420, %v2653
        %v2655 = vpop.f32.mrf.mxu0
        %2656 = vmatprep.mubr.f32.mxu0 0.0
        %2657 = vmatmul.mubr.f32.gmra.mxu0 %v2212
        %v2658 = vpop.f32.mrf.mxu0
        %v2659 = vadd.f32 %v2425, %v2658
        %v2660 = vpop.f32.mrf.mxu0
        %2661 = vmatprep.mubr.f32.mxu0 0.0
        %2662 = vmatmul.mubr.f32.gmra.mxu0 %v2215
        %v2663 = vpop.f32.mrf.mxu0
        %v2664 = vadd.f32 %v2430, %v2663
        %v2665 = vpop.f32.mrf.mxu0
        %2666 = vmatprep.mubr.f32.mxu0 0.0
        %2667 = vmatmul.mubr.f32.gmra.mxu0 %v2218
        %v2668 = vpop.f32.mrf.mxu0
        %v2669 = vadd.f32 %v2435, %v2668
        %v2670 = vpop.f32.mrf.mxu0
        %2671 = vmatprep.mubr.f32.mxu0 0.0
        %2672 = vmatmul.mubr.f32.gmra.mxu0 %v2221
        %v2673 = vpop.f32.mrf.mxu0
        %v2674 = vadd.f32 %v2440, %v2673
        %v2675 = vpop.f32.mrf.mxu0
        %2676 = vmatprep.mubr.f32.mxu0 0.0
        %2677 = vmatmul.mubr.f32.gmra.mxu0 %v2224
        %v2678 = vpop.f32.mrf.mxu0
        %v2679 = vadd.f32 %v2445, %v2678
        %v2680 = vpop.f32.mrf.mxu0
        %2681 = vmatprep.mubr.f32.mxu0 0.0
        %2682 = vmatmul.mubr.f32.gmra.mxu0 %v2227
        %v2683 = vpop.f32.mrf.mxu0
        %v2684 = vadd.f32 %v2450, %v2683
        %v2685 = vpop.f32.mrf.mxu0
        %2686 = vmatprep.mubr.f32.mxu0 0.0
        %2687 = vmatmul.mubr.f32.gmra.mxu0 %v2230
        %v2688 = vpop.f32.mrf.mxu0
        %v2689 = vadd.f32 %v2455, %v2688
        %v2690 = vpop.f32.mrf.mxu0
        %2691 = vmatprep.mubr.f32.mxu0 0.0
        %2692 = vmatmul.mubr.f32.gmra.mxu0 %v2233
        %v2693 = vpop.f32.mrf.mxu0
        %v2694 = vadd.f32 %v2460, %v2693
        %v2695 = vpop.f32.mrf.mxu0
        %2696 = vmatprep.mubr.f32.mxu0 0.0
        %2697 = vmatmul.mubr.f32.gmra.mxu0 %v2236
        %v2698 = vpop.f32.mrf.mxu0
        %v2699 = vadd.f32 %v2465, %v2698
        %v2700 = vpop.f32.mrf.mxu0
        %2701 = vmatprep.mubr.f32.mxu0 0.0
        %2702 = vmatmul.mubr.f32.gmra.mxu0 %v2239
        %v2703 = vpop.f32.mrf.mxu0
        %v2704 = vadd.f32 %v2470, %v2703
        %v2705 = vpop.f32.mrf.mxu0
        %2706 = vmatprep.mubr.f32.mxu0 0.0
        %2707 = vmatmul.mubr.f32.gmra.mxu0 %v2242
        %v2708 = vpop.f32.mrf.mxu0
        %v2709 = vadd.f32 %v2475, %v2708
        %v2710 = vpop.f32.mrf.mxu0
        %2711 = vdwg.mxu0
        %v2712 = vld [vmem:[#allocation2 + $0x21] sm:$0xff]
        %v2713 = vld [vmem:[#allocation2 + $0x29] sm:$0xff]
        %v2714 = vld [vmem:[#allocation2 + $0x31] sm:$0xff]
        %v2715 = vld [vmem:[#allocation2 + $0x39] sm:$0xff]
        %v2716 = vld [vmem:[#allocation2 + $0x41] sm:$0xff]
        %v2717 = vld [vmem:[#allocation2 + $0x49] sm:$0xff]
        %v2718 = vld [vmem:[#allocation2 + $0x51] sm:$0xff]
        %v2719 = vld [vmem:[#allocation2 + $0x59] sm:$0xff]
        %v2720 = vld [vmem:[#allocation2 + $0x61] sm:$0xff]
        %v2721 = vld [vmem:[#allocation2 + $0x69] sm:$0xff]
        %v2722 = vld [vmem:[#allocation2 + $0x71] sm:$0xff]
        %v2723 = vld [vmem:[#allocation2 + $0x79] sm:$0xff]
        %v2724 = vld [vmem:[#allocation2 + $0x81] sm:$0xff]
        %v2725 = vld [vmem:[#allocation2 + $0x89] sm:$0xff]
        %v2726 = vld [vmem:[#allocation2 + $0x91] sm:$0xff]
        %v2727 = vld [vmem:[#allocation2 + $0x99] sm:$0xff]
        %v2728 = vld [vmem:[#allocation2 + $0xa1] sm:$0xff]
        %v2729 = vld [vmem:[#allocation2 + $0xa9] sm:$0xff]
        %v2730 = vld [vmem:[#allocation2 + $0xb1] sm:$0xff]
        %v2731 = vld [vmem:[#allocation2 + $0xb9] sm:$0xff]
        %v2732 = vld [vmem:[#allocation2 + $0xc1] sm:$0xff]
        %v2733 = vld [vmem:[#allocation2 + $0xc9] sm:$0xff]
        %v2734 = vld [vmem:[#allocation2 + $0xd1] sm:$0xff]
        %v2735 = vld [vmem:[#allocation2 + $0xd9] sm:$0xff]
        %v2736 = vld [vmem:[#allocation2 + $0xe1] sm:$0xff]
        %v2737 = vld [vmem:[#allocation2 + $0xe9] sm:$0xff]
        %v2738 = vld [vmem:[#allocation2 + $0xf1] sm:$0xff]
        %v2739 = vld [vmem:[#allocation2 + $0xf9] sm:$0xff]
        %v2740 = vld [vmem:[#allocation2 + $0x101] sm:$0xff]
        %v2741 = vld [vmem:[#allocation2 + $0x109] sm:$0xff]
        %v2742 = vld [vmem:[#allocation2 + $0x111] sm:$0xff]
        %v2743 = vld [vmem:[#allocation2 + $0x119] sm:$0xff]
        %s2744 = scalar_lea.vmem %s3, 28
        %v2745 = vld [vmem:[%s2744] sm:$0xf]
        %v2747 = vsel %vm429, %v2712, 0
        %v2750 = vsel %vm429, %v2713, 0
        %v2753 = vsel %vm429, %v2714, 0
        %v2756 = vsel %vm429, %v2715, 0
        %v2759 = vsel %vm429, %v2716, 0
        %v2762 = vsel %vm429, %v2717, 0
        %v2765 = vsel %vm429, %v2718, 0
        %v2768 = vsel %vm429, %v2719, 0
        %v2771 = vsel %vm429, %v2720, 0
        %v2774 = vsel %vm429, %v2721, 0
        %v2777 = vsel %vm429, %v2722, 0
        %v2780 = vsel %vm429, %v2723, 0
        %v2783 = vsel %vm429, %v2724, 0
        %v2786 = vsel %vm429, %v2725, 0
        %v2789 = vsel %vm429, %v2726, 0
        %v2792 = vsel %vm429, %v2727, 0
        %v2795 = vsel %vm429, %v2728, 0
        %v2798 = vsel %vm429, %v2729, 0
        %v2801 = vsel %vm429, %v2730, 0
        %v2804 = vsel %vm429, %v2731, 0
        %v2807 = vsel %vm429, %v2732, 0
        %v2810 = vsel %vm429, %v2733, 0
        %v2813 = vsel %vm429, %v2734, 0
        %v2816 = vsel %vm429, %v2735, 0
        %v2819 = vsel %vm429, %v2736, 0
        %v2822 = vsel %vm429, %v2737, 0
        %v2825 = vsel %vm429, %v2738, 0
        %v2828 = vsel %vm429, %v2739, 0
        %v2831 = vsel %vm429, %v2740, 0
        %v2834 = vsel %vm429, %v2741, 0
        %v2837 = vsel %vm429, %v2742, 0
        %v2840 = vsel %vm429, %v2743, 0
        %v2843 = vsel %vm1039, %v2745, 0
        %2845 = vmatprep.subr.mxu0 0.0
        %2846 = vmatpush1.msra.mxu0 0.0
        %2847 = vmatprep.subr.mxu0 0.0
        %2848 = vmatpush1.msra.mxu0 0.0
        %2849 = vmatprep.subr.mxu0 0.0
        %2850 = vmatpush1.msra.mxu0 0.0
        %2851 = vmatprep.subr.mxu0 0.0
        %2852 = vmatpush1.msra.mxu0 0.0
        %2853 = vmatprep.subr.mxu0 0.0
        %2854 = vmatpush1.msra.mxu0 0.0
        %2855 = vmatprep.subr.mxu0 0.0
        %2856 = vmatpush1.msra.mxu0 0.0
        %2857 = vmatprep.subr.mxu0 0.0
        %2858 = vmatpush1.msra.mxu0 0.0
        %2859 = vmatprep.subr.mxu0 0.0
        %2860 = vmatpush1.msra.mxu0 0.0
        %2861 = vmatprep.subr.mxu0 0.0
        %2862 = vmatpush1.msra.mxu0 0.0
        %2863 = vmatprep.subr.mxu0 0.0
        %2864 = vmatpush1.msra.mxu0 0.0
        %2865 = vmatprep.subr.mxu0 0.0
        %2866 = vmatpush1.msra.mxu0 0.0
        %2867 = vmatprep.subr.mxu0 0.0
        %2868 = vmatpush1.msra.mxu0 0.0
        %2869 = vmatprep.subr.mxu0 0.0
        %2870 = vmatpush1.msra.mxu0 0.0
        %2871 = vmatprep.subr.mxu0 0.0
        %2872 = vmatpush1.msra.mxu0 0.0
        %2873 = vmatprep.subr.mxu0 0.0
        %2874 = vmatpush1.msra.mxu0 0.0
        %2875 = vmatprep.subr.mxu0 0.0
        %2876 = vmatpush1.msra.mxu0 %v2843
        %2877 = vmatprep.subr.mxu0 0.0
        %2878 = vmatpush2.msra.mxu0 0.0
        %2879 = vmatprep.subr.mxu0 0.0
        %2880 = vmatpush2.msra.mxu0 0.0
        %2881 = vmatprep.subr.mxu0 0.0
        %2882 = vmatpush2.msra.mxu0 0.0
        %2883 = vmatprep.subr.mxu0 0.0
        %2884 = vmatpush2.msra.mxu0 0.0
        %2885 = vmatprep.subr.mxu0 0.0
        %2886 = vmatpush2.msra.mxu0 0.0
        %2887 = vmatprep.subr.mxu0 0.0
        %2888 = vmatpush2.msra.mxu0 0.0
        %2889 = vmatprep.subr.mxu0 0.0
        %2890 = vmatpush2.msra.mxu0 0.0
        %2891 = vmatprep.subr.mxu0 0.0
        %2892 = vmatpush2.msra.mxu0 0.0
        %2893 = vmatprep.subr.mxu0 0.0
        %2894 = vmatpush2.msra.mxu0 0.0
        %2895 = vmatprep.subr.mxu0 0.0
        %2896 = vmatpush2.msra.mxu0 0.0
        %2897 = vmatprep.subr.mxu0 0.0
        %2898 = vmatpush2.msra.mxu0 0.0
        %2899 = vmatprep.subr.mxu0 0.0
        %2900 = vmatpush2.msra.mxu0 0.0
        %2901 = vmatprep.subr.mxu0 0.0
        %2902 = vmatpush2.msra.mxu0 0.0
        %2903 = vmatprep.subr.mxu0 0.0
        %2904 = vmatpush2.msra.mxu0 0.0
        %2905 = vmatprep.subr.mxu0 0.0
        %2906 = vmatpush2.msra.mxu0 0.0
        %2907 = vmatprep.subr.mxu0 0.0
        %2908 = vmatpush2.msra.mxu0 0.0
        %2909 = vmatprep.mubr.f32.mxu0 0.0
        %2910 = vmatmul.mubr.f32.gmra.mxu0 %v2747
        %v2911 = vpop.f32.mrf.mxu0
        %v2912 = vadd.f32 0.0, %v2911
        %v2913 = vpop.f32.mrf.mxu0
        %2914 = vmatprep.mubr.f32.mxu0 0.0
        %2915 = vmatmul.mubr.f32.gmra.mxu0 %v2750
        %v2916 = vpop.f32.mrf.mxu0
        %v2917 = vadd.f32 0.0, %v2916
        %v2918 = vpop.f32.mrf.mxu0
        %2919 = vmatprep.mubr.f32.mxu0 0.0
        %2920 = vmatmul.mubr.f32.gmra.mxu0 %v2753
        %v2921 = vpop.f32.mrf.mxu0
        %v2922 = vadd.f32 0.0, %v2921
        %v2923 = vpop.f32.mrf.mxu0
        %2924 = vmatprep.mubr.f32.mxu0 0.0
        %2925 = vmatmul.mubr.f32.gmra.mxu0 %v2756
        %v2926 = vpop.f32.mrf.mxu0
        %v2927 = vadd.f32 0.0, %v2926
        %v2928 = vpop.f32.mrf.mxu0
        %2929 = vmatprep.mubr.f32.mxu0 0.0
        %2930 = vmatmul.mubr.f32.gmra.mxu0 %v2759
        %v2931 = vpop.f32.mrf.mxu0
        %v2932 = vadd.f32 0.0, %v2931
        %v2933 = vpop.f32.mrf.mxu0
        %2934 = vmatprep.mubr.f32.mxu0 0.0
        %2935 = vmatmul.mubr.f32.gmra.mxu0 %v2762
        %v2936 = vpop.f32.mrf.mxu0
        %v2937 = vadd.f32 0.0, %v2936
        %v2938 = vpop.f32.mrf.mxu0
        %2939 = vmatprep.mubr.f32.mxu0 0.0
        %2940 = vmatmul.mubr.f32.gmra.mxu0 %v2765
        %v2941 = vpop.f32.mrf.mxu0
        %v2942 = vadd.f32 0.0, %v2941
        %v2943 = vpop.f32.mrf.mxu0
        %2944 = vmatprep.mubr.f32.mxu0 0.0
        %2945 = vmatmul.mubr.f32.gmra.mxu0 %v2768
        %v2946 = vpop.f32.mrf.mxu0
        %v2947 = vadd.f32 0.0, %v2946
        %v2948 = vpop.f32.mrf.mxu0
        %2949 = vmatprep.mubr.f32.mxu0 0.0
        %2950 = vmatmul.mubr.f32.gmra.mxu0 %v2771
        %v2951 = vpop.f32.mrf.mxu0
        %v2952 = vadd.f32 0.0, %v2951
        %v2953 = vpop.f32.mrf.mxu0
        %2954 = vmatprep.mubr.f32.mxu0 0.0
        %2955 = vmatmul.mubr.f32.gmra.mxu0 %v2774
        %v2956 = vpop.f32.mrf.mxu0
        %v2957 = vadd.f32 0.0, %v2956
        %v2958 = vpop.f32.mrf.mxu0
        %2959 = vmatprep.mubr.f32.mxu0 0.0
        %2960 = vmatmul.mubr.f32.gmra.mxu0 %v2777
        %v2961 = vpop.f32.mrf.mxu0
        %v2962 = vadd.f32 0.0, %v2961
        %v2963 = vpop.f32.mrf.mxu0
        %2964 = vmatprep.mubr.f32.mxu0 0.0
        %2965 = vmatmul.mubr.f32.gmra.mxu0 %v2780
        %v2966 = vpop.f32.mrf.mxu0
        %v2967 = vadd.f32 0.0, %v2966
        %v2968 = vpop.f32.mrf.mxu0
        %2969 = vmatprep.mubr.f32.mxu0 0.0
        %2970 = vmatmul.mubr.f32.gmra.mxu0 %v2783
        %v2971 = vpop.f32.mrf.mxu0
        %v2972 = vadd.f32 0.0, %v2971
        %v2973 = vpop.f32.mrf.mxu0
        %2974 = vmatprep.mubr.f32.mxu0 0.0
        %2975 = vmatmul.mubr.f32.gmra.mxu0 %v2786
        %v2976 = vpop.f32.mrf.mxu0
        %v2977 = vadd.f32 0.0, %v2976
        %v2978 = vpop.f32.mrf.mxu0
        %2979 = vmatprep.mubr.f32.mxu0 0.0
        %2980 = vmatmul.mubr.f32.gmra.mxu0 %v2789
        %v2981 = vpop.f32.mrf.mxu0
        %v2982 = vadd.f32 0.0, %v2981
        %v2983 = vpop.f32.mrf.mxu0
        %2984 = vmatprep.mubr.f32.mxu0 0.0
        %2985 = vmatmul.mubr.f32.gmra.mxu0 %v2792
        %v2986 = vpop.f32.mrf.mxu0
        %v2987 = vadd.f32 0.0, %v2986
        %v2988 = vpop.f32.mrf.mxu0
        %2989 = vmatprep.mubr.f32.mxu0 0.0
        %2990 = vmatmul.mubr.f32.gmra.mxu0 %v2795
        %v2991 = vpop.f32.mrf.mxu0
        %v2992 = vadd.f32 0.0, %v2991
        %v2993 = vpop.f32.mrf.mxu0
        %2994 = vmatprep.mubr.f32.mxu0 0.0
        %2995 = vmatmul.mubr.f32.gmra.mxu0 %v2798
        %v2996 = vpop.f32.mrf.mxu0
        %v2997 = vadd.f32 0.0, %v2996
        %v2998 = vpop.f32.mrf.mxu0
        %2999 = vmatprep.mubr.f32.mxu0 0.0
        %3000 = vmatmul.mubr.f32.gmra.mxu0 %v2801
        %v3001 = vpop.f32.mrf.mxu0
        %v3002 = vadd.f32 0.0, %v3001
        %v3003 = vpop.f32.mrf.mxu0
        %3004 = vmatprep.mubr.f32.mxu0 0.0
        %3005 = vmatmul.mubr.f32.gmra.mxu0 %v2804
        %v3006 = vpop.f32.mrf.mxu0
        %v3007 = vadd.f32 0.0, %v3006
        %v3008 = vpop.f32.mrf.mxu0
        %3009 = vmatprep.mubr.f32.mxu0 0.0
        %3010 = vmatmul.mubr.f32.gmra.mxu0 %v2807
        %v3011 = vpop.f32.mrf.mxu0
        %v3012 = vadd.f32 0.0, %v3011
        %v3013 = vpop.f32.mrf.mxu0
        %3014 = vmatprep.mubr.f32.mxu0 0.0
        %3015 = vmatmul.mubr.f32.gmra.mxu0 %v2810
        %v3016 = vpop.f32.mrf.mxu0
        %v3017 = vadd.f32 0.0, %v3016
        %v3018 = vpop.f32.mrf.mxu0
        %3019 = vmatprep.mubr.f32.mxu0 0.0
        %3020 = vmatmul.mubr.f32.gmra.mxu0 %v2813
        %v3021 = vpop.f32.mrf.mxu0
        %v3022 = vadd.f32 0.0, %v3021
        %v3023 = vpop.f32.mrf.mxu0
        %3024 = vmatprep.mubr.f32.mxu0 0.0
        %3025 = vmatmul.mubr.f32.gmra.mxu0 %v2816
        %v3026 = vpop.f32.mrf.mxu0
        %v3027 = vadd.f32 0.0, %v3026
        %v3028 = vpop.f32.mrf.mxu0
        %3029 = vmatprep.mubr.f32.mxu0 0.0
        %3030 = vmatmul.mubr.f32.gmra.mxu0 %v2819
        %v3031 = vpop.f32.mrf.mxu0
        %v3032 = vadd.f32 0.0, %v3031
        %v3033 = vpop.f32.mrf.mxu0
        %3034 = vmatprep.mubr.f32.mxu0 0.0
        %3035 = vmatmul.mubr.f32.gmra.mxu0 %v2822
        %v3036 = vpop.f32.mrf.mxu0
        %v3037 = vadd.f32 0.0, %v3036
        %v3038 = vpop.f32.mrf.mxu0
        %3039 = vmatprep.mubr.f32.mxu0 0.0
        %3040 = vmatmul.mubr.f32.gmra.mxu0 %v2825
        %v3041 = vpop.f32.mrf.mxu0
        %v3042 = vadd.f32 0.0, %v3041
        %v3043 = vpop.f32.mrf.mxu0
        %3044 = vmatprep.mubr.f32.mxu0 0.0
        %3045 = vmatmul.mubr.f32.gmra.mxu0 %v2828
        %v3046 = vpop.f32.mrf.mxu0
        %v3047 = vadd.f32 0.0, %v3046
        %v3048 = vpop.f32.mrf.mxu0
        %3049 = vmatprep.mubr.f32.mxu0 0.0
        %3050 = vmatmul.mubr.f32.gmra.mxu0 %v2831
        %v3051 = vpop.f32.mrf.mxu0
        %v3052 = vadd.f32 0.0, %v3051
        %v3053 = vpop.f32.mrf.mxu0
        %3054 = vmatprep.mubr.f32.mxu0 0.0
        %3055 = vmatmul.mubr.f32.gmra.mxu0 %v2834
        %v3056 = vpop.f32.mrf.mxu0
        %v3057 = vadd.f32 0.0, %v3056
        %v3058 = vpop.f32.mrf.mxu0
        %3059 = vmatprep.mubr.f32.mxu0 0.0
        %3060 = vmatmul.mubr.f32.gmra.mxu0 %v2837
        %v3061 = vpop.f32.mrf.mxu0
        %v3062 = vadd.f32 0.0, %v3061
        %v3063 = vpop.f32.mrf.mxu0
        %3064 = vmatprep.mubr.f32.mxu0 0.0
        %3065 = vmatmul.mubr.f32.gmra.mxu0 %v2840
        %v3066 = vpop.f32.mrf.mxu0
        %v3067 = vadd.f32 0.0, %v3066
        %v3068 = vpop.f32.mrf.mxu0
        %3069 = vdwg.mxu0
        %v3070 = vadd.f32 %v2554, %v2912
        %v3071 = vadd.f32 %v2559, %v2917
        %v3072 = vadd.f32 %v2564, %v2922
        %v3073 = vadd.f32 %v2569, %v2927
        %v3074 = vadd.f32 %v2574, %v2932
        %v3075 = vadd.f32 %v2579, %v2937
        %v3076 = vadd.f32 %v2584, %v2942
        %v3077 = vadd.f32 %v2589, %v2947
        %v3078 = vadd.f32 %v2594, %v2952
        %v3079 = vadd.f32 %v2599, %v2957
        %v3080 = vadd.f32 %v2604, %v2962
        %v3081 = vadd.f32 %v2609, %v2967
        %v3082 = vadd.f32 %v2614, %v2972
        %v3083 = vadd.f32 %v2619, %v2977
        %v3084 = vadd.f32 %v2624, %v2982
        %v3085 = vadd.f32 %v2629, %v2987
        %v3086 = vadd.f32 %v2634, %v2992
        %v3087 = vadd.f32 %v2639, %v2997
        %v3088 = vadd.f32 %v2644, %v3002
        %v3089 = vadd.f32 %v2649, %v3007
        %v3090 = vadd.f32 %v2654, %v3012
        %v3091 = vadd.f32 %v2659, %v3017
        %v3092 = vadd.f32 %v2664, %v3022
        %v3093 = vadd.f32 %v2669, %v3027
        %v3094 = vadd.f32 %v2674, %v3032
        %v3095 = vadd.f32 %v2679, %v3037
        %v3096 = vadd.f32 %v2684, %v3042
        %v3097 = vadd.f32 %v2689, %v3047
        %v3098 = vadd.f32 %v2694, %v3052
        %v3099 = vadd.f32 %v2699, %v3057
        %v3100 = vadd.f32 %v2704, %v3062
        %v3101 = vadd.f32 %v2709, %v3067
        %v3102 = vadd.f32 %v2084, %v3070
        %v3103 = vadd.f32 %v2085, %v3071
        %v3104 = vadd.f32 %v2086, %v3072
        %v3105 = vadd.f32 %v2087, %v3073
        %v3106 = vadd.f32 %v2088, %v3074
        %v3107 = vadd.f32 %v2089, %v3075
        %v3108 = vadd.f32 %v2090, %v3076
        %v3109 = vadd.f32 %v2091, %v3077
        %v3110 = vadd.f32 %v2092, %v3078
        %v3111 = vadd.f32 %v2093, %v3079
        %v3112 = vadd.f32 %v2094, %v3080
        %v3113 = vadd.f32 %v2095, %v3081
        %v3114 = vadd.f32 %v2096, %v3082
        %v3115 = vadd.f32 %v2097, %v3083
        %v3116 = vadd.f32 %v2098, %v3084
        %v3117 = vadd.f32 %v2099, %v3085
        %v3118 = vadd.f32 %v2100, %v3086
        %v3119 = vadd.f32 %v2101, %v3087
        %v3120 = vadd.f32 %v2102, %v3088
        %v3121 = vadd.f32 %v2103, %v3089
        %v3122 = vadd.f32 %v2104, %v3090
        %v3123 = vadd.f32 %v2105, %v3091
        %v3124 = vadd.f32 %v2106, %v3092
        %v3125 = vadd.f32 %v2107, %v3093
        %v3126 = vadd.f32 %v2108, %v3094
        %v3127 = vadd.f32 %v2109, %v3095
        %v3128 = vadd.f32 %v2110, %v3096
        %v3129 = vadd.f32 %v2111, %v3097
        %v3130 = vadd.f32 %v2112, %v3098
        %v3131 = vadd.f32 %v2113, %v3099
        %v3132 = vadd.f32 %v2114, %v3100
        %v3133 = vadd.f32 %v2115, %v3101
        %v3134 = vld [vmem:[#allocation2 + $0x2] sm:$0xff]
        %v3135 = vld [vmem:[#allocation2 + $0xa] sm:$0xff]
        %v3136 = vld [vmem:[#allocation2 + $0x12] sm:$0xff]
        %v3137 = vld [vmem:[#allocation2 + $0x1a] sm:$0xff]
        %v3138 = vld [vmem:[#allocation2 + $0x22] sm:$0xff]
        %v3139 = vld [vmem:[#allocation2 + $0x2a] sm:$0xff]
        %v3140 = vld [vmem:[#allocation2 + $0x32] sm:$0xff]
        %v3141 = vld [vmem:[#allocation2 + $0x3a] sm:$0xff]
        %v3142 = vld [vmem:[#allocation2 + $0x42] sm:$0xff]
        %v3143 = vld [vmem:[#allocation2 + $0x4a] sm:$0xff]
        %v3144 = vld [vmem:[#allocation2 + $0x52] sm:$0xff]
        %v3145 = vld [vmem:[#allocation2 + $0x5a] sm:$0xff]
        %v3146 = vld [vmem:[#allocation2 + $0x62] sm:$0xff]
        %v3147 = vld [vmem:[#allocation2 + $0x6a] sm:$0xff]
        %v3148 = vld [vmem:[#allocation2 + $0x72] sm:$0xff]
        %v3149 = vld [vmem:[#allocation2 + $0x7a] sm:$0xff]
        %v3150 = vld [vmem:[#allocation2 + $0x82] sm:$0xff]
        %v3151 = vld [vmem:[#allocation2 + $0x8a] sm:$0xff]
        %v3152 = vld [vmem:[#allocation2 + $0x92] sm:$0xff]
        %v3153 = vld [vmem:[#allocation2 + $0x9a] sm:$0xff]
        %v3154 = vld [vmem:[#allocation2 + $0xa2] sm:$0xff]
        %v3155 = vld [vmem:[#allocation2 + $0xaa] sm:$0xff]
        %v3156 = vld [vmem:[#allocation2 + $0xb2] sm:$0xff]
        %v3157 = vld [vmem:[#allocation2 + $0xba] sm:$0xff]
        %v3158 = vld [vmem:[#allocation2 + $0xc2] sm:$0xff]
        %v3159 = vld [vmem:[#allocation2 + $0xca] sm:$0xff]
        %v3160 = vld [vmem:[#allocation2 + $0xd2] sm:$0xff]
        %v3161 = vld [vmem:[#allocation2 + $0xda] sm:$0xff]
        %v3162 = vld [vmem:[#allocation2 + $0xe2] sm:$0xff]
        %v3163 = vld [vmem:[#allocation2 + $0xea] sm:$0xff]
        %v3164 = vld [vmem:[#allocation2 + $0xf2] sm:$0xff]
        %v3165 = vld [vmem:[#allocation2 + $0xfa] sm:$0xff]
        %s3166 = scalar_lea.vmem %s3, 8
        %v3167 = vld [vmem:[%s3166] sm:$0xf]
        %v3168 = vld [vmem:[#allocation2 + $0x102] sm:$0xff]
        %v3169 = vld [vmem:[#allocation2 + $0x10a] sm:$0xff]
        %s3170 = scalar_lea.vmem %s3, 20
        %v3171 = vld [vmem:[%s3170] sm:$0xf]
        %v3173 = vsel %vm429, %v3136, 0
        %v3176 = vsel %vm429, %v3137, 0
        %v3179 = vsel %vm429, %v3138, 0
        %v3182 = vsel %vm429, %v3139, 0
        %v3185 = vsel %vm429, %v3140, 0
        %v3188 = vsel %vm429, %v3141, 0
        %v3191 = vsel %vm429, %v3142, 0
        %v3194 = vsel %vm429, %v3143, 0
        %v3197 = vsel %vm429, %v3144, 0
        %v3200 = vsel %vm429, %v3145, 0
        %v3203 = vsel %vm429, %v3146, 0
        %v3206 = vsel %vm429, %v3147, 0
        %v3209 = vsel %vm429, %v3148, 0
        %v3212 = vsel %vm429, %v3149, 0
        %v3215 = vsel %vm429, %v3150, 0
        %v3218 = vsel %vm429, %v3151, 0
        %v3221 = vsel %vm429, %v3152, 0
        %v3224 = vsel %vm429, %v3153, 0
        %v3227 = vsel %vm429, %v3154, 0
        %v3230 = vsel %vm429, %v3155, 0
        %v3233 = vsel %vm429, %v3156, 0
        %v3236 = vsel %vm429, %v3157, 0
        %v3239 = vsel %vm429, %v3158, 0
        %v3242 = vsel %vm429, %v3159, 0
        %v3245 = vsel %vm429, %v3160, 0
        %v3248 = vsel %vm429, %v3161, 0
        %v3251 = vsel %vm429, %v3162, 0
        %v3254 = vsel %vm429, %v3163, 0
        %v3257 = vsel %vm429, %v3164, 0
        %v3260 = vsel %vm429, %v3165, 0
        %v3263 = vsel %vm429, %v3168, 0
        %v3266 = vsel %vm429, %v3169, 0
        %v3269 = vsel %vm1039, %v3171, 0
        %3271 = vmatprep.subr.mxu0 0.0
        %3272 = vmatpush1.msra.mxu0 0.0
        %3273 = vmatprep.subr.mxu0 0.0
        %3274 = vmatpush1.msra.mxu0 0.0
        %3275 = vmatprep.subr.mxu0 0.0
        %3276 = vmatpush1.msra.mxu0 0.0
        %3277 = vmatprep.subr.mxu0 0.0
        %3278 = vmatpush1.msra.mxu0 0.0
        %3279 = vmatprep.subr.mxu0 0.0
        %3280 = vmatpush1.msra.mxu0 0.0
        %3281 = vmatprep.subr.mxu0 0.0
        %3282 = vmatpush1.msra.mxu0 0.0
        %3283 = vmatprep.subr.mxu0 0.0
        %3284 = vmatpush1.msra.mxu0 0.0
        %3285 = vmatprep.subr.mxu0 0.0
        %3286 = vmatpush1.msra.mxu0 0.0
        %3287 = vmatprep.subr.mxu0 0.0
        %3288 = vmatpush1.msra.mxu0 0.0
        %3289 = vmatprep.subr.mxu0 0.0
        %3290 = vmatpush1.msra.mxu0 0.0
        %3291 = vmatprep.subr.mxu0 0.0
        %3292 = vmatpush1.msra.mxu0 0.0
        %3293 = vmatprep.subr.mxu0 0.0
        %3294 = vmatpush1.msra.mxu0 0.0
        %3295 = vmatprep.subr.mxu0 0.0
        %3296 = vmatpush1.msra.mxu0 0.0
        %3297 = vmatprep.subr.mxu0 0.0
        %3298 = vmatpush1.msra.mxu0 0.0
        %3299 = vmatprep.subr.mxu0 0.0
        %3300 = vmatpush1.msra.mxu0 0.0
        %3301 = vmatprep.subr.mxu0 0.0
        %3302 = vmatpush1.msra.mxu0 %v3269
        %3303 = vmatprep.subr.mxu0 0.0
        %3304 = vmatpush2.msra.mxu0 0.0
        %3305 = vmatprep.subr.mxu0 0.0
        %3306 = vmatpush2.msra.mxu0 0.0
        %3307 = vmatprep.subr.mxu0 0.0
        %3308 = vmatpush2.msra.mxu0 0.0
        %3309 = vmatprep.subr.mxu0 0.0
        %3310 = vmatpush2.msra.mxu0 0.0
        %3311 = vmatprep.subr.mxu0 0.0
        %3312 = vmatpush2.msra.mxu0 0.0
        %3313 = vmatprep.subr.mxu0 0.0
        %3314 = vmatpush2.msra.mxu0 0.0
        %3315 = vmatprep.subr.mxu0 0.0
        %3316 = vmatpush2.msra.mxu0 0.0
        %3317 = vmatprep.subr.mxu0 0.0
        %3318 = vmatpush2.msra.mxu0 0.0
        %3319 = vmatprep.subr.mxu0 0.0
        %3320 = vmatpush2.msra.mxu0 0.0
        %3321 = vmatprep.subr.mxu0 0.0
        %3322 = vmatpush2.msra.mxu0 0.0
        %3323 = vmatprep.subr.mxu0 0.0
        %3324 = vmatpush2.msra.mxu0 0.0
        %3325 = vmatprep.subr.mxu0 0.0
        %3326 = vmatpush2.msra.mxu0 0.0
        %3327 = vmatprep.subr.mxu0 0.0
        %3328 = vmatpush2.msra.mxu0 0.0
        %3329 = vmatprep.subr.mxu0 0.0
        %3330 = vmatpush2.msra.mxu0 0.0
        %3331 = vmatprep.subr.mxu0 0.0
        %3332 = vmatpush2.msra.mxu0 0.0
        %3333 = vmatprep.subr.mxu0 0.0
        %3334 = vmatpush2.msra.mxu0 0.0
        %3335 = vmatprep.mubr.f32.mxu0 0.0
        %3336 = vmatmul.mubr.f32.gmra.mxu0 %v3173
        %v3337 = vpop.f32.mrf.mxu0
        %v3338 = vadd.f32 0.0, %v3337
        %v3339 = vpop.f32.mrf.mxu0
        %3340 = vmatprep.mubr.f32.mxu0 0.0
        %3341 = vmatmul.mubr.f32.gmra.mxu0 %v3176
        %v3342 = vpop.f32.mrf.mxu0
        %v3343 = vadd.f32 0.0, %v3342
        %v3344 = vpop.f32.mrf.mxu0
        %3345 = vmatprep.mubr.f32.mxu0 0.0
        %3346 = vmatmul.mubr.f32.gmra.mxu0 %v3179
        %v3347 = vpop.f32.mrf.mxu0
        %v3348 = vadd.f32 0.0, %v3347
        %v3349 = vpop.f32.mrf.mxu0
        %3350 = vmatprep.mubr.f32.mxu0 0.0
        %3351 = vmatmul.mubr.f32.gmra.mxu0 %v3182
        %v3352 = vpop.f32.mrf.mxu0
        %v3353 = vadd.f32 0.0, %v3352
        %v3354 = vpop.f32.mrf.mxu0
        %3355 = vmatprep.mubr.f32.mxu0 0.0
        %3356 = vmatmul.mubr.f32.gmra.mxu0 %v3185
        %v3357 = vpop.f32.mrf.mxu0
        %v3358 = vadd.f32 0.0, %v3357
        %v3359 = vpop.f32.mrf.mxu0
        %3360 = vmatprep.mubr.f32.mxu0 0.0
        %3361 = vmatmul.mubr.f32.gmra.mxu0 %v3188
        %v3362 = vpop.f32.mrf.mxu0
        %v3363 = vadd.f32 0.0, %v3362
        %v3364 = vpop.f32.mrf.mxu0
        %3365 = vmatprep.mubr.f32.mxu0 0.0
        %3366 = vmatmul.mubr.f32.gmra.mxu0 %v3191
        %v3367 = vpop.f32.mrf.mxu0
        %v3368 = vadd.f32 0.0, %v3367
        %v3369 = vpop.f32.mrf.mxu0
        %3370 = vmatprep.mubr.f32.mxu0 0.0
        %3371 = vmatmul.mubr.f32.gmra.mxu0 %v3194
        %v3372 = vpop.f32.mrf.mxu0
        %v3373 = vadd.f32 0.0, %v3372
        %v3374 = vpop.f32.mrf.mxu0
        %3375 = vmatprep.mubr.f32.mxu0 0.0
        %3376 = vmatmul.mubr.f32.gmra.mxu0 %v3197
        %v3377 = vpop.f32.mrf.mxu0
        %v3378 = vadd.f32 0.0, %v3377
        %v3379 = vpop.f32.mrf.mxu0
        %3380 = vmatprep.mubr.f32.mxu0 0.0
        %3381 = vmatmul.mubr.f32.gmra.mxu0 %v3200
        %v3382 = vpop.f32.mrf.mxu0
        %v3383 = vadd.f32 0.0, %v3382
        %v3384 = vpop.f32.mrf.mxu0
        %3385 = vmatprep.mubr.f32.mxu0 0.0
        %3386 = vmatmul.mubr.f32.gmra.mxu0 %v3203
        %v3387 = vpop.f32.mrf.mxu0
        %v3388 = vadd.f32 0.0, %v3387
        %v3389 = vpop.f32.mrf.mxu0
        %3390 = vmatprep.mubr.f32.mxu0 0.0
        %3391 = vmatmul.mubr.f32.gmra.mxu0 %v3206
        %v3392 = vpop.f32.mrf.mxu0
        %v3393 = vadd.f32 0.0, %v3392
        %v3394 = vpop.f32.mrf.mxu0
        %3395 = vmatprep.mubr.f32.mxu0 0.0
        %3396 = vmatmul.mubr.f32.gmra.mxu0 %v3209
        %v3397 = vpop.f32.mrf.mxu0
        %v3398 = vadd.f32 0.0, %v3397
        %v3399 = vpop.f32.mrf.mxu0
        %3400 = vmatprep.mubr.f32.mxu0 0.0
        %3401 = vmatmul.mubr.f32.gmra.mxu0 %v3212
        %v3402 = vpop.f32.mrf.mxu0
        %v3403 = vadd.f32 0.0, %v3402
        %v3404 = vpop.f32.mrf.mxu0
        %3405 = vmatprep.mubr.f32.mxu0 0.0
        %3406 = vmatmul.mubr.f32.gmra.mxu0 %v3215
        %v3407 = vpop.f32.mrf.mxu0
        %v3408 = vadd.f32 0.0, %v3407
        %v3409 = vpop.f32.mrf.mxu0
        %3410 = vmatprep.mubr.f32.mxu0 0.0
        %3411 = vmatmul.mubr.f32.gmra.mxu0 %v3218
        %v3412 = vpop.f32.mrf.mxu0
        %v3413 = vadd.f32 0.0, %v3412
        %v3414 = vpop.f32.mrf.mxu0
        %3415 = vmatprep.mubr.f32.mxu0 0.0
        %3416 = vmatmul.mubr.f32.gmra.mxu0 %v3221
        %v3417 = vpop.f32.mrf.mxu0
        %v3418 = vadd.f32 0.0, %v3417
        %v3419 = vpop.f32.mrf.mxu0
        %3420 = vmatprep.mubr.f32.mxu0 0.0
        %3421 = vmatmul.mubr.f32.gmra.mxu0 %v3224
        %v3422 = vpop.f32.mrf.mxu0
        %v3423 = vadd.f32 0.0, %v3422
        %v3424 = vpop.f32.mrf.mxu0
        %3425 = vmatprep.mubr.f32.mxu0 0.0
        %3426 = vmatmul.mubr.f32.gmra.mxu0 %v3227
        %v3427 = vpop.f32.mrf.mxu0
        %v3428 = vadd.f32 0.0, %v3427
        %v3429 = vpop.f32.mrf.mxu0
        %3430 = vmatprep.mubr.f32.mxu0 0.0
        %3431 = vmatmul.mubr.f32.gmra.mxu0 %v3230
        %v3432 = vpop.f32.mrf.mxu0
        %v3433 = vadd.f32 0.0, %v3432
        %v3434 = vpop.f32.mrf.mxu0
        %3435 = vmatprep.mubr.f32.mxu0 0.0
        %3436 = vmatmul.mubr.f32.gmra.mxu0 %v3233
        %v3437 = vpop.f32.mrf.mxu0
        %v3438 = vadd.f32 0.0, %v3437
        %v3439 = vpop.f32.mrf.mxu0
        %3440 = vmatprep.mubr.f32.mxu0 0.0
        %3441 = vmatmul.mubr.f32.gmra.mxu0 %v3236
        %v3442 = vpop.f32.mrf.mxu0
        %v3443 = vadd.f32 0.0, %v3442
        %v3444 = vpop.f32.mrf.mxu0
        %3445 = vmatprep.mubr.f32.mxu0 0.0
        %3446 = vmatmul.mubr.f32.gmra.mxu0 %v3239
        %v3447 = vpop.f32.mrf.mxu0
        %v3448 = vadd.f32 0.0, %v3447
        %v3449 = vpop.f32.mrf.mxu0
        %3450 = vmatprep.mubr.f32.mxu0 0.0
        %3451 = vmatmul.mubr.f32.gmra.mxu0 %v3242
        %v3452 = vpop.f32.mrf.mxu0
        %v3453 = vadd.f32 0.0, %v3452
        %v3454 = vpop.f32.mrf.mxu0
        %3455 = vmatprep.mubr.f32.mxu0 0.0
        %3456 = vmatmul.mubr.f32.gmra.mxu0 %v3245
        %v3457 = vpop.f32.mrf.mxu0
        %v3458 = vadd.f32 0.0, %v3457
        %v3459 = vpop.f32.mrf.mxu0
        %3460 = vmatprep.mubr.f32.mxu0 0.0
        %3461 = vmatmul.mubr.f32.gmra.mxu0 %v3248
        %v3462 = vpop.f32.mrf.mxu0
        %v3463 = vadd.f32 0.0, %v3462
        %v3464 = vpop.f32.mrf.mxu0
        %3465 = vmatprep.mubr.f32.mxu0 0.0
        %3466 = vmatmul.mubr.f32.gmra.mxu0 %v3251
        %v3467 = vpop.f32.mrf.mxu0
        %v3468 = vadd.f32 0.0, %v3467
        %v3469 = vpop.f32.mrf.mxu0
        %3470 = vmatprep.mubr.f32.mxu0 0.0
        %3471 = vmatmul.mubr.f32.gmra.mxu0 %v3254
        %v3472 = vpop.f32.mrf.mxu0
        %v3473 = vadd.f32 0.0, %v3472
        %v3474 = vpop.f32.mrf.mxu0
        %3475 = vmatprep.mubr.f32.mxu0 0.0
        %3476 = vmatmul.mubr.f32.gmra.mxu0 %v3257
        %v3477 = vpop.f32.mrf.mxu0
        %v3478 = vadd.f32 0.0, %v3477
        %v3479 = vpop.f32.mrf.mxu0
        %3480 = vmatprep.mubr.f32.mxu0 0.0
        %3481 = vmatmul.mubr.f32.gmra.mxu0 %v3260
        %v3482 = vpop.f32.mrf.mxu0
        %v3483 = vadd.f32 0.0, %v3482
        %v3484 = vpop.f32.mrf.mxu0
        %3485 = vmatprep.mubr.f32.mxu0 0.0
        %3486 = vmatmul.mubr.f32.gmra.mxu0 %v3263
        %v3487 = vpop.f32.mrf.mxu0
        %v3488 = vadd.f32 0.0, %v3487
        %v3489 = vpop.f32.mrf.mxu0
        %3490 = vmatprep.mubr.f32.mxu0 0.0
        %3491 = vmatmul.mubr.f32.gmra.mxu0 %v3266
        %v3492 = vpop.f32.mrf.mxu0
        %v3493 = vadd.f32 0.0, %v3492
        %v3494 = vpop.f32.mrf.mxu0
        %3495 = vdwg.mxu0
        %v3497 = vsel %vm429, %v3134, 0
        %v3500 = vsel %vm429, %v3135, 0
        %v3503 = vsel %vm1039, %v3167, 0
        %3505 = vmatprep.subr.mxu0 0.0
        %3506 = vmatpush1.msra.mxu0 0.0
        %3507 = vmatprep.subr.mxu0 0.0
        %3508 = vmatpush1.msra.mxu0 0.0
        %3509 = vmatprep.subr.mxu0 0.0
        %3510 = vmatpush1.msra.mxu0 0.0
        %3511 = vmatprep.subr.mxu0 0.0
        %3512 = vmatpush1.msra.mxu0 0.0
        %3513 = vmatprep.subr.mxu0 0.0
        %3514 = vmatpush1.msra.mxu0 0.0
        %3515 = vmatprep.subr.mxu0 0.0
        %3516 = vmatpush1.msra.mxu0 0.0
        %3517 = vmatprep.subr.mxu0 0.0
        %3518 = vmatpush1.msra.mxu0 0.0
        %3519 = vmatprep.subr.mxu0 0.0
        %3520 = vmatpush1.msra.mxu0 0.0
        %3521 = vmatprep.subr.mxu0 0.0
        %3522 = vmatpush1.msra.mxu0 0.0
        %3523 = vmatprep.subr.mxu0 0.0
        %3524 = vmatpush1.msra.mxu0 0.0
        %3525 = vmatprep.subr.mxu0 0.0
        %3526 = vmatpush1.msra.mxu0 0.0
        %3527 = vmatprep.subr.mxu0 0.0
        %3528 = vmatpush1.msra.mxu0 0.0
        %3529 = vmatprep.subr.mxu0 0.0
        %3530 = vmatpush1.msra.mxu0 0.0
        %3531 = vmatprep.subr.mxu0 0.0
        %3532 = vmatpush1.msra.mxu0 0.0
        %3533 = vmatprep.subr.mxu0 0.0
        %3534 = vmatpush1.msra.mxu0 0.0
        %3535 = vmatprep.subr.mxu0 0.0
        %3536 = vmatpush1.msra.mxu0 %v3503
        %3537 = vmatprep.subr.mxu0 0.0
        %3538 = vmatpush2.msra.mxu0 0.0
        %3539 = vmatprep.subr.mxu0 0.0
        %3540 = vmatpush2.msra.mxu0 0.0
        %3541 = vmatprep.subr.mxu0 0.0
        %3542 = vmatpush2.msra.mxu0 0.0
        %3543 = vmatprep.subr.mxu0 0.0
        %3544 = vmatpush2.msra.mxu0 0.0
        %3545 = vmatprep.subr.mxu0 0.0
        %3546 = vmatpush2.msra.mxu0 0.0
        %3547 = vmatprep.subr.mxu0 0.0
        %3548 = vmatpush2.msra.mxu0 0.0
        %3549 = vmatprep.subr.mxu0 0.0
        %3550 = vmatpush2.msra.mxu0 0.0
        %3551 = vmatprep.subr.mxu0 0.0
        %3552 = vmatpush2.msra.mxu0 0.0
        %3553 = vmatprep.subr.mxu0 0.0
        %3554 = vmatpush2.msra.mxu0 0.0
        %3555 = vmatprep.subr.mxu0 0.0
        %3556 = vmatpush2.msra.mxu0 0.0
        %3557 = vmatprep.subr.mxu0 0.0
        %3558 = vmatpush2.msra.mxu0 0.0
        %3559 = vmatprep.subr.mxu0 0.0
        %3560 = vmatpush2.msra.mxu0 0.0
        %3561 = vmatprep.subr.mxu0 0.0
        %3562 = vmatpush2.msra.mxu0 0.0
        %3563 = vmatprep.subr.mxu0 0.0
        %3564 = vmatpush2.msra.mxu0 0.0
        %3565 = vmatprep.subr.mxu0 0.0
        %3566 = vmatpush2.msra.mxu0 0.0
        %3567 = vmatprep.subr.mxu0 0.0
        %3568 = vmatpush2.msra.mxu0 0.0
        %3569 = vmatprep.mubr.f32.mxu0 0.0
        %3570 = vmatmul.mubr.f32.gmra.mxu0 %v3497
        %v3571 = vpop.f32.mrf.mxu0
        %v3572 = vadd.f32 %v3338, %v3571
        %v3573 = vpop.f32.mrf.mxu0
        %3574 = vmatprep.mubr.f32.mxu0 0.0
        %3575 = vmatmul.mubr.f32.gmra.mxu0 %v3500
        %v3576 = vpop.f32.mrf.mxu0
        %v3577 = vadd.f32 %v3343, %v3576
        %v3578 = vpop.f32.mrf.mxu0
        %3579 = vmatprep.mubr.f32.mxu0 0.0
        %3580 = vmatmul.mubr.f32.gmra.mxu0 %v3173
        %v3581 = vpop.f32.mrf.mxu0
        %v3582 = vadd.f32 %v3348, %v3581
        %v3583 = vpop.f32.mrf.mxu0
        %3584 = vmatprep.mubr.f32.mxu0 0.0
        %3585 = vmatmul.mubr.f32.gmra.mxu0 %v3176
        %v3586 = vpop.f32.mrf.mxu0
        %v3587 = vadd.f32 %v3353, %v3586
        %v3588 = vpop.f32.mrf.mxu0
        %3589 = vmatprep.mubr.f32.mxu0 0.0
        %3590 = vmatmul.mubr.f32.gmra.mxu0 %v3179
        %v3591 = vpop.f32.mrf.mxu0
        %v3592 = vadd.f32 %v3358, %v3591
        %v3593 = vpop.f32.mrf.mxu0
        %3594 = vmatprep.mubr.f32.mxu0 0.0
        %3595 = vmatmul.mubr.f32.gmra.mxu0 %v3182
        %v3596 = vpop.f32.mrf.mxu0
        %v3597 = vadd.f32 %v3363, %v3596
        %v3598 = vpop.f32.mrf.mxu0
        %3599 = vmatprep.mubr.f32.mxu0 0.0
        %3600 = vmatmul.mubr.f32.gmra.mxu0 %v3185
        %v3601 = vpop.f32.mrf.mxu0
        %v3602 = vadd.f32 %v3368, %v3601
        %v3603 = vpop.f32.mrf.mxu0
        %3604 = vmatprep.mubr.f32.mxu0 0.0
        %3605 = vmatmul.mubr.f32.gmra.mxu0 %v3188
        %v3606 = vpop.f32.mrf.mxu0
        %v3607 = vadd.f32 %v3373, %v3606
        %v3608 = vpop.f32.mrf.mxu0
        %3609 = vmatprep.mubr.f32.mxu0 0.0
        %3610 = vmatmul.mubr.f32.gmra.mxu0 %v3191
        %v3611 = vpop.f32.mrf.mxu0
        %v3612 = vadd.f32 %v3378, %v3611
        %v3613 = vpop.f32.mrf.mxu0
        %3614 = vmatprep.mubr.f32.mxu0 0.0
        %3615 = vmatmul.mubr.f32.gmra.mxu0 %v3194
        %v3616 = vpop.f32.mrf.mxu0
        %v3617 = vadd.f32 %v3383, %v3616
        %v3618 = vpop.f32.mrf.mxu0
        %3619 = vmatprep.mubr.f32.mxu0 0.0
        %3620 = vmatmul.mubr.f32.gmra.mxu0 %v3197
        %v3621 = vpop.f32.mrf.mxu0
        %v3622 = vadd.f32 %v3388, %v3621
        %v3623 = vpop.f32.mrf.mxu0
        %3624 = vmatprep.mubr.f32.mxu0 0.0
        %3625 = vmatmul.mubr.f32.gmra.mxu0 %v3200
        %v3626 = vpop.f32.mrf.mxu0
        %v3627 = vadd.f32 %v3393, %v3626
        %v3628 = vpop.f32.mrf.mxu0
        %3629 = vmatprep.mubr.f32.mxu0 0.0
        %3630 = vmatmul.mubr.f32.gmra.mxu0 %v3203
        %v3631 = vpop.f32.mrf.mxu0
        %v3632 = vadd.f32 %v3398, %v3631
        %v3633 = vpop.f32.mrf.mxu0
        %3634 = vmatprep.mubr.f32.mxu0 0.0
        %3635 = vmatmul.mubr.f32.gmra.mxu0 %v3206
        %v3636 = vpop.f32.mrf.mxu0
        %v3637 = vadd.f32 %v3403, %v3636
        %v3638 = vpop.f32.mrf.mxu0
        %3639 = vmatprep.mubr.f32.mxu0 0.0
        %3640 = vmatmul.mubr.f32.gmra.mxu0 %v3209
        %v3641 = vpop.f32.mrf.mxu0
        %v3642 = vadd.f32 %v3408, %v3641
        %v3643 = vpop.f32.mrf.mxu0
        %3644 = vmatprep.mubr.f32.mxu0 0.0
        %3645 = vmatmul.mubr.f32.gmra.mxu0 %v3212
        %v3646 = vpop.f32.mrf.mxu0
        %v3647 = vadd.f32 %v3413, %v3646
        %v3648 = vpop.f32.mrf.mxu0
        %3649 = vmatprep.mubr.f32.mxu0 0.0
        %3650 = vmatmul.mubr.f32.gmra.mxu0 %v3215
        %v3651 = vpop.f32.mrf.mxu0
        %v3652 = vadd.f32 %v3418, %v3651
        %v3653 = vpop.f32.mrf.mxu0
        %3654 = vmatprep.mubr.f32.mxu0 0.0
        %3655 = vmatmul.mubr.f32.gmra.mxu0 %v3218
        %v3656 = vpop.f32.mrf.mxu0
        %v3657 = vadd.f32 %v3423, %v3656
        %v3658 = vpop.f32.mrf.mxu0
        %3659 = vmatprep.mubr.f32.mxu0 0.0
        %3660 = vmatmul.mubr.f32.gmra.mxu0 %v3221
        %v3661 = vpop.f32.mrf.mxu0
        %v3662 = vadd.f32 %v3428, %v3661
        %v3663 = vpop.f32.mrf.mxu0
        %3664 = vmatprep.mubr.f32.mxu0 0.0
        %3665 = vmatmul.mubr.f32.gmra.mxu0 %v3224
        %v3666 = vpop.f32.mrf.mxu0
        %v3667 = vadd.f32 %v3433, %v3666
        %v3668 = vpop.f32.mrf.mxu0
        %3669 = vmatprep.mubr.f32.mxu0 0.0
        %3670 = vmatmul.mubr.f32.gmra.mxu0 %v3227
        %v3671 = vpop.f32.mrf.mxu0
        %v3672 = vadd.f32 %v3438, %v3671
        %v3673 = vpop.f32.mrf.mxu0
        %3674 = vmatprep.mubr.f32.mxu0 0.0
        %3675 = vmatmul.mubr.f32.gmra.mxu0 %v3230
        %v3676 = vpop.f32.mrf.mxu0
        %v3677 = vadd.f32 %v3443, %v3676
        %v3678 = vpop.f32.mrf.mxu0
        %3679 = vmatprep.mubr.f32.mxu0 0.0
        %3680 = vmatmul.mubr.f32.gmra.mxu0 %v3233
        %v3681 = vpop.f32.mrf.mxu0
        %v3682 = vadd.f32 %v3448, %v3681
        %v3683 = vpop.f32.mrf.mxu0
        %3684 = vmatprep.mubr.f32.mxu0 0.0
        %3685 = vmatmul.mubr.f32.gmra.mxu0 %v3236
        %v3686 = vpop.f32.mrf.mxu0
        %v3687 = vadd.f32 %v3453, %v3686
        %v3688 = vpop.f32.mrf.mxu0
        %3689 = vmatprep.mubr.f32.mxu0 0.0
        %3690 = vmatmul.mubr.f32.gmra.mxu0 %v3239
        %v3691 = vpop.f32.mrf.mxu0
        %v3692 = vadd.f32 %v3458, %v3691
        %v3693 = vpop.f32.mrf.mxu0
        %3694 = vmatprep.mubr.f32.mxu0 0.0
        %3695 = vmatmul.mubr.f32.gmra.mxu0 %v3242
        %v3696 = vpop.f32.mrf.mxu0
        %v3697 = vadd.f32 %v3463, %v3696
        %v3698 = vpop.f32.mrf.mxu0
        %3699 = vmatprep.mubr.f32.mxu0 0.0
        %3700 = vmatmul.mubr.f32.gmra.mxu0 %v3245
        %v3701 = vpop.f32.mrf.mxu0
        %v3702 = vadd.f32 %v3468, %v3701
        %v3703 = vpop.f32.mrf.mxu0
        %3704 = vmatprep.mubr.f32.mxu0 0.0
        %3705 = vmatmul.mubr.f32.gmra.mxu0 %v3248
        %v3706 = vpop.f32.mrf.mxu0
        %v3707 = vadd.f32 %v3473, %v3706
        %v3708 = vpop.f32.mrf.mxu0
        %3709 = vmatprep.mubr.f32.mxu0 0.0
        %3710 = vmatmul.mubr.f32.gmra.mxu0 %v3251
        %v3711 = vpop.f32.mrf.mxu0
        %v3712 = vadd.f32 %v3478, %v3711
        %v3713 = vpop.f32.mrf.mxu0
        %3714 = vmatprep.mubr.f32.mxu0 0.0
        %3715 = vmatmul.mubr.f32.gmra.mxu0 %v3254
        %v3716 = vpop.f32.mrf.mxu0
        %v3717 = vadd.f32 %v3483, %v3716
        %v3718 = vpop.f32.mrf.mxu0
        %3719 = vmatprep.mubr.f32.mxu0 0.0
        %3720 = vmatmul.mubr.f32.gmra.mxu0 %v3257
        %v3721 = vpop.f32.mrf.mxu0
        %v3722 = vadd.f32 %v3488, %v3721
        %v3723 = vpop.f32.mrf.mxu0
        %3724 = vmatprep.mubr.f32.mxu0 0.0
        %3725 = vmatmul.mubr.f32.gmra.mxu0 %v3260
        %v3726 = vpop.f32.mrf.mxu0
        %v3727 = vadd.f32 %v3493, %v3726
        %v3728 = vpop.f32.mrf.mxu0
        %3729 = vdwg.mxu0
        %v3730 = vld [vmem:[#allocation2 + $0x22] sm:$0xff]
        %v3731 = vld [vmem:[#allocation2 + $0x2a] sm:$0xff]
        %v3732 = vld [vmem:[#allocation2 + $0x32] sm:$0xff]
        %v3733 = vld [vmem:[#allocation2 + $0x3a] sm:$0xff]
        %v3734 = vld [vmem:[#allocation2 + $0x42] sm:$0xff]
        %v3735 = vld [vmem:[#allocation2 + $0x4a] sm:$0xff]
        %v3736 = vld [vmem:[#allocation2 + $0x52] sm:$0xff]
        %v3737 = vld [vmem:[#allocation2 + $0x5a] sm:$0xff]
        %v3738 = vld [vmem:[#allocation2 + $0x62] sm:$0xff]
        %v3739 = vld [vmem:[#allocation2 + $0x6a] sm:$0xff]
        %v3740 = vld [vmem:[#allocation2 + $0x72] sm:$0xff]
        %v3741 = vld [vmem:[#allocation2 + $0x7a] sm:$0xff]
        %v3742 = vld [vmem:[#allocation2 + $0x82] sm:$0xff]
        %v3743 = vld [vmem:[#allocation2 + $0x8a] sm:$0xff]
        %v3744 = vld [vmem:[#allocation2 + $0x92] sm:$0xff]
        %v3745 = vld [vmem:[#allocation2 + $0x9a] sm:$0xff]
        %v3746 = vld [vmem:[#allocation2 + $0xa2] sm:$0xff]
        %v3747 = vld [vmem:[#allocation2 + $0xaa] sm:$0xff]
        %v3748 = vld [vmem:[#allocation2 + $0xb2] sm:$0xff]
        %v3749 = vld [vmem:[#allocation2 + $0xba] sm:$0xff]
        %v3750 = vld [vmem:[#allocation2 + $0xc2] sm:$0xff]
        %v3751 = vld [vmem:[#allocation2 + $0xca] sm:$0xff]
        %v3752 = vld [vmem:[#allocation2 + $0xd2] sm:$0xff]
        %v3753 = vld [vmem:[#allocation2 + $0xda] sm:$0xff]
        %v3754 = vld [vmem:[#allocation2 + $0xe2] sm:$0xff]
        %v3755 = vld [vmem:[#allocation2 + $0xea] sm:$0xff]
        %v3756 = vld [vmem:[#allocation2 + $0xf2] sm:$0xff]
        %v3757 = vld [vmem:[#allocation2 + $0xfa] sm:$0xff]
        %v3758 = vld [vmem:[#allocation2 + $0x102] sm:$0xff]
        %v3759 = vld [vmem:[#allocation2 + $0x10a] sm:$0xff]
        %v3760 = vld [vmem:[#allocation2 + $0x112] sm:$0xff]
        %v3761 = vld [vmem:[#allocation2 + $0x11a] sm:$0xff]
        %s3762 = scalar_lea.vmem %s3, 32
        %v3763 = vld [vmem:[%s3762] sm:$0xf]
        %v3765 = vsel %vm429, %v3730, 0
        %v3768 = vsel %vm429, %v3731, 0
        %v3771 = vsel %vm429, %v3732, 0
        %v3774 = vsel %vm429, %v3733, 0
        %v3777 = vsel %vm429, %v3734, 0
        %v3780 = vsel %vm429, %v3735, 0
        %v3783 = vsel %vm429, %v3736, 0
        %v3786 = vsel %vm429, %v3737, 0
        %v3789 = vsel %vm429, %v3738, 0
        %v3792 = vsel %vm429, %v3739, 0
        %v3795 = vsel %vm429, %v3740, 0
        %v3798 = vsel %vm429, %v3741, 0
        %v3801 = vsel %vm429, %v3742, 0
        %v3804 = vsel %vm429, %v3743, 0
        %v3807 = vsel %vm429, %v3744, 0
        %v3810 = vsel %vm429, %v3745, 0
        %v3813 = vsel %vm429, %v3746, 0
        %v3816 = vsel %vm429, %v3747, 0
        %v3819 = vsel %vm429, %v3748, 0
        %v3822 = vsel %vm429, %v3749, 0
        %v3825 = vsel %vm429, %v3750, 0
        %v3828 = vsel %vm429, %v3751, 0
        %v3831 = vsel %vm429, %v3752, 0
        %v3834 = vsel %vm429, %v3753, 0
        %v3837 = vsel %vm429, %v3754, 0
        %v3840 = vsel %vm429, %v3755, 0
        %v3843 = vsel %vm429, %v3756, 0
        %v3846 = vsel %vm429, %v3757, 0
        %v3849 = vsel %vm429, %v3758, 0
        %v3852 = vsel %vm429, %v3759, 0
        %v3855 = vsel %vm429, %v3760, 0
        %v3858 = vsel %vm429, %v3761, 0
        %v3861 = vsel %vm1039, %v3763, 0
        %3863 = vmatprep.subr.mxu0 0.0
        %3864 = vmatpush1.msra.mxu0 0.0
        %3865 = vmatprep.subr.mxu0 0.0
        %3866 = vmatpush1.msra.mxu0 0.0
        %3867 = vmatprep.subr.mxu0 0.0
        %3868 = vmatpush1.msra.mxu0 0.0
        %3869 = vmatprep.subr.mxu0 0.0
        %3870 = vmatpush1.msra.mxu0 0.0
        %3871 = vmatprep.subr.mxu0 0.0
        %3872 = vmatpush1.msra.mxu0 0.0
        %3873 = vmatprep.subr.mxu0 0.0
        %3874 = vmatpush1.msra.mxu0 0.0
        %3875 = vmatprep.subr.mxu0 0.0
        %3876 = vmatpush1.msra.mxu0 0.0
        %3877 = vmatprep.subr.mxu0 0.0
        %3878 = vmatpush1.msra.mxu0 0.0
        %3879 = vmatprep.subr.mxu0 0.0
        %3880 = vmatpush1.msra.mxu0 0.0
        %3881 = vmatprep.subr.mxu0 0.0
        %3882 = vmatpush1.msra.mxu0 0.0
        %3883 = vmatprep.subr.mxu0 0.0
        %3884 = vmatpush1.msra.mxu0 0.0
        %3885 = vmatprep.subr.mxu0 0.0
        %3886 = vmatpush1.msra.mxu0 0.0
        %3887 = vmatprep.subr.mxu0 0.0
        %3888 = vmatpush1.msra.mxu0 0.0
        %3889 = vmatprep.subr.mxu0 0.0
        %3890 = vmatpush1.msra.mxu0 0.0
        %3891 = vmatprep.subr.mxu0 0.0
        %3892 = vmatpush1.msra.mxu0 0.0
        %3893 = vmatprep.subr.mxu0 0.0
        %3894 = vmatpush1.msra.mxu0 %v3861
        %3895 = vmatprep.subr.mxu0 0.0
        %3896 = vmatpush2.msra.mxu0 0.0
        %3897 = vmatprep.subr.mxu0 0.0
        %3898 = vmatpush2.msra.mxu0 0.0
        %3899 = vmatprep.subr.mxu0 0.0
        %3900 = vmatpush2.msra.mxu0 0.0
        %3901 = vmatprep.subr.mxu0 0.0
        %3902 = vmatpush2.msra.mxu0 0.0
        %3903 = vmatprep.subr.mxu0 0.0
        %3904 = vmatpush2.msra.mxu0 0.0
        %3905 = vmatprep.subr.mxu0 0.0
        %3906 = vmatpush2.msra.mxu0 0.0
        %3907 = vmatprep.subr.mxu0 0.0
        %3908 = vmatpush2.msra.mxu0 0.0
        %3909 = vmatprep.subr.mxu0 0.0
        %3910 = vmatpush2.msra.mxu0 0.0
        %3911 = vmatprep.subr.mxu0 0.0
        %3912 = vmatpush2.msra.mxu0 0.0
        %3913 = vmatprep.subr.mxu0 0.0
        %3914 = vmatpush2.msra.mxu0 0.0
        %3915 = vmatprep.subr.mxu0 0.0
        %3916 = vmatpush2.msra.mxu0 0.0
        %3917 = vmatprep.subr.mxu0 0.0
        %3918 = vmatpush2.msra.mxu0 0.0
        %3919 = vmatprep.subr.mxu0 0.0
        %3920 = vmatpush2.msra.mxu0 0.0
        %3921 = vmatprep.subr.mxu0 0.0
        %3922 = vmatpush2.msra.mxu0 0.0
        %3923 = vmatprep.subr.mxu0 0.0
        %3924 = vmatpush2.msra.mxu0 0.0
        %3925 = vmatprep.subr.mxu0 0.0
        %3926 = vmatpush2.msra.mxu0 0.0
        %3927 = vmatprep.mubr.f32.mxu0 0.0
        %3928 = vmatmul.mubr.f32.gmra.mxu0 %v3765
        %v3929 = vpop.f32.mrf.mxu0
        %v3930 = vadd.f32 0.0, %v3929
        %v3931 = vpop.f32.mrf.mxu0
        %3932 = vmatprep.mubr.f32.mxu0 0.0
        %3933 = vmatmul.mubr.f32.gmra.mxu0 %v3768
        %v3934 = vpop.f32.mrf.mxu0
        %v3935 = vadd.f32 0.0, %v3934
        %v3936 = vpop.f32.mrf.mxu0
        %3937 = vmatprep.mubr.f32.mxu0 0.0
        %3938 = vmatmul.mubr.f32.gmra.mxu0 %v3771
        %v3939 = vpop.f32.mrf.mxu0
        %v3940 = vadd.f32 0.0, %v3939
        %v3941 = vpop.f32.mrf.mxu0
        %3942 = vmatprep.mubr.f32.mxu0 0.0
        %3943 = vmatmul.mubr.f32.gmra.mxu0 %v3774
        %v3944 = vpop.f32.mrf.mxu0
        %v3945 = vadd.f32 0.0, %v3944
        %v3946 = vpop.f32.mrf.mxu0
        %3947 = vmatprep.mubr.f32.mxu0 0.0
        %3948 = vmatmul.mubr.f32.gmra.mxu0 %v3777
        %v3949 = vpop.f32.mrf.mxu0
        %v3950 = vadd.f32 0.0, %v3949
        %v3951 = vpop.f32.mrf.mxu0
        %3952 = vmatprep.mubr.f32.mxu0 0.0
        %3953 = vmatmul.mubr.f32.gmra.mxu0 %v3780
        %v3954 = vpop.f32.mrf.mxu0
        %v3955 = vadd.f32 0.0, %v3954
        %v3956 = vpop.f32.mrf.mxu0
        %3957 = vmatprep.mubr.f32.mxu0 0.0
        %3958 = vmatmul.mubr.f32.gmra.mxu0 %v3783
        %v3959 = vpop.f32.mrf.mxu0
        %v3960 = vadd.f32 0.0, %v3959
        %v3961 = vpop.f32.mrf.mxu0
        %3962 = vmatprep.mubr.f32.mxu0 0.0
        %3963 = vmatmul.mubr.f32.gmra.mxu0 %v3786
        %v3964 = vpop.f32.mrf.mxu0
        %v3965 = vadd.f32 0.0, %v3964
        %v3966 = vpop.f32.mrf.mxu0
        %3967 = vmatprep.mubr.f32.mxu0 0.0
        %3968 = vmatmul.mubr.f32.gmra.mxu0 %v3789
        %v3969 = vpop.f32.mrf.mxu0
        %v3970 = vadd.f32 0.0, %v3969
        %v3971 = vpop.f32.mrf.mxu0
        %3972 = vmatprep.mubr.f32.mxu0 0.0
        %3973 = vmatmul.mubr.f32.gmra.mxu0 %v3792
        %v3974 = vpop.f32.mrf.mxu0
        %v3975 = vadd.f32 0.0, %v3974
        %v3976 = vpop.f32.mrf.mxu0
        %3977 = vmatprep.mubr.f32.mxu0 0.0
        %3978 = vmatmul.mubr.f32.gmra.mxu0 %v3795
        %v3979 = vpop.f32.mrf.mxu0
        %v3980 = vadd.f32 0.0, %v3979
        %v3981 = vpop.f32.mrf.mxu0
        %3982 = vmatprep.mubr.f32.mxu0 0.0
        %3983 = vmatmul.mubr.f32.gmra.mxu0 %v3798
        %v3984 = vpop.f32.mrf.mxu0
        %v3985 = vadd.f32 0.0, %v3984
        %v3986 = vpop.f32.mrf.mxu0
        %3987 = vmatprep.mubr.f32.mxu0 0.0
        %3988 = vmatmul.mubr.f32.gmra.mxu0 %v3801
        %v3989 = vpop.f32.mrf.mxu0
        %v3990 = vadd.f32 0.0, %v3989
        %v3991 = vpop.f32.mrf.mxu0
        %3992 = vmatprep.mubr.f32.mxu0 0.0
        %3993 = vmatmul.mubr.f32.gmra.mxu0 %v3804
        %v3994 = vpop.f32.mrf.mxu0
        %v3995 = vadd.f32 0.0, %v3994
        %v3996 = vpop.f32.mrf.mxu0
        %3997 = vmatprep.mubr.f32.mxu0 0.0
        %3998 = vmatmul.mubr.f32.gmra.mxu0 %v3807
        %v3999 = vpop.f32.mrf.mxu0
        %v4000 = vadd.f32 0.0, %v3999
        %v4001 = vpop.f32.mrf.mxu0
        %4002 = vmatprep.mubr.f32.mxu0 0.0
        %4003 = vmatmul.mubr.f32.gmra.mxu0 %v3810
        %v4004 = vpop.f32.mrf.mxu0
        %v4005 = vadd.f32 0.0, %v4004
        %v4006 = vpop.f32.mrf.mxu0
        %4007 = vmatprep.mubr.f32.mxu0 0.0
        %4008 = vmatmul.mubr.f32.gmra.mxu0 %v3813
        %v4009 = vpop.f32.mrf.mxu0
        %v4010 = vadd.f32 0.0, %v4009
        %v4011 = vpop.f32.mrf.mxu0
        %4012 = vmatprep.mubr.f32.mxu0 0.0
        %4013 = vmatmul.mubr.f32.gmra.mxu0 %v3816
        %v4014 = vpop.f32.mrf.mxu0
        %v4015 = vadd.f32 0.0, %v4014
        %v4016 = vpop.f32.mrf.mxu0
        %4017 = vmatprep.mubr.f32.mxu0 0.0
        %4018 = vmatmul.mubr.f32.gmra.mxu0 %v3819
        %v4019 = vpop.f32.mrf.mxu0
        %v4020 = vadd.f32 0.0, %v4019
        %v4021 = vpop.f32.mrf.mxu0
        %4022 = vmatprep.mubr.f32.mxu0 0.0
        %4023 = vmatmul.mubr.f32.gmra.mxu0 %v3822
        %v4024 = vpop.f32.mrf.mxu0
        %v4025 = vadd.f32 0.0, %v4024
        %v4026 = vpop.f32.mrf.mxu0
        %4027 = vmatprep.mubr.f32.mxu0 0.0
        %4028 = vmatmul.mubr.f32.gmra.mxu0 %v3825
        %v4029 = vpop.f32.mrf.mxu0
        %v4030 = vadd.f32 0.0, %v4029
        %v4031 = vpop.f32.mrf.mxu0
        %4032 = vmatprep.mubr.f32.mxu0 0.0
        %4033 = vmatmul.mubr.f32.gmra.mxu0 %v3828
        %v4034 = vpop.f32.mrf.mxu0
        %v4035 = vadd.f32 0.0, %v4034
        %v4036 = vpop.f32.mrf.mxu0
        %4037 = vmatprep.mubr.f32.mxu0 0.0
        %4038 = vmatmul.mubr.f32.gmra.mxu0 %v3831
        %v4039 = vpop.f32.mrf.mxu0
        %v4040 = vadd.f32 0.0, %v4039
        %v4041 = vpop.f32.mrf.mxu0
        %4042 = vmatprep.mubr.f32.mxu0 0.0
        %4043 = vmatmul.mubr.f32.gmra.mxu0 %v3834
        %v4044 = vpop.f32.mrf.mxu0
        %v4045 = vadd.f32 0.0, %v4044
        %v4046 = vpop.f32.mrf.mxu0
        %4047 = vmatprep.mubr.f32.mxu0 0.0
        %4048 = vmatmul.mubr.f32.gmra.mxu0 %v3837
        %v4049 = vpop.f32.mrf.mxu0
        %v4050 = vadd.f32 0.0, %v4049
        %v4051 = vpop.f32.mrf.mxu0
        %4052 = vmatprep.mubr.f32.mxu0 0.0
        %4053 = vmatmul.mubr.f32.gmra.mxu0 %v3840
        %v4054 = vpop.f32.mrf.mxu0
        %v4055 = vadd.f32 0.0, %v4054
        %v4056 = vpop.f32.mrf.mxu0
        %4057 = vmatprep.mubr.f32.mxu0 0.0
        %4058 = vmatmul.mubr.f32.gmra.mxu0 %v3843
        %v4059 = vpop.f32.mrf.mxu0
        %v4060 = vadd.f32 0.0, %v4059
        %v4061 = vpop.f32.mrf.mxu0
        %4062 = vmatprep.mubr.f32.mxu0 0.0
        %4063 = vmatmul.mubr.f32.gmra.mxu0 %v3846
        %v4064 = vpop.f32.mrf.mxu0
        %v4065 = vadd.f32 0.0, %v4064
        %v4066 = vpop.f32.mrf.mxu0
        %4067 = vmatprep.mubr.f32.mxu0 0.0
        %4068 = vmatmul.mubr.f32.gmra.mxu0 %v3849
        %v4069 = vpop.f32.mrf.mxu0
        %v4070 = vadd.f32 0.0, %v4069
        %v4071 = vpop.f32.mrf.mxu0
        %4072 = vmatprep.mubr.f32.mxu0 0.0
        %4073 = vmatmul.mubr.f32.gmra.mxu0 %v3852
        %v4074 = vpop.f32.mrf.mxu0
        %v4075 = vadd.f32 0.0, %v4074
        %v4076 = vpop.f32.mrf.mxu0
        %4077 = vmatprep.mubr.f32.mxu0 0.0
        %4078 = vmatmul.mubr.f32.gmra.mxu0 %v3855
        %v4079 = vpop.f32.mrf.mxu0
        %v4080 = vadd.f32 0.0, %v4079
        %v4081 = vpop.f32.mrf.mxu0
        %4082 = vmatprep.mubr.f32.mxu0 0.0
        %4083 = vmatmul.mubr.f32.gmra.mxu0 %v3858
        %v4084 = vpop.f32.mrf.mxu0
        %v4085 = vadd.f32 0.0, %v4084
        %v4086 = vpop.f32.mrf.mxu0
        %4087 = vdwg.mxu0
        %v4088 = vadd.f32 %v3572, %v3930
        %v4089 = vadd.f32 %v3577, %v3935
        %v4090 = vadd.f32 %v3582, %v3940
        %v4091 = vadd.f32 %v3587, %v3945
        %v4092 = vadd.f32 %v3592, %v3950
        %v4093 = vadd.f32 %v3597, %v3955
        %v4094 = vadd.f32 %v3602, %v3960
        %v4095 = vadd.f32 %v3607, %v3965
        %v4096 = vadd.f32 %v3612, %v3970
        %v4097 = vadd.f32 %v3617, %v3975
        %v4098 = vadd.f32 %v3622, %v3980
        %v4099 = vadd.f32 %v3627, %v3985
        %v4100 = vadd.f32 %v3632, %v3990
        %v4101 = vadd.f32 %v3637, %v3995
        %v4102 = vadd.f32 %v3642, %v4000
        %v4103 = vadd.f32 %v3647, %v4005
        %v4104 = vadd.f32 %v3652, %v4010
        %v4105 = vadd.f32 %v3657, %v4015
        %v4106 = vadd.f32 %v3662, %v4020
        %v4107 = vadd.f32 %v3667, %v4025
        %v4108 = vadd.f32 %v3672, %v4030
        %v4109 = vadd.f32 %v3677, %v4035
        %v4110 = vadd.f32 %v3682, %v4040
        %v4111 = vadd.f32 %v3687, %v4045
        %v4112 = vadd.f32 %v3692, %v4050
        %v4113 = vadd.f32 %v3697, %v4055
        %v4114 = vadd.f32 %v3702, %v4060
        %v4115 = vadd.f32 %v3707, %v4065
        %v4116 = vadd.f32 %v3712, %v4070
        %v4117 = vadd.f32 %v3717, %v4075
        %v4118 = vadd.f32 %v3722, %v4080
        %v4119 = vadd.f32 %v3727, %v4085
        %vm4120 = vcmp.ge.s32.totalorder %v874, 4294967295
        %vm4121 = vcmp.ge.s32.totalorder %v875, 4294967295
        %vm4122 = vcmp.ge.s32.totalorder %v876, 4294967295
        %vm4123 = vcmp.ge.s32.totalorder %v877, 4294967295
        %vm4124 = vcmp.ge.s32.totalorder %v878, 4294967295
        %vm4125 = vcmp.ge.s32.totalorder %v879, 4294967295
        %vm4126 = vcmp.ge.s32.totalorder %v880, 4294967295
        %vm4127 = vcmp.ge.s32.totalorder %v881, 4294967295
        %vm4128 = vcmp.ge.s32.totalorder %v882, 4294967295
        %vm4129 = vcmp.ge.s32.totalorder %v883, 4294967295
        %vm4130 = vcmp.ge.s32.totalorder %v884, 4294967295
        %vm4131 = vcmp.ge.s32.totalorder %v885, 4294967295
        %vm4132 = vcmp.ge.s32.totalorder %v886, 4294967295
        %vm4133 = vcmp.ge.s32.totalorder %v887, 4294967295
        %vm4134 = vcmp.ge.s32.totalorder %v888, 4294967295
        %vm4135 = vcmp.ge.s32.totalorder %v889, 4294967295
        %vm4136 = vcmp.ge.s32.totalorder %v890, 4294967295
        %vm4137 = vcmp.ge.s32.totalorder %v891, 4294967295
        %vm4138 = vcmp.ge.s32.totalorder %v892, 4294967295
        %vm4139 = vcmp.ge.s32.totalorder %v893, 4294967295
        %vm4140 = vcmp.ge.s32.totalorder %v894, 4294967295
        %vm4141 = vcmp.ge.s32.totalorder %v895, 4294967295
        %vm4142 = vcmp.ge.s32.totalorder %v896, 4294967295
        %vm4143 = vcmp.ge.s32.totalorder %v897, 4294967295
        %vm4144 = vcmp.ge.s32.totalorder %v898, 4294967295
        %vm4145 = vcmp.ge.s32.totalorder %v899, 4294967295
        %vm4146 = vcmp.ge.s32.totalorder %v900, 4294967295
        %vm4147 = vcmp.ge.s32.totalorder %v901, 4294967295
        %vm4148 = vcmp.ge.s32.totalorder %v902, 4294967295
        %vm4149 = vcmp.ge.s32.totalorder %v903, 4294967295
        %vm4150 = vcmp.ge.s32.totalorder %v904, 4294967295
        %vm4151 = vcmp.ge.s32.totalorder %v905, 4294967295
        %vm4152 = vcmp.lt.s32.totalorder %v874, 15
        %vm4153 = vcmp.lt.s32.totalorder %v875, 15
        %vm4154 = vcmp.lt.s32.totalorder %v876, 15
        %vm4155 = vcmp.lt.s32.totalorder %v877, 15
        %vm4156 = vcmp.lt.s32.totalorder %v878, 15
        %vm4157 = vcmp.lt.s32.totalorder %v879, 15
        %vm4158 = vcmp.lt.s32.totalorder %v880, 15
        %vm4159 = vcmp.lt.s32.totalorder %v881, 15
        %vm4160 = vcmp.lt.s32.totalorder %v882, 15
        %vm4161 = vcmp.lt.s32.totalorder %v883, 15
        %vm4162 = vcmp.lt.s32.totalorder %v884, 15
        %vm4163 = vcmp.lt.s32.totalorder %v885, 15
        %vm4164 = vcmp.lt.s32.totalorder %v886, 15
        %vm4165 = vcmp.lt.s32.totalorder %v887, 15
        %vm4166 = vcmp.lt.s32.totalorder %v888, 15
        %vm4167 = vcmp.lt.s32.totalorder %v889, 15
        %vm4168 = vcmp.lt.s32.totalorder %v890, 15
        %vm4169 = vcmp.lt.s32.totalorder %v891, 15
        %vm4170 = vcmp.lt.s32.totalorder %v892, 15
        %vm4171 = vcmp.lt.s32.totalorder %v893, 15
        %vm4172 = vcmp.lt.s32.totalorder %v894, 15
        %vm4173 = vcmp.lt.s32.totalorder %v895, 15
        %vm4174 = vcmp.lt.s32.totalorder %v896, 15
        %vm4175 = vcmp.lt.s32.totalorder %v897, 15
        %vm4176 = vcmp.lt.s32.totalorder %v898, 15
        %vm4177 = vcmp.lt.s32.totalorder %v899, 15
        %vm4178 = vcmp.lt.s32.totalorder %v900, 15
        %vm4179 = vcmp.lt.s32.totalorder %v901, 15
        %vm4180 = vcmp.lt.s32.totalorder %v902, 15
        %vm4181 = vcmp.lt.s32.totalorder %v903, 15
        %vm4182 = vcmp.lt.s32.totalorder %v904, 15
        %vm4183 = vcmp.lt.s32.totalorder %v905, 15
        %vm4184 = vmand %vm4120, %vm4152
        %vm4185 = vmand %vm4121, %vm4153
        %vm4186 = vmand %vm4122, %vm4154
        %vm4187 = vmand %vm4123, %vm4155
        %vm4188 = vmand %vm4124, %vm4156
        %vm4189 = vmand %vm4125, %vm4157
        %vm4190 = vmand %vm4126, %vm4158
        %vm4191 = vmand %vm4127, %vm4159
        %vm4192 = vmand %vm4128, %vm4160
        %vm4193 = vmand %vm4129, %vm4161
        %vm4194 = vmand %vm4130, %vm4162
        %vm4195 = vmand %vm4131, %vm4163
        %vm4196 = vmand %vm4132, %vm4164
        %vm4197 = vmand %vm4133, %vm4165
        %vm4198 = vmand %vm4134, %vm4166
        %vm4199 = vmand %vm4135, %vm4167
        %vm4200 = vmand %vm4136, %vm4168
        %vm4201 = vmand %vm4137, %vm4169
        %vm4202 = vmand %vm4138, %vm4170
        %vm4203 = vmand %vm4139, %vm4171
        %vm4204 = vmand %vm4140, %vm4172
        %vm4205 = vmand %vm4141, %vm4173
        %vm4206 = vmand %vm4142, %vm4174
        %vm4207 = vmand %vm4143, %vm4175
        %vm4208 = vmand %vm4144, %vm4176
        %vm4209 = vmand %vm4145, %vm4177
        %vm4210 = vmand %vm4146, %vm4178
        %vm4211 = vmand %vm4147, %vm4179
        %vm4212 = vmand %vm4148, %vm4180
        %vm4213 = vmand %vm4149, %vm4181
        %vm4214 = vmand %vm4150, %vm4182
        %vm4215 = vmand %vm4151, %vm4183
        %v4216 = vsel %vm4184, 1, 0
        %v4217 = vsel %vm4185, 1, 0
        %v4218 = vsel %vm4186, 1, 0
        %v4219 = vsel %vm4187, 1, 0
        %v4220 = vsel %vm4188, 1, 0
        %v4221 = vsel %vm4189, 1, 0
        %v4222 = vsel %vm4190, 1, 0
        %v4223 = vsel %vm4191, 1, 0
        %v4224 = vsel %vm4192, 1, 0
        %v4225 = vsel %vm4193, 1, 0
        %v4226 = vsel %vm4194, 1, 0
        %v4227 = vsel %vm4195, 1, 0
        %v4228 = vsel %vm4196, 1, 0
        %v4229 = vsel %vm4197, 1, 0
        %v4230 = vsel %vm4198, 1, 0
        %v4231 = vsel %vm4199, 1, 0
        %v4232 = vsel %vm4200, 1, 0
        %v4233 = vsel %vm4201, 1, 0
        %v4234 = vsel %vm4202, 1, 0
        %v4235 = vsel %vm4203, 1, 0
        %v4236 = vsel %vm4204, 1, 0
        %v4237 = vsel %vm4205, 1, 0
        %v4238 = vsel %vm4206, 1, 0
        %v4239 = vsel %vm4207, 1, 0
        %v4240 = vsel %vm4208, 1, 0
        %v4241 = vsel %vm4209, 1, 0
        %v4242 = vsel %vm4210, 1, 0
        %v4243 = vsel %vm4211, 1, 0
        %v4244 = vsel %vm4212, 1, 0
        %v4245 = vsel %vm4213, 1, 0
        %v4246 = vsel %vm4214, 1, 0
        %v4247 = vsel %vm4215, 1, 0
        %vm4248 = vcmp.eq.s32.totalorder %v4216, 1
        %vm4249 = vcmp.eq.s32.totalorder %v4217, 1
        %vm4250 = vcmp.eq.s32.totalorder %v4218, 1
        %vm4251 = vcmp.eq.s32.totalorder %v4219, 1
        %vm4252 = vcmp.eq.s32.totalorder %v4220, 1
        %vm4253 = vcmp.eq.s32.totalorder %v4221, 1
        %vm4254 = vcmp.eq.s32.totalorder %v4222, 1
        %vm4255 = vcmp.eq.s32.totalorder %v4223, 1
        %vm4256 = vcmp.eq.s32.totalorder %v4224, 1
        %vm4257 = vcmp.eq.s32.totalorder %v4225, 1
        %vm4258 = vcmp.eq.s32.totalorder %v4226, 1
        %vm4259 = vcmp.eq.s32.totalorder %v4227, 1
        %vm4260 = vcmp.eq.s32.totalorder %v4228, 1
        %vm4261 = vcmp.eq.s32.totalorder %v4229, 1
        %vm4262 = vcmp.eq.s32.totalorder %v4230, 1
        %vm4263 = vcmp.eq.s32.totalorder %v4231, 1
        %vm4264 = vcmp.eq.s32.totalorder %v4232, 1
        %vm4265 = vcmp.eq.s32.totalorder %v4233, 1
        %vm4266 = vcmp.eq.s32.totalorder %v4234, 1
        %vm4267 = vcmp.eq.s32.totalorder %v4235, 1
        %vm4268 = vcmp.eq.s32.totalorder %v4236, 1
        %vm4269 = vcmp.eq.s32.totalorder %v4237, 1
        %vm4270 = vcmp.eq.s32.totalorder %v4238, 1
        %vm4271 = vcmp.eq.s32.totalorder %v4239, 1
        %vm4272 = vcmp.eq.s32.totalorder %v4240, 1
        %vm4273 = vcmp.eq.s32.totalorder %v4241, 1
        %vm4274 = vcmp.eq.s32.totalorder %v4242, 1
        %vm4275 = vcmp.eq.s32.totalorder %v4243, 1
        %vm4276 = vcmp.eq.s32.totalorder %v4244, 1
        %vm4277 = vcmp.eq.s32.totalorder %v4245, 1
        %vm4278 = vcmp.eq.s32.totalorder %v4246, 1
        %vm4279 = vcmp.eq.s32.totalorder %v4247, 1
        %v4280 = vsel %vm4248, %v4088, 0.0
        %v4281 = vsel %vm4249, %v4089, 0.0
        %v4282 = vsel %vm4250, %v4090, 0.0
        %v4283 = vsel %vm4251, %v4091, 0.0
        %v4284 = vsel %vm4252, %v4092, 0.0
        %v4285 = vsel %vm4253, %v4093, 0.0
        %v4286 = vsel %vm4254, %v4094, 0.0
        %v4287 = vsel %vm4255, %v4095, 0.0
        %v4288 = vsel %vm4256, %v4096, 0.0
        %v4289 = vsel %vm4257, %v4097, 0.0
        %v4290 = vsel %vm4258, %v4098, 0.0
        %v4291 = vsel %vm4259, %v4099, 0.0
        %v4292 = vsel %vm4260, %v4100, 0.0
        %v4293 = vsel %vm4261, %v4101, 0.0
        %v4294 = vsel %vm4262, %v4102, 0.0
        %v4295 = vsel %vm4263, %v4103, 0.0
        %v4296 = vsel %vm4264, %v4104, 0.0
        %v4297 = vsel %vm4265, %v4105, 0.0
        %v4298 = vsel %vm4266, %v4106, 0.0
        %v4299 = vsel %vm4267, %v4107, 0.0
        %v4300 = vsel %vm4268, %v4108, 0.0
        %v4301 = vsel %vm4269, %v4109, 0.0
        %v4302 = vsel %vm4270, %v4110, 0.0
        %v4303 = vsel %vm4271, %v4111, 0.0
        %v4304 = vsel %vm4272, %v4112, 0.0
        %v4305 = vsel %vm4273, %v4113, 0.0
        %v4306 = vsel %vm4274, %v4114, 0.0
        %v4307 = vsel %vm4275, %v4115, 0.0
        %v4308 = vsel %vm4276, %v4116, 0.0
        %v4309 = vsel %vm4277, %v4117, 0.0
        %v4310 = vsel %vm4278, %v4118, 0.0
        %v4311 = vsel %vm4279, %v4119, 0.0
        %v4312 = vadd.f32 %v3102, %v4280
        %v4313 = vadd.f32 %v3103, %v4281
        %v4314 = vadd.f32 %v3104, %v4282
        %v4315 = vadd.f32 %v3105, %v4283
        %v4316 = vadd.f32 %v3106, %v4284
        %v4317 = vadd.f32 %v3107, %v4285
        %v4318 = vadd.f32 %v3108, %v4286
        %v4319 = vadd.f32 %v3109, %v4287
        %v4320 = vadd.f32 %v3110, %v4288
        %v4321 = vadd.f32 %v3111, %v4289
        %v4322 = vadd.f32 %v3112, %v4290
        %v4323 = vadd.f32 %v3113, %v4291
        %v4324 = vadd.f32 %v3114, %v4292
        %v4325 = vadd.f32 %v3115, %v4293
        %v4326 = vadd.f32 %v3116, %v4294
        %v4327 = vadd.f32 %v3117, %v4295
        %v4328 = vadd.f32 %v3118, %v4296
        %v4329 = vadd.f32 %v3119, %v4297
        %v4330 = vadd.f32 %v3120, %v4298
        %v4331 = vadd.f32 %v3121, %v4299
        %v4332 = vadd.f32 %v3122, %v4300
        %v4333 = vadd.f32 %v3123, %v4301
        %v4334 = vadd.f32 %v3124, %v4302
        %v4335 = vadd.f32 %v3125, %v4303
        %v4336 = vadd.f32 %v3126, %v4304
        %v4337 = vadd.f32 %v3127, %v4305
        %v4338 = vadd.f32 %v3128, %v4306
        %v4339 = vadd.f32 %v3129, %v4307
        %v4340 = vadd.f32 %v3130, %v4308
        %v4341 = vadd.f32 %v3131, %v4309
        %v4342 = vadd.f32 %v3132, %v4310
        %v4343 = vadd.f32 %v3133, %v4311
        %4344 = vst [vmem:[%s340] sm:$0xff] %v4312
        %4345 = vst [vmem:[%s340 + $0x8] sm:$0xff] %v4313
        %4346 = vst [vmem:[%s340 + $0x10] sm:$0xff] %v4314
        %4347 = vst [vmem:[%s340 + $0x18] sm:$0xff] %v4315
        %4348 = vst [vmem:[%s340 + $0x20] sm:$0xff] %v4316
        %4349 = vst [vmem:[%s340 + $0x28] sm:$0xff] %v4317
        %4350 = vst [vmem:[%s340 + $0x30] sm:$0xff] %v4318
        %4351 = vst [vmem:[%s340 + $0x38] sm:$0xff] %v4319
        %4352 = vst [vmem:[%s340 + $0x40] sm:$0xff] %v4320
        %4353 = vst [vmem:[%s340 + $0x48] sm:$0xff] %v4321
        %4354 = vst [vmem:[%s340 + $0x50] sm:$0xff] %v4322
        %4355 = vst [vmem:[%s340 + $0x58] sm:$0xff] %v4323
        %4356 = vst [vmem:[%s340 + $0x60] sm:$0xff] %v4324
        %4357 = vst [vmem:[%s340 + $0x68] sm:$0xff] %v4325
        %4358 = vst [vmem:[%s340 + $0x70] sm:$0xff] %v4326
        %4359 = vst [vmem:[%s340 + $0x78] sm:$0xff] %v4327
        %4360 = vst [vmem:[%s340 + $0x80] sm:$0xff] %v4328
        %4361 = vst [vmem:[%s340 + $0x88] sm:$0xff] %v4329
        %4362 = vst [vmem:[%s340 + $0x90] sm:$0xff] %v4330
        %4363 = vst [vmem:[%s340 + $0x98] sm:$0xff] %v4331
        %4364 = vst [vmem:[%s340 + $0xa0] sm:$0xff] %v4332
        %4365 = vst [vmem:[%s340 + $0xa8] sm:$0xff] %v4333
        %4366 = vst [vmem:[%s340 + $0xb0] sm:$0xff] %v4334
        %4367 = vst [vmem:[%s340 + $0xb8] sm:$0xff] %v4335
        %4368 = vst [vmem:[%s340 + $0xc0] sm:$0xff] %v4336
        %4369 = vst [vmem:[%s340 + $0xc8] sm:$0xff] %v4337
        %4370 = vst [vmem:[%s340 + $0xd0] sm:$0xff] %v4338
        %4371 = vst [vmem:[%s340 + $0xd8] sm:$0xff] %v4339
        %4372 = vst [vmem:[%s340 + $0xe0] sm:$0xff] %v4340
        %4373 = vst [vmem:[%s340 + $0xe8] sm:$0xff] %v4341
        %4374 = vst [vmem:[%s340 + $0xf0] sm:$0xff] %v4342
        %4375 = vst [vmem:[%s340 + $0xf8] sm:$0xff] %v4343
        %v4376 = vadd.f32 %v4312, %v4313
        %v4377 = vadd.f32 %v4376, %v4314
        %v4378 = vadd.f32 %v4377, %v4315
        %v4379 = vadd.f32 %v4378, %v4316
        %v4380 = vadd.f32 %v4379, %v4317
        %v4381 = vadd.f32 %v4380, %v4318
        %v4382 = vadd.f32 %v4381, %v4319
        %v4383 = vadd.f32 %v4382, %v4320
        %v4384 = vadd.f32 %v4383, %v4321
        %v4385 = vadd.f32 %v4384, %v4322
        %v4386 = vadd.f32 %v4385, %v4323
        %v4387 = vadd.f32 %v4386, %v4324
        %v4388 = vadd.f32 %v4387, %v4325
        %v4389 = vadd.f32 %v4388, %v4326
        %v4390 = vadd.f32 %v4389, %v4327
        %v4391 = vadd.f32 %v4390, %v4328
        %v4392 = vadd.f32 %v4391, %v4329
        %v4393 = vadd.f32 %v4392, %v4330
        %v4394 = vadd.f32 %v4393, %v4331
        %v4395 = vadd.f32 %v4394, %v4332
        %v4396 = vadd.f32 %v4395, %v4333
        %v4397 = vadd.f32 %v4396, %v4334
        %v4398 = vadd.f32 %v4397, %v4335
        %v4399 = vadd.f32 %v4398, %v4336
        %v4400 = vadd.f32 %v4399, %v4337
        %v4401 = vadd.f32 %v4400, %v4338
        %v4402 = vadd.f32 %v4401, %v4339
        %v4403 = vadd.f32 %v4402, %v4340
        %v4404 = vadd.f32 %v4403, %v4341
        %v4405 = vadd.f32 %v4404, %v4342
        %v4406 = vadd.f32 %v4405, %v4343
        %v4407 = vrot.slane %v4406, 4
        %v4408 = vadd.f32 %v4406, %v4407
        %v4409 = vrot.slane %v4408, 2
        %v4410 = vadd.f32 %v4408, %v4409
        %v4411 = vrot.slane %v4410, 1
        %v4412 = vadd.f32 %v4410, %v4411
        %4413 = vst [vmem:[%s347] sm:$0x1] %v4412
        %v4414 = vmul.f32 %v4312, %v4312
        %v4415 = vmul.f32 %v4313, %v4313
        %v4416 = vmul.f32 %v4314, %v4314
        %v4417 = vmul.f32 %v4315, %v4315
        %v4418 = vmul.f32 %v4316, %v4316
        %v4419 = vmul.f32 %v4317, %v4317
        %v4420 = vmul.f32 %v4318, %v4318
        %v4421 = vmul.f32 %v4319, %v4319
        %v4422 = vmul.f32 %v4320, %v4320
        %v4423 = vmul.f32 %v4321, %v4321
        %v4424 = vmul.f32 %v4322, %v4322
        %v4425 = vmul.f32 %v4323, %v4323
        %v4426 = vmul.f32 %v4324, %v4324
        %v4427 = vmul.f32 %v4325, %v4325
        %v4428 = vmul.f32 %v4326, %v4326
        %v4429 = vmul.f32 %v4327, %v4327
        %v4430 = vmul.f32 %v4328, %v4328
        %v4431 = vmul.f32 %v4329, %v4329
        %v4432 = vmul.f32 %v4330, %v4330
        %v4433 = vmul.f32 %v4331, %v4331
        %v4434 = vmul.f32 %v4332, %v4332
        %v4435 = vmul.f32 %v4333, %v4333
        %v4436 = vmul.f32 %v4334, %v4334
        %v4437 = vmul.f32 %v4335, %v4335
        %v4438 = vmul.f32 %v4336, %v4336
        %v4439 = vmul.f32 %v4337, %v4337
        %v4440 = vmul.f32 %v4338, %v4338
        %v4441 = vmul.f32 %v4339, %v4339
        %v4442 = vmul.f32 %v4340, %v4340
        %v4443 = vmul.f32 %v4341, %v4341
        %v4444 = vmul.f32 %v4342, %v4342
        %v4445 = vmul.f32 %v4343, %v4343
        %v4446 = vadd.f32 %v4414, %v4415
        %v4447 = vadd.f32 %v4446, %v4416
        %v4448 = vadd.f32 %v4447, %v4417
        %v4449 = vadd.f32 %v4448, %v4418
        %v4450 = vadd.f32 %v4449, %v4419
        %v4451 = vadd.f32 %v4450, %v4420
        %v4452 = vadd.f32 %v4451, %v4421
        %v4453 = vadd.f32 %v4452, %v4422
        %v4454 = vadd.f32 %v4453, %v4423
        %v4455 = vadd.f32 %v4454, %v4424
        %v4456 = vadd.f32 %v4455, %v4425
        %v4457 = vadd.f32 %v4456, %v4426
        %v4458 = vadd.f32 %v4457, %v4427
        %v4459 = vadd.f32 %v4458, %v4428
        %v4460 = vadd.f32 %v4459, %v4429
        %v4461 = vadd.f32 %v4460, %v4430
        %v4462 = vadd.f32 %v4461, %v4431
        %v4463 = vadd.f32 %v4462, %v4432
        %v4464 = vadd.f32 %v4463, %v4433
        %v4465 = vadd.f32 %v4464, %v4434
        %v4466 = vadd.f32 %v4465, %v4435
        %v4467 = vadd.f32 %v4466, %v4436
        %v4468 = vadd.f32 %v4467, %v4437
        %v4469 = vadd.f32 %v4468, %v4438
        %v4470 = vadd.f32 %v4469, %v4439
        %v4471 = vadd.f32 %v4470, %v4440
        %v4472 = vadd.f32 %v4471, %v4441
        %v4473 = vadd.f32 %v4472, %v4442
        %v4474 = vadd.f32 %v4473, %v4443
        %v4475 = vadd.f32 %v4474, %v4444
        %v4476 = vadd.f32 %v4475, %v4445
        %v4477 = vrot.slane %v4476, 4
        %v4478 = vadd.f32 %v4476, %v4477
        %v4479 = vrot.slane %v4478, 2
        %v4480 = vadd.f32 %v4478, %v4479
        %v4481 = vrot.slane %v4480, 1
        %v4482 = vadd.f32 %v4480, %v4481
        %4483 = vst [vmem:[%s347 + $0x1] sm:$0x1] %v4482
        %s4484 = sand.u32 %s166, 1
        %s4485 = scalar_lea.sflag [#allocation4], %s4484
        %s4486 = sand.u32 %s166, 1
        %s4487 = smul.addr %s4486, 256
        %s4488 = scalar_lea.vmem [#allocation3], %s4487
        %s4489 = sand.u32 %s194, 1
        %s4490 = scalar_lea.sflag [#allocation6], %s4489
        %s4491 = sand.u32 %s194, 1
        %s4492 = smul.addr %s4491, 2
        %s4493 = scalar_lea.vmem [#allocation5], %s4492
        // Predicated region
        $region53: #{tpu_custom_call.1} parent=35 // pred_check
          %p4494 = pneg %p176
        $region54: #{tpu_custom_call.1} parent=35 // pred_check_branch
          %4496 = sbr.rel (%p4494) target = $region56
        $region55: #{tpu_custom_call.1} parent=35 // pred_region
          %s4497 = smul.u32 32, %s28
          %s4499 = ssub.s32 4096, 4096
          %4500 = vsyncadd %s4485, %s4499
          %s4501 = smul.addr %s27, 32
          %s4502 = sadd.s32 %s4497, %s4501
          %s4503 = smul.addr %s4502, 128
          %s4504 = scalar_lea.hbm %s4, %s4503
          %s4505 = sshll.u32 %s4488, 4
          %s4506 = int_to_ptr.vmem [resolvable:$true] %s4505
          %4511 = dma.vmem_to_hbm [thread:$0]  %s4506, 4096, %s4504, %s4485, 128, 128, 8
        $region56: #{tpu_custom_call.1} parent=35 // pred_fallthru
          _
        // Predicated region
        $region57: #{tpu_custom_call.1} parent=35 // pred_check
          %p4512 = pneg %p204
        $region58: #{tpu_custom_call.1} parent=35 // pred_check_branch
          %4514 = sbr.rel (%p4512) target = $region60
        $region59: #{tpu_custom_call.1} parent=35 // pred_region
          %s4516 = ssub.s32 32, 32
          %4517 = vsyncadd %s4490, %s4516
          %s4518 = sadd.s32 %s28, %s27
          %s4519 = smul.addr %s4518, 32
          %s4520 = scalar_lea.hbm %s5, %s4519
          %s4522 = sshll.u32 %s4493, 4
          %s4523 = int_to_ptr.vmem [resolvable:$true] %s4522
          %4525 = dma.vmem_to_hbm [thread:$0]  %s4523, 32, %s4520, %s4490
        $region60: #{tpu_custom_call.1} parent=35 // pred_fallthru
          _
      $region36: #{tpu_custom_call.1} parent=5 // pred_fallthru
        _
      %p4526 = scmp.le.s32.totalorder 2, %s18
      // Predicated region
      $region61: #{tpu_custom_call.1} parent=5 // pred_check
        %p4527 = pneg %p4526
      $region62: #{tpu_custom_call.1} parent=5 // pred_check_branch
        %4529 = sbr.rel (%p4527) target = $region64
      $region63: #{tpu_custom_call.1} parent=5 // pred_region
        %s4530 = ssub.s32 %s18, 2
        // Predicated region
        $region65: #{tpu_custom_call.1} parent=63 // pred_check
          %p4531 = pneg %p182
        $region66: #{tpu_custom_call.1} parent=63 // pred_check_branch
          %4533 = sbr.rel (%p4531) target = $region68
        $region67: #{tpu_custom_call.1} parent=63 // pred_region
          %s4534 = sand.u32 %s167, 1
          %s4535 = scalar_lea.sflag [#allocation4], %s4534
          %s4536 = sand.u32 %s167, 1
          %s4537 = smul.addr %s4536, 256
          %s4538 = scalar_lea.vmem [#allocation3], %s4537
          %4539 = dma.done %s4535, 4096
        $region68: #{tpu_custom_call.1} parent=63 // pred_fallthru
          _
        // Predicated region
        $region69: #{tpu_custom_call.1} parent=63 // pred_check
          %p4540 = pneg %p210
        $region70: #{tpu_custom_call.1} parent=63 // pred_check_branch
          %4542 = sbr.rel (%p4540) target = $region72
        $region71: #{tpu_custom_call.1} parent=63 // pred_region
          %s4543 = sand.u32 %s195, 1
          %s4544 = scalar_lea.sflag [#allocation6], %s4543
          %s4545 = sand.u32 %s195, 1
          %s4546 = smul.addr %s4545, 2
          %s4547 = scalar_lea.vmem [#allocation5], %s4546
          %4548 = dma.done %s4544, 32
        $region72: #{tpu_custom_call.1} parent=63 // pred_fallthru
          _
      $region64: #{tpu_custom_call.1} parent=5 // pred_fallthru
        _
    $region6: #{tpu_custom_call.1} parent=1 // loop_footer
      %s22 = sadd.s32 1, %s18
    $region7: #{tpu_custom_call.1} parent=1 // loop_footer_branch
      %17 = sbr.rel target = $region3
    $region8: #{tpu_custom_call.1} parent=1 // loop_exit
      _
    %4549 = vsyncpa [#allocation4], 1
    %s4550 = scalar_lea.sflag [#allocation4], 1
    %4551 = vsyncpa %s4550, 1
    %4552 = vsyncpa [#allocation6], 1
    %s4553 = scalar_lea.sflag [#allocation6], 1
    %4554 = vsyncpa %s4553, 1

</llo_original>
